<compile_context>
chip_gen: v6e
topology: v6e:2x2x1
jax: 0.10.0
libtpu: 0.0.40
codegen_flags: <defaults>
</compile_context>

<pallas_src>
import functools
import numpy as np

import jax
import jax.numpy as jnp
from jax import lax
from jax.experimental import pallas as pl
from jax.experimental.pallas import tpu as pltpu

F32_MIN = float(jnp.finfo(jnp.float32).min)
INV_SQRT2 = float(1.0 / np.sqrt(2.0))
LN_EPS = 1e-5
# Scoped-VMEM cap: kept <= v7x's 64 MiB physical budget; raise to ~100 MiB on v5e/v6e for CLIP-L.
VMEM_LIMIT_BYTES = 48 * 1024 * 1024


def _cparams(*sems):
    return pltpu.CompilerParams(dimension_semantics=sems,
                                vmem_limit_bytes=VMEM_LIMIT_BYTES)


# ----------------------------------------------------------------------------
# In-kernel helpers
# ----------------------------------------------------------------------------

def _ln(x, g, b, eps):
    """Row-wise LayerNorm in f32; g/b are (1, D)."""
    mean = jnp.mean(x, axis=-1, keepdims=True)
    var = jnp.mean(jnp.square(x - mean), axis=-1, keepdims=True)
    return (x - mean) * lax.rsqrt(var + eps) * g + b


# ----------------------------------------------------------------------------
# Pallas kernels
# ----------------------------------------------------------------------------

def _vit_embed_kernel(p_ref, w_ref, cls_ref, pos_ref, g_ref, b_ref, o_ref, *, eps):
    """Patch-embed conv (as matmul) + CLS + pos-emb + CLIP pre-LayerNorm; one image per block.
    Builds the full (T, D) tile and does a single sublane-aligned store."""
    pe = jnp.dot(p_ref[0], w_ref[...], preferred_element_type=jnp.float32)    # (Np, D) f32
    full = jnp.concatenate([cls_ref[...], pe], axis=0) + pos_ref[...]         # (T, D) f32
    o_ref[0] = _ln(full, g_ref[...], b_ref[...], eps)


def _clip_layer_kernel(x_ref, ln1g_ref, ln1b_ref, wqkv_ref, bqkv_ref, wo_ref, bo_ref,
                       ln2g_ref, ln2b_ref, w1_ref, b1_ref, w2_ref, b2_ref,
                       o_ref, act_ref, attn_ref, *, num_heads, head_dim, eps):
    """One fused CLIP encoder layer (LN1 + QKV + attention + out-proj + residual, then
    LN2 + MLP + residual).  grid = (image, layer); the activation is VMEM-resident across
    the whole layer loop; the HBM output is written only once, at the last layer."""
    l = pl.program_id(1)

    @pl.when(l == 0)
    def _():
        act_ref[...] = x_ref[0]                                     # load residual stream once

    D = num_heads * head_dim

    # ---- attention block ------------------------------------------------------------------
    x = act_ref[...]                                                # (T, D) f32
    h = _ln(x, ln1g_ref[0], ln1b_ref[0], eps).astype(jnp.bfloat16)
    qkv = (jnp.dot(h, wqkv_ref[0], preferred_element_type=jnp.float32)
           + bqkv_ref[0])                                           # (T, 3D) f32, Q pre-scaled

    # TODO(synk): at CLIP-L, replace this static unroll with a flash-style query-tiled
    #             lax.fori_loop over heads (128-lane-aligned head pairs) to bound live ranges.
    for hd in range(num_heads):
        lo = hd * head_dim
        hi = lo + head_dim
        q = qkv[:, lo:hi].astype(jnp.bfloat16)                      # scale folded into wqkv/bqkv
        k = qkv[:, D + lo:D + hi].astype(jnp.bfloat16)
        v = qkv[:, 2 * D + lo:2 * D + hi].astype(jnp.bfloat16)
        # q @ k^T via dot_general contracting dims — no materialized transpose of k
        s = lax.dot_general(q, k, (((1,), (1,)), ((), ())),
                            preferred_element_type=jnp.float32)     # (T, T) f32
        m = jnp.max(s, axis=-1, keepdims=True)
        e = jnp.exp(s - m)
        p = e * pl.reciprocal(jnp.sum(e, axis=-1, keepdims=True), approx=True)
        attn_ref[:, lo:hi] = jnp.dot(p.astype(jnp.bfloat16), v,
                                     preferred_element_type=jnp.float32).astype(jnp.bfloat16)

    # single K=D out-projection (fills the 256-wide MXU); bias + residual in the epilogue
    act_ref[...] = (x + bo_ref[0]
                    + jnp.dot(attn_ref[...], wo_ref[0], preferred_element_type=jnp.float32))

    # ---- MLP block ------------------------------------------------------------------------
    x2 = act_ref[...]
    h2 = _ln(x2, ln2g_ref[0], ln2b_ref[0], eps).astype(jnp.bfloat16)
    h1 = jnp.dot(h2, w1_ref[0], preferred_element_type=jnp.float32) + b1_ref[0]
    h1 = h1 * jax.nn.sigmoid(1.702 * h1)                            # quick_gelu
    act_ref[...] = (x2
                    + jnp.dot(h1.astype(jnp.bfloat16), w2_ref[0],
                              preferred_element_type=jnp.float32)
                    + b2_ref[0])

    @pl.when(l == pl.num_programs(1) - 1)
    def _():
        o_ref[0] = act_ref[...]                                     # single HBM writeback


def _projector_kernel(x_ref, w1_ref, b1_ref, w2_ref, b2_ref, o_ref):
    """LLaVA multi-modal projector: fc1 -> exact (erf) GELU -> fc2, one image/block."""
    x = x_ref[0]                                                    # (P, Dv) bf16 (cast in wrapper)
    h = jnp.dot(x, w1_ref[...], preferred_element_type=jnp.float32) + b1_ref[...]
    h = 0.5 * h * (1.0 + lax.erf(h * INV_SQRT2))
    o_ref[0] = (jnp.dot(h.astype(jnp.bfloat16), w2_ref[...],
                        preferred_element_type=jnp.float32)
                + b2_ref[...])


# ----------------------------------------------------------------------------
# Kernel wrappers (pallas_call)
# ----------------------------------------------------------------------------

def vit_embed(patches_bf16, vp, cfg):
    N, Np, Cpp = patches_bf16.shape
    D = cfg["vision_hidden"]
    T = Np + 1
    wbuf = pl.Buffered(1)          # constant-index inputs: no pointless double-buffering
    return pl.pallas_call(
        functools.partial(_vit_embed_kernel, eps=LN_EPS),
        out_shape=jax.ShapeDtypeStruct((N, T, D), jnp.float32),
        grid=(N,),
        in_specs=[
            pl.BlockSpec((1, Np, Cpp), lambda n: (n, 0, 0)),
            pl.BlockSpec((Cpp, D), lambda n: (0, 0), pipeline_mode=wbuf),
            pl.BlockSpec((1, D), lambda n: (0, 0), pipeline_mode=wbuf),
            pl.BlockSpec((T, D), lambda n: (0, 0), pipeline_mode=wbuf),
            pl.BlockSpec((1, D), lambda n: (0, 0), pipeline_mode=wbuf),
            pl.BlockSpec((1, D), lambda n: (0, 0), pipeline_mode=wbuf),
        ],
        out_specs=pl.BlockSpec((1, T, D), lambda n: (n, 0, 0)),
        compiler_params=_cparams("parallel"),
    )(patches_bf16, vp["patch_w"], vp["class_emb"], vp["pos_emb"],
      vp["pre_ln_g"], vp["pre_ln_b"])


def clip_tower(x, tw, cfg, n_run):
    """Whole vision tower in one pallas_call; grid=(image, layer); weights streamed per layer."""
    N, T, D = x.shape
    nh = cfg["vision_heads"]
    I = tw["fc1_w"].shape[-1]
    lyr_spec = lambda shape: pl.BlockSpec(shape, lambda n, l: (l, 0, 0))   # per-layer stream
    return pl.pallas_call(
        functools.partial(_clip_layer_kernel, num_heads=nh, head_dim=D // nh, eps=LN_EPS),
        out_shape=jax.ShapeDtypeStruct((N, T, D), jnp.float32),
        grid=(N, n_run),
        in_specs=[
            pl.BlockSpec((1, T, D), lambda n, l: (n, 0, 0)),   # embeddings, fetched once/image
            lyr_spec((1, 1, D)),            # ln1_g
            lyr_spec((1, 1, D)),            # ln1_b
            lyr_spec((1, D, 3 * D)),        # wqkv (bf16, Q pre-scaled)
            lyr_spec((1, 1, 3 * D)),        # bqkv
            lyr_spec((1, D, D)),            # wo
            lyr_spec((1, 1, D)),            # bo
            lyr_spec((1, 1, D)),            # ln2_g
            lyr_spec((1, 1, D)),            # ln2_b
            lyr_spec((1, D, I)),            # fc1_w
            lyr_spec((1, 1, I)),            # fc1_b
            lyr_spec((1, I, D)),            # fc2_w
            lyr_spec((1, 1, D)),            # fc2_b
        ],
        out_specs=pl.BlockSpec((1, T, D), lambda n, l: (n, 0, 0)),
        scratch_shapes=[pltpu.VMEM((T, D), jnp.float32),       # residual stream (VMEM-resident)
                        pltpu.VMEM((T, D), jnp.bfloat16)],     # per-head attention outputs
        compiler_params=_cparams("parallel", "arbitrary"),
    )(x, tw["ln1_g"], tw["ln1_b"], tw["wqkv"], tw["bqkv"], tw["wo"], tw["bo"],
      tw["ln2_g"], tw["ln2_b"], tw["fc1_w"], tw["fc1_b"], tw["fc2_w"], tw["fc2_b"])


def multi_modal_projector(feat_bf16, pp):
    Ni, P, Dv = feat_bf16.shape
    Dm = pp["proj_w1"].shape[1]
    Dt = pp["proj_w2"].shape[1]
    wbuf = pl.Buffered(1)          # constant-index weights: single-buffered
    return pl.pallas_call(
        _projector_kernel,
        out_shape=jax.ShapeDtypeStruct((Ni, P, Dt), jnp.float32),
        grid=(Ni,),
        in_specs=[
            pl.BlockSpec((1, P, Dv), lambda n: (n, 0, 0)),
            pl.BlockSpec((Dv, Dm), lambda n: (0, 0), pipeline_mode=wbuf),
            pl.BlockSpec((1, Dm), lambda n: (0, 0), pipeline_mode=wbuf),
            pl.BlockSpec((Dm, Dt), lambda n: (0, 0), pipeline_mode=wbuf),
            pl.BlockSpec((1, Dt), lambda n: (0, 0), pipeline_mode=wbuf),
        ],
        out_specs=pl.BlockSpec((1, P, Dt), lambda n: (n, 0, 0)),
        compiler_params=_cparams("parallel"),
    )(feat_bf16, pp["proj_w1"], pp["proj_b1"], pp["proj_w2"], pp["proj_b2"])


# ----------------------------------------------------------------------------
# Model glue (pure JAX around the fused Pallas kernels)
# ----------------------------------------------------------------------------

def num_tower_layers(cfg):
    """Number of encoder layers actually needed to produce hidden_states[vision_feature_layer]."""
    L = cfg["vision_layers"]
    vfl = cfg["vision_feature_layer"]
    return vfl if vfl >= 0 else L + 1 + vfl


def clip_vision_tower(pixel_values, vp, cfg):
    """Returns hidden_states[vision_feature_layer] only (later layers are never computed)."""
    N, C, H, W = pixel_values.shape
    p = cfg["patch_size"]
    Hp, Wp = H // p, W // p
    # patch extraction matches Conv2d(stride=p) + flatten(2).transpose(1,2); bf16 halves DMA bytes
    patches = (pixel_values.reshape(N, C, Hp, p, Wp, p)
               .transpose(0, 2, 4, 1, 3, 5)
               .reshape(N, Hp * Wp, C * p * p)).astype(jnp.bfloat16)
    x = vit_embed(patches, vp, cfg)                      # embeddings + pre-LN, (N, T, D) f32
    n_run = num_tower_layers(cfg)
    if n_run > 0:
        x = clip_tower(x, vp["tower"], cfg, n_run)       # fused whole-tower kernel
    return x


def prepare_4d_causal_attention_mask(attention_mask_2d, seq_length):
    """to_4d path of HF _prepare_4d_causal_attention_mask_for_sdpa: 0.0 where attendable,
    finfo(f32).min where masked; shape (B,1,M,M). Pure JAX — it is a module output only."""
    B, M = attention_mask_2d.shape
    assert M == seq_length
    i = jnp.arange(M)[:, None]
    j = jnp.arange(M)[None, :]
    causal = (j <= i)[None, :, :]                                     # (1, M, M)
    attended = (attention_mask_2d.astype(jnp.int32) > 0)[:, None, :]  # (B, 1, M)
    allowed = causal & attended
    mask = jnp.where(allowed, 0.0, F32_MIN).astype(jnp.float32)
    # TODO(synk): HF's SDPA helper returns None when the mask is all-ones & causal;
    # we always materialize the general to_4d float mask.
    return mask[:, None, :, :]


def compute_merge_plan(input_ids_np, num_image_patches, num_images, cfg):
    """Host-side preprocessing of the data-dependent scalars of the merge step
    (removes all device->host syncs from the jitted forward)."""
    batch_size, sequence_length = input_ids_np.shape
    left_padding = not bool(np.sum(input_ids_np[:, -1] == cfg["pad_token_id"]))
    special = input_ids_np == cfg["image_token_index"]
    num_special = special.sum(axis=-1)
    max_embed_dim = int(num_special.max()) * (num_image_patches - 1) + sequence_length
    if int(special.sum()) != num_images:
        raise ValueError("The input provided to the model are wrong: image token mismatch.")
    return dict(left_padding=left_padding, max_embed_dim=int(max_embed_dim))


def merge_input_ids_with_image_features(image_features, inputs_embeds, input_ids,
                                        attention_mask, labels, cfg, plan):
    """Faithful JAX port of _merge_input_ids_with_image_features; jittable."""
    num_images, num_image_patches, embed_dim = image_features.shape
    batch_size, sequence_length = input_ids.shape
    max_embed_dim = plan["max_embed_dim"]

    special = (input_ids == cfg["image_token_index"])
    new_token_positions = jnp.cumsum(
        special.astype(jnp.int32) * (num_image_patches - 1) + 1, axis=-1) - 1
    nb_image_pad = max_embed_dim - 1 - new_token_positions[:, -1]
    if plan["left_padding"]:
        new_token_positions = new_token_positions + nb_image_pad[:, None]

    b_idx = jnp.broadcast_to(jnp.arange(batch_size)[:, None], (batch_size, sequence_length))
    # image-token positions are routed out-of-bounds and dropped (text-only scatter)
    tgt = jnp.where(special, max_embed_dim, new_token_positions)

    final_embedding = jnp.zeros((batch_size, max_embed_dim, embed_dim), inputs_embeds.dtype)
    final_embedding = final_embedding.at[b_idx, tgt].set(inputs_embeds, mode="drop")
    final_attention_mask = jnp.zeros((batch_size, max_embed_dim), attention_mask.dtype)
    final_attention_mask = final_attention_mask.at[b_idx, tgt].set(attention_mask, mode="drop")
    final_labels = jnp.full((batch_size, max_embed_dim), cfg["ignore_index"], labels.dtype)
    final_labels = final_labels.at[b_idx, tgt].set(labels, mode="drop")

    image_to_overwrite = jnp.all(final_embedding == 0, axis=-1)
    image_to_overwrite = image_to_overwrite & (
        jnp.cumsum(image_to_overwrite, axis=-1) - 1 >= nb_image_pad[:, None])

    # row-major boolean-mask assignment order, like torch's final_embedding[mask] = ...
    order = (jnp.cumsum(image_to_overwrite.reshape(-1)) - 1).reshape(batch_size, max_embed_dim)
    img_flat = image_features.reshape(-1, embed_dim)
    gathered = img_flat[jnp.clip(order, 0, img_flat.shape[0] - 1)]
    final_embedding = jnp.where(image_to_overwrite[..., None], gathered, final_embedding)

    final_attention_mask = final_attention_mask | image_to_overwrite.astype(final_attention_mask.dtype)
    position_ids = jnp.cumsum(final_attention_mask, axis=-1) - 1
    position_ids = jnp.where(final_attention_mask == 0, 1, position_ids)

    return final_embedding, final_attention_mask, final_labels, position_ids


def build_llava_mm_forward(cfg, plan):
    """Whole device forward as one jit graph (no host syncs inside)."""

    @jax.jit
    def fwd(input_ids, pixel_values, attention_mask, labels, params):
        # token embedding: pure DMA gather, not a matmul
        inputs_embeds = jnp.take(params["embed_table"], input_ids, axis=0)

        selected = clip_vision_tower(pixel_values, params["vision"], cfg)
        if cfg["vision_feature_select_strategy"] == "default":
            selected = selected[:, 1:]
        elif cfg["vision_feature_select_strategy"] == "full":
            pass
        else:
            raise ValueError("Unexpected select feature strategy")

        image_features = multi_modal_projector(selected.astype(jnp.bfloat16),
                                               params["projector"])

        inputs_embeds, attention_mask_m, labels_m, position_ids = (
            merge_input_ids_with_image_features(
                image_features, inputs_embeds, input_ids, attention_mask, labels, cfg, plan))

        seq_length = inputs_embeds.shape[1]
        position_ids = position_ids.reshape(-1, seq_length).astype(jnp.int32)
        attention_mask_4d = prepare_4d_causal_attention_mask(attention_mask_m, seq_length)
        hidden_states = inputs_embeds
        return hidden_states, attention_mask_m, attention_mask_4d, position_ids, labels_m

    return fwd


# ----------------------------------------------------------------------------
# Deterministic parameter init + one-time bf16 / fused-QKV / layer-stack preparation
# ----------------------------------------------------------------------------

class KeyGen:
    def __init__(self, key):
        self.key = key

    def __call__(self):
        self.key, sub = jax.random.split(self.key)
        return sub


def init_params(key, cfg):
    kg = KeyGen(key)
    Dv, Dt, V = cfg["vision_hidden"], cfg["text_hidden"], cfg["vocab_size"]
    p, C, I = cfg["patch_size"], 3, cfg["vision_intermediate"]
    T = (cfg["image_size"] // p) ** 2 + 1

    def w(shape):
        return jax.random.normal(kg(), shape, jnp.float32) * 0.02

    vision = dict(
        patch_w=w((C * p * p, Dv)),        # = Conv2d weight (Dv,C,p,p).reshape(Dv,-1).T
        class_emb=w((Dv,)),
        pos_emb=w((T, Dv)),
        pre_ln_g=jnp.ones((1, Dv), jnp.float32), pre_ln_b=jnp.zeros((1, Dv), jnp.float32),
        layers=[],
    )
    for _ in range(cfg["vision_layers"]):
        vision["layers"].append(dict(
            ln1_g=jnp.ones((1, Dv), jnp.float32), ln1_b=jnp.zeros((1, Dv), jnp.float32),
            wq=w((Dv, Dv)), bq=jnp.zeros((1, Dv), jnp.float32),
            wk=w((Dv, Dv)), bk=jnp.zeros((1, Dv), jnp.float32),
            wv=w((Dv, Dv)), bv=jnp.zeros((1, Dv), jnp.float32),
            wo=w((Dv, Dv)), bo=jnp.zeros((1, Dv), jnp.float32),
            ln2_g=jnp.ones((1, Dv), jnp.float32), ln2_b=jnp.zeros((1, Dv), jnp.float32),
            fc1_w=w((Dv, I)), fc1_b=jnp.zeros((1, I), jnp.float32),
            fc2_w=w((I, Dv)), fc2_b=jnp.zeros((1, Dv), jnp.float32),
        ))
    projector = dict(
        proj_w1=w((Dv, Dt)), proj_b1=jnp.zeros((1, Dt), jnp.float32),
        proj_w2=w((Dt, Dt)), proj_b2=jnp.zeros((1, Dt), jnp.float32),
    )
    return dict(embed_table=w((V, Dt)), vision=vision, projector=projector)


def prepare_params(params, cfg):
    """One-time host/XLA prep: cast matmul weights to bf16, fuse Q/K/V into (D, 3D) with the
    attention scale folded into the Q columns, and stack only the layers that are actually
    needed (vision_feature_layer) along a leading axis for the whole-tower fused kernel."""
    bf16 = jnp.bfloat16
    v = params["vision"]
    Dv = cfg["vision_hidden"]
    nh = cfg["vision_heads"]
    scale = (Dv // nh) ** -0.5
    n_run = num_tower_layers(cfg)
    layers = v["layers"][:n_run]        # layers beyond vision_feature_layer are never computed

    def stack(fn, dtype=None):
        arr = jnp.stack([fn(lyr) for lyr in layers], axis=0)
        return arr.astype(dtype) if dtype is not None else arr

    tower = None
    if n_run > 0:
        tower = dict(
            ln1_g=stack(lambda l: l["ln1_g"]), ln1_b=stack(lambda l: l["ln1_b"]),
            wqkv=stack(lambda l: jnp.concatenate(
                [l["wq"] * scale, l["wk"], l["wv"]], axis=1), bf16),
            bqkv=stack(lambda l: jnp.concatenate(
                [l["bq"] * scale, l["bk"], l["bv"]], axis=1)),
            wo=stack(lambda l: l["wo"], bf16), bo=stack(lambda l: l["bo"]),
            ln2_g=stack(lambda l: l["ln2_g"]), ln2_b=stack(lambda l: l["ln2_b"]),
            fc1_w=stack(lambda l: l["fc1_w"], bf16), fc1_b=stack(lambda l: l["fc1_b"]),
            fc2_w=stack(lambda l: l["fc2_w"], bf16), fc2_b=stack(lambda l: l["fc2_b"]),
        )

    vision = dict(
        patch_w=v["patch_w"].astype(bf16),
        class_emb=v["class_emb"].reshape(1, -1),
        pos_emb=v["pos_emb"],
        pre_ln_g=v["pre_ln_g"], pre_ln_b=v["pre_ln_b"],
        tower=tower,
    )
    pp = params["projector"]
    projector = dict(
        proj_w1=pp["proj_w1"].astype(bf16), proj_b1=pp["proj_b1"],
        proj_w2=pp["proj_w2"].astype(bf16), proj_b2=pp["proj_b2"],
    )
    return dict(embed_table=params["embed_table"], vision=vision, projector=projector)


# ----------------------------------------------------------------------------
# Main
# ----------------------------------------------------------------------------

if __name__ == "__main__":
    cfg = dict(
        vocab_size=64,
        text_hidden=32,
        vision_hidden=32,
        vision_intermediate=64,
        vision_heads=4,
        vision_layers=2,
        image_size=16,
        patch_size=8,
        image_token_index=63,
        pad_token_id=0,
        ignore_index=-100,
        vision_feature_layer=-2,
        vision_feature_select_strategy="default",
    )

    key = jax.random.PRNGKey(0)
    params = prepare_params(init_params(key, cfg), cfg)

    # batch=2, seq=8; one <image> token per sample; sample 1 right-padded with pad_token_id=0
    input_ids = jnp.array(
        [[5, 12, 63, 7, 9, 3, 11, 2],
         [4, 63, 8, 6, 10, 13, 2, 0]], dtype=jnp.int32)
    attention_mask = jnp.array(
        [[1, 1, 1, 1, 1, 1, 1, 1],
         [1, 1, 1, 1, 1, 1, 1, 0]], dtype=jnp.int32)
    labels = input_ids
    pixel_values = jax.random.normal(jax.random.fold_in(key, 123), (2, 3, 16, 16),
                                     dtype=jnp.float32)

    # host-side preprocessing of the data-dependent merge scalars (no device syncs later)
    num_image_patches = (cfg["image_size"] // cfg["patch_size"]) ** 2
    if cfg["vision_feature_select_strategy"] == "full":
        num_image_patches += 1
    plan = compute_merge_plan(np.asarray(input_ids), num_image_patches,
                              pixel_values.shape[0], cfg)

    forward = build_llava_mm_forward(cfg, plan)
    outs = forward(input_ids, pixel_values, attention_mask, labels, params)
    outs = jax.block_until_ready(outs)

    hidden_states, attn_mask, attn_mask_4d, position_ids, out_labels = outs
    # merged seq length = 8 text positions + (4-1) extra image positions = 11
    assert hidden_states.shape == (2, 11, 32)
    assert attn_mask.shape == (2, 11)
    assert attn_mask_4d.shape == (2, 1, 11, 11)
    assert position_ids.shape == (2, 11)
    assert out_labels.shape == (2, 11)

    print("KERNEL_OK")
</pallas_src>

<mosaic_0001>
module attributes {stable_mosaic.version = 11 : i64} {
  func.func @_vit_embed_kernel(%arg0: i32, %arg1: memref<1x4x192xbf16, #tpu.memory_space<vmem>>, %arg2: memref<192x32xbf16, #tpu.memory_space<vmem>>, %arg3: memref<1x32xf32, #tpu.memory_space<vmem>>, %arg4: memref<5x32xf32, #tpu.memory_space<vmem>>, %arg5: memref<1x32xf32, #tpu.memory_space<vmem>>, %arg6: memref<1x32xf32, #tpu.memory_space<vmem>>, %arg7: memref<1x5x32xf32, #tpu.memory_space<vmem>>) attributes {dimension_semantics = [#tpu.dimension_semantics<parallel>], iteration_bounds = array<i64: 2>, scalar_prefetch = 0 : i64, scratch_operands = 0 : i64, tpu.core_type = #tpu.core_type<tc>, window_params = [{transform_indices = @transform_0, window_bounds = array<i64: 1, 4, 192>}, {pipeline_mode = #tpu.pipeline_mode<synchronous>, transform_indices = @transform_1, window_bounds = array<i64: 192, 32>}, {pipeline_mode = #tpu.pipeline_mode<synchronous>, transform_indices = @transform_2, window_bounds = array<i64: 1, 32>}, {pipeline_mode = #tpu.pipeline_mode<synchronous>, transform_indices = @transform_3, window_bounds = array<i64: 5, 32>}, {pipeline_mode = #tpu.pipeline_mode<synchronous>, transform_indices = @transform_4, window_bounds = array<i64: 1, 32>}, {pipeline_mode = #tpu.pipeline_mode<synchronous>, transform_indices = @transform_5, window_bounds = array<i64: 1, 32>}, {transform_indices = @transform_6, window_bounds = array<i64: 1, 5, 32>}]} {
    %c0 = arith.constant 0 : index
    %c0_0 = arith.constant 0 : index
    %c0_1 = arith.constant 0 : index
    %0 = vector.load %arg1[%c0, %c0_0, %c0_1] : memref<1x4x192xbf16, #tpu.memory_space<vmem>>, vector<1x4x192xbf16>
    %1 = vector.shape_cast %0 : vector<1x4x192xbf16> to vector<4x192xbf16>
    %c0_2 = arith.constant 0 : index
    %c0_3 = arith.constant 0 : index
    %2 = vector.load %arg2[%c0_2, %c0_3] : memref<192x32xbf16, #tpu.memory_space<vmem>>, vector<192x32xbf16>
    %cst = arith.constant dense<0.000000e+00> : vector<4x32xf32>
    %3 = tpu.matmul %1, %2, %cst {dimension_numbers = #tpu.dot_dimension_numbers<[1], [0], [0], [1], [0, 0, 1, 1], [], []>} : vector<4x192xbf16>, vector<192x32xbf16>, vector<4x32xf32> -> vector<4x32xf32>
    %c0_4 = arith.constant 0 : index
    %c0_5 = arith.constant 0 : index
    %4 = vector.load %arg3[%c0_4, %c0_5] : memref<1x32xf32, #tpu.memory_space<vmem>>, vector<1x32xf32>
    %5 = tpu.concatenate %4, %3 in 0 : vector<1x32xf32>, vector<4x32xf32> -> vector<5x32xf32>
    %c0_6 = arith.constant 0 : index
    %c0_7 = arith.constant 0 : index
    %6 = vector.load %arg4[%c0_6, %c0_7] : memref<5x32xf32, #tpu.memory_space<vmem>>, vector<5x32xf32>
    %7 = arith.addf %5, %6 : vector<5x32xf32>
    %c0_8 = arith.constant 0 : index
    %c0_9 = arith.constant 0 : index
    %8 = vector.load %arg5[%c0_8, %c0_9] : memref<1x32xf32, #tpu.memory_space<vmem>>, vector<1x32xf32>
    %c0_10 = arith.constant 0 : index
    %c0_11 = arith.constant 0 : index
    %9 = vector.load %arg6[%c0_10, %c0_11] : memref<1x32xf32, #tpu.memory_space<vmem>>, vector<1x32xf32>
    %cst_12 = arith.constant dense<0.000000e+00> : vector<5xf32>
    %10 = vector.multi_reduction <add>, %7, %cst_12 [1] : vector<5x32xf32> to vector<5xf32>
    %11 = vector.shape_cast %10 : vector<5xf32> to vector<5x1xf32>
    %cst_13 = arith.constant 3.200000e+01 : f32
    %12 = vector.broadcast %cst_13 : f32 to vector<5x1xf32>
    %13 = arith.divf %11, %12 : vector<5x1xf32>
    %14 = vector.broadcast %13 : vector<5x1xf32> to vector<5x32xf32>
    %15 = arith.subf %7, %14 : vector<5x32xf32>
    %16 = arith.mulf %15, %15 : vector<5x32xf32>
    %cst_14 = arith.constant dense<0.000000e+00> : vector<5xf32>
    %17 = vector.multi_reduction <add>, %16, %cst_14 [1] : vector<5x32xf32> to vector<5xf32>
    %18 = vector.shape_cast %17 : vector<5xf32> to vector<5x1xf32>
    %cst_15 = arith.constant 3.200000e+01 : f32
    %19 = vector.broadcast %cst_15 : f32 to vector<5x1xf32>
    %20 = arith.divf %18, %19 : vector<5x1xf32>
    %21 = vector.broadcast %13 : vector<5x1xf32> to vector<5x32xf32>
    %22 = arith.subf %7, %21 : vector<5x32xf32>
    %cst_16 = arith.constant 9.99999974E-6 : f32
    %23 = vector.broadcast %cst_16 : f32 to vector<5x1xf32>
    %24 = arith.addf %20, %23 : vector<5x1xf32>
    %25 = math.rsqrt %24 : vector<5x1xf32>
    %26 = vector.broadcast %25 : vector<5x1xf32> to vector<5x32xf32>
    %27 = arith.mulf %22, %26 : vector<5x32xf32>
    %28 = vector.broadcast %8 : vector<1x32xf32> to vector<5x32xf32>
    %29 = arith.mulf %27, %28 : vector<5x32xf32>
    %30 = vector.broadcast %9 : vector<1x32xf32> to vector<5x32xf32>
    %31 = arith.addf %29, %30 : vector<5x32xf32>
    %c0_17 = arith.constant 0 : index
    %c0_18 = arith.constant 0 : index
    %c0_19 = arith.constant 0 : index
    %32 = vector.load %arg7[%c0_17, %c0_18, %c0_19] : memref<1x5x32xf32, #tpu.memory_space<vmem>>, vector<1x5x32xf32>
    %33 = vector.shape_cast %32 : vector<1x5x32xf32> to vector<5x32xf32>
    %34 = vector.shape_cast %31 : vector<5x32xf32> to vector<1x5x32xf32>
    tpu.vector_store %arg7[%c0_17, %c0_18, %c0_19], %34 {strides = array<i32>} : memref<1x5x32xf32, #tpu.memory_space<vmem>>, vector<1x5x32xf32>,
    return
  }
  func.func @transform_0(%arg0: i32) -> (i32, i32, i32) {
    %c0_i32 = arith.constant 0 : i32
    %c0_i32_0 = arith.constant 0 : i32
    %c0_i32_1 = arith.constant 0 : i32
    return %arg0, %c0_i32, %c0_i32_0 : i32, i32, i32
  }
  func.func @transform_1(%arg0: i32) -> (i32, i32) {
    %c0_i32 = arith.constant 0 : i32
    %c0_i32_0 = arith.constant 0 : i32
    %c0_i32_1 = arith.constant 0 : i32
    return %c0_i32, %c0_i32_0 : i32, i32
  }
  func.func @transform_2(%arg0: i32) -> (i32, i32) {
    %c0_i32 = arith.constant 0 : i32
    %c0_i32_0 = arith.constant 0 : i32
    %c0_i32_1 = arith.constant 0 : i32
    return %c0_i32, %c0_i32_0 : i32, i32
  }
  func.func @transform_3(%arg0: i32) -> (i32, i32) {
    %c0_i32 = arith.constant 0 : i32
    %c0_i32_0 = arith.constant 0 : i32
    %c0_i32_1 = arith.constant 0 : i32
    return %c0_i32, %c0_i32_0 : i32, i32
  }
  func.func @transform_4(%arg0: i32) -> (i32, i32) {
    %c0_i32 = arith.constant 0 : i32
    %c0_i32_0 = arith.constant 0 : i32
    %c0_i32_1 = arith.constant 0 : i32
    return %c0_i32, %c0_i32_0 : i32, i32
  }
  func.func @transform_5(%arg0: i32) -> (i32, i32) {
    %c0_i32 = arith.constant 0 : i32
    %c0_i32_0 = arith.constant 0 : i32
    %c0_i32_1 = arith.constant 0 : i32
    return %c0_i32, %c0_i32_0 : i32, i32
  }
  func.func @transform_6(%arg0: i32) -> (i32, i32, i32) {
    %c0_i32 = arith.constant 0 : i32
    %c0_i32_0 = arith.constant 0 : i32
    %c0_i32_1 = arith.constant 0 : i32
    return %arg0, %c0_i32, %c0_i32_0 : i32, i32, i32
  }
}

module attributes {stable_mosaic.version = 11 : i64} {
  func.func @_projector_kernel(%arg0: i32, %arg1: memref<1x4x32xbf16, #tpu.memory_space<vmem>>, %arg2: memref<32x32xbf16, #tpu.memory_space<vmem>>, %arg3: memref<1x32xf32, #tpu.memory_space<vmem>>, %arg4: memref<32x32xbf16, #tpu.memory_space<vmem>>, %arg5: memref<1x32xf32, #tpu.memory_space<vmem>>, %arg6: memref<1x4x32xf32, #tpu.memory_space<vmem>>) attributes {dimension_semantics = [#tpu.dimension_semantics<parallel>], iteration_bounds = array<i64: 2>, scalar_prefetch = 0 : i64, scratch_operands = 0 : i64, tpu.core_type = #tpu.core_type<tc>, window_params = [{transform_indices = @transform_0, window_bounds = array<i64: 1, 4, 32>}, {pipeline_mode = #tpu.pipeline_mode<synchronous>, transform_indices = @transform_1, window_bounds = array<i64: 32, 32>}, {pipeline_mode = #tpu.pipeline_mode<synchronous>, transform_indices = @transform_2, window_bounds = array<i64: 1, 32>}, {pipeline_mode = #tpu.pipeline_mode<synchronous>, transform_indices = @transform_3, window_bounds = array<i64: 32, 32>}, {pipeline_mode = #tpu.pipeline_mode<synchronous>, transform_indices = @transform_4, window_bounds = array<i64: 1, 32>}, {transform_indices = @transform_5, window_bounds = array<i64: 1, 4, 32>}]} {
    %c0 = arith.constant 0 : index
    %c0_0 = arith.constant 0 : index
    %c0_1 = arith.constant 0 : index
    %0 = vector.load %arg1[%c0, %c0_0, %c0_1] : memref<1x4x32xbf16, #tpu.memory_space<vmem>>, vector<1x4x32xbf16>
    %1 = vector.shape_cast %0 : vector<1x4x32xbf16> to vector<4x32xbf16>
    %c0_2 = arith.constant 0 : index
    %c0_3 = arith.constant 0 : index
    %2 = vector.load %arg2[%c0_2, %c0_3] : memref<32x32xbf16, #tpu.memory_space<vmem>>, vector<32x32xbf16>
    %cst = arith.constant dense<0.000000e+00> : vector<4x32xf32>
    %3 = tpu.matmul %1, %2, %cst {dimension_numbers = #tpu.dot_dimension_numbers<[1], [0], [0], [1], [0, 0, 1, 1], [], []>} : vector<4x32xbf16>, vector<32x32xbf16>, vector<4x32xf32> -> vector<4x32xf32>
    %c0_4 = arith.constant 0 : index
    %c0_5 = arith.constant 0 : index
    %4 = vector.load %arg3[%c0_4, %c0_5] : memref<1x32xf32, #tpu.memory_space<vmem>>, vector<1x32xf32>
    %5 = vector.broadcast %4 : vector<1x32xf32> to vector<4x32xf32>
    %6 = arith.addf %3, %5 : vector<4x32xf32>
    %cst_6 = arith.constant 5.000000e-01 : f32
    %7 = vector.broadcast %cst_6 : f32 to vector<4x32xf32>
    %8 = arith.mulf %7, %6 : vector<4x32xf32>
    %cst_7 = arith.constant 0.707106769 : f32
    %9 = vector.broadcast %cst_7 : f32 to vector<4x32xf32>
    %10 = arith.mulf %6, %9 : vector<4x32xf32>
    %11 = math.erf %10 : vector<4x32xf32>
    %cst_8 = arith.constant 1.000000e+00 : f32
    %12 = vector.broadcast %cst_8 : f32 to vector<4x32xf32>
    %13 = arith.addf %12, %11 : vector<4x32xf32>
    %14 = arith.mulf %8, %13 : vector<4x32xf32>
    %15 = arith.truncf %14 : vector<4x32xf32> to vector<4x32xbf16>
    %c0_9 = arith.constant 0 : index
    %c0_10 = arith.constant 0 : index
    %16 = vector.load %arg4[%c0_9, %c0_10] : memref<32x32xbf16, #tpu.memory_space<vmem>>, vector<32x32xbf16>
    %cst_11 = arith.constant dense<0.000000e+00> : vector<4x32xf32>
    %17 = tpu.matmul %15, %16, %cst_11 {dimension_numbers = #tpu.dot_dimension_numbers<[1], [0], [0], [1], [0, 0, 1, 1], [], []>} : vector<4x32xbf16>, vector<32x32xbf16>, vector<4x32xf32> -> vector<4x32xf32>
    %c0_12 = arith.constant 0 : index
    %c0_13 = arith.constant 0 : index
    %18 = vector.load %arg5[%c0_12, %c0_13] : memref<1x32xf32, #tpu.memory_space<vmem>>, vector<1x32xf32>
    %19 = vector.broadcast %18 : vector<1x32xf32> to vector<4x32xf32>
    %20 = arith.addf %17, %19 : vector<4x32xf32>
    %c0_14 = arith.constant 0 : index
    %c0_15 = arith.constant 0 : index
    %c0_16 = arith.constant 0 : index
    %21 = vector.load %arg6[%c0_14, %c0_15, %c0_16] : memref<1x4x32xf32, #tpu.memory_space<vmem>>, vector<1x4x32xf32>
    %22 = vector.shape_cast %21 : vector<1x4x32xf32> to vector<4x32xf32>
    %23 = vector.shape_cast %20 : vector<4x32xf32> to vector<1x4x32xf32>
    tpu.vector_store %arg6[%c0_14, %c0_15, %c0_16], %23 {strides = array<i32>} : memref<1x4x32xf32, #tpu.memory_space<vmem>>, vector<1x4x32xf32>,
    return
  }
  func.func @transform_0(%arg0: i32) -> (i32, i32, i32) {
    %c0_i32 = arith.constant 0 : i32
    %c0_i32_0 = arith.constant 0 : i32
    %c0_i32_1 = arith.constant 0 : i32
    return %arg0, %c0_i32, %c0_i32_0 : i32, i32, i32
  }
  func.func @transform_1(%arg0: i32) -> (i32, i32) {
    %c0_i32 = arith.constant 0 : i32
    %c0_i32_0 = arith.constant 0 : i32
    %c0_i32_1 = arith.constant 0 : i32
    return %c0_i32, %c0_i32_0 : i32, i32
  }
  func.func @transform_2(%arg0: i32) -> (i32, i32) {
    %c0_i32 = arith.constant 0 : i32
    %c0_i32_0 = arith.constant 0 : i32
    %c0_i32_1 = arith.constant 0 : i32
    return %c0_i32, %c0_i32_0 : i32, i32
  }
  func.func @transform_3(%arg0: i32) -> (i32, i32) {
    %c0_i32 = arith.constant 0 : i32
    %c0_i32_0 = arith.constant 0 : i32
    %c0_i32_1 = arith.constant 0 : i32
    return %c0_i32, %c0_i32_0 : i32, i32
  }
  func.func @transform_4(%arg0: i32) -> (i32, i32) {
    %c0_i32 = arith.constant 0 : i32
    %c0_i32_0 = arith.constant 0 : i32
    %c0_i32_1 = arith.constant 0 : i32
    return %c0_i32, %c0_i32_0 : i32, i32
  }
  func.func @transform_5(%arg0: i32) -> (i32, i32, i32) {
    %c0_i32 = arith.constant 0 : i32
    %c0_i32_0 = arith.constant 0 : i32
    %c0_i32_1 = arith.constant 0 : i32
    return %arg0, %c0_i32, %c0_i32_0 : i32, i32, i32
  }
}

module attributes {stable_mosaic.version = 11 : i64} {
  func.func @_clip_layer_kernel(%arg0: i32, %arg1: i32, %arg2: memref<1x5x32xf32, #tpu.memory_space<vmem>>, %arg3: memref<1x1x32xf32, #tpu.memory_space<vmem>>, %arg4: memref<1x1x32xf32, #tpu.memory_space<vmem>>, %arg5: memref<1x32x96xbf16, #tpu.memory_space<vmem>>, %arg6: memref<1x1x96xf32, #tpu.memory_space<vmem>>, %arg7: memref<1x32x32xbf16, #tpu.memory_space<vmem>>, %arg8: memref<1x1x32xf32, #tpu.memory_space<vmem>>, %arg9: memref<1x1x32xf32, #tpu.memory_space<vmem>>, %arg10: memref<1x1x32xf32, #tpu.memory_space<vmem>>, %arg11: memref<1x32x64xbf16, #tpu.memory_space<vmem>>, %arg12: memref<1x1x64xf32, #tpu.memory_space<vmem>>, %arg13: memref<1x64x32xbf16, #tpu.memory_space<vmem>>, %arg14: memref<1x1x32xf32, #tpu.memory_space<vmem>>, %arg15: memref<1x5x32xf32, #tpu.memory_space<vmem>>, %arg16: memref<5x32xf32, #tpu.memory_space<vmem>>, %arg17: memref<5x32xbf16, #tpu.memory_space<vmem>>) attributes {dimension_semantics = [#tpu.dimension_semantics<parallel>, #tpu.dimension_semantics<arbitrary>], iteration_bounds = array<i64: 2, 1>, scalar_prefetch = 0 : i64, scratch_operands = 2 : i64, tpu.core_type = #tpu.core_type<tc>, window_params = [{transform_indices = @transform_0, window_bounds = array<i64: 1, 5, 32>}, {transform_indices = @transform_1, window_bounds = array<i64: 1, 1, 32>}, {transform_indices = @transform_2, window_bounds = array<i64: 1, 1, 32>}, {transform_indices = @transform_3, window_bounds = array<i64: 1, 32, 96>}, {transform_indices = @transform_4, window_bounds = array<i64: 1, 1, 96>}, {transform_indices = @transform_5, window_bounds = array<i64: 1, 32, 32>}, {transform_indices = @transform_6, window_bounds = array<i64: 1, 1, 32>}, {transform_indices = @transform_7, window_bounds = array<i64: 1, 1, 32>}, {transform_indices = @transform_8, window_bounds = array<i64: 1, 1, 32>}, {transform_indices = @transform_9, window_bounds = array<i64: 1, 32, 64>}, {transform_indices = @transform_10, window_bounds = array<i64: 1, 1, 64>}, {transform_indices = @transform_11, window_bounds = array<i64: 1, 64, 32>}, {transform_indices = @transform_12, window_bounds = array<i64: 1, 1, 32>}, {transform_indices = @transform_13, window_bounds = array<i64: 1, 5, 32>}]} {
    %c0_i32 = arith.constant 0 : i32
    %0 = arith.cmpi eq, %arg1, %c0_i32 : i32
    %1 = arith.extui %0 : i1 to i32
    %c0_i32_0 = arith.constant 0 : i32
    %2 = arith.cmpi ne, %1, %c0_i32_0 : i32
    scf.if %2 {
      %c0_84 = arith.constant 0 : index
      %c0_85 = arith.constant 0 : index
      %c0_86 = arith.constant 0 : index
      %188 = vector.load %arg2[%c0_84, %c0_85, %c0_86] : memref<1x5x32xf32, #tpu.memory_space<vmem>>, vector<1x5x32xf32>
      %189 = vector.shape_cast %188 : vector<1x5x32xf32> to vector<5x32xf32>
      %c0_87 = arith.constant 0 : index
      %c0_88 = arith.constant 0 : index
      %190 = vector.load %arg16[%c0_87, %c0_88] : memref<5x32xf32, #tpu.memory_space<vmem>>, vector<5x32xf32>
      tpu.vector_store %arg16[%c0_87, %c0_88], %189 {strides = array<i32>} : memref<5x32xf32, #tpu.memory_space<vmem>>, vector<5x32xf32>,
    } else {
    }
    %c0 = arith.constant 0 : index
    %c0_1 = arith.constant 0 : index
    %3 = vector.load %arg16[%c0, %c0_1] : memref<5x32xf32, #tpu.memory_space<vmem>>, vector<5x32xf32>
    %c0_2 = arith.constant 0 : index
    %c0_3 = arith.constant 0 : index
    %c0_4 = arith.constant 0 : index
    %4 = vector.load %arg3[%c0_2, %c0_3, %c0_4] : memref<1x1x32xf32, #tpu.memory_space<vmem>>, vector<1x1x32xf32>
    %5 = vector.shape_cast %4 : vector<1x1x32xf32> to vector<1x32xf32>
    %c0_5 = arith.constant 0 : index
    %c0_6 = arith.constant 0 : index
    %c0_7 = arith.constant 0 : index
    %6 = vector.load %arg4[%c0_5, %c0_6, %c0_7] : memref<1x1x32xf32, #tpu.memory_space<vmem>>, vector<1x1x32xf32>
    %7 = vector.shape_cast %6 : vector<1x1x32xf32> to vector<1x32xf32>
    %cst = arith.constant dense<0.000000e+00> : vector<5xf32>
    %8 = vector.multi_reduction <add>, %3, %cst [1] : vector<5x32xf32> to vector<5xf32>
    %9 = vector.shape_cast %8 : vector<5xf32> to vector<5x1xf32>
    %cst_8 = arith.constant 3.200000e+01 : f32
    %10 = vector.broadcast %cst_8 : f32 to vector<5x1xf32>
    %11 = arith.divf %9, %10 : vector<5x1xf32>
    %12 = vector.broadcast %11 : vector<5x1xf32> to vector<5x32xf32>
    %13 = arith.subf %3, %12 : vector<5x32xf32>
    %14 = arith.mulf %13, %13 : vector<5x32xf32>
    %cst_9 = arith.constant dense<0.000000e+00> : vector<5xf32>
    %15 = vector.multi_reduction <add>, %14, %cst_9 [1] : vector<5x32xf32> to vector<5xf32>
    %16 = vector.shape_cast %15 : vector<5xf32> to vector<5x1xf32>
    %cst_10 = arith.constant 3.200000e+01 : f32
    %17 = vector.broadcast %cst_10 : f32 to vector<5x1xf32>
    %18 = arith.divf %16, %17 : vector<5x1xf32>
    %19 = vector.broadcast %11 : vector<5x1xf32> to vector<5x32xf32>
    %20 = arith.subf %3, %19 : vector<5x32xf32>
    %cst_11 = arith.constant 9.99999974E-6 : f32
    %21 = vector.broadcast %cst_11 : f32 to vector<5x1xf32>
    %22 = arith.addf %18, %21 : vector<5x1xf32>
    %23 = math.rsqrt %22 : vector<5x1xf32>
    %24 = vector.broadcast %23 : vector<5x1xf32> to vector<5x32xf32>
    %25 = arith.mulf %20, %24 : vector<5x32xf32>
    %26 = vector.broadcast %5 : vector<1x32xf32> to vector<5x32xf32>
    %27 = arith.mulf %25, %26 : vector<5x32xf32>
    %28 = vector.broadcast %7 : vector<1x32xf32> to vector<5x32xf32>
    %29 = arith.addf %27, %28 : vector<5x32xf32>
    %30 = arith.truncf %29 : vector<5x32xf32> to vector<5x32xbf16>
    %c0_12 = arith.constant 0 : index
    %c0_13 = arith.constant 0 : index
    %c0_14 = arith.constant 0 : index
    %31 = vector.load %arg5[%c0_12, %c0_13, %c0_14] : memref<1x32x96xbf16, #tpu.memory_space<vmem>>, vector<1x32x96xbf16>
    %32 = vector.shape_cast %31 : vector<1x32x96xbf16> to vector<32x96xbf16>
    %cst_15 = arith.constant dense<0.000000e+00> : vector<5x96xf32>
    %33 = tpu.matmul %30, %32, %cst_15 {dimension_numbers = #tpu.dot_dimension_numbers<[1], [0], [0], [1], [0, 0, 1, 1], [], []>} : vector<5x32xbf16>, vector<32x96xbf16>, vector<5x96xf32> -> vector<5x96xf32>
    %c0_16 = arith.constant 0 : index
    %c0_17 = arith.constant 0 : index
    %c0_18 = arith.constant 0 : index
    %34 = vector.load %arg6[%c0_16, %c0_17, %c0_18] : memref<1x1x96xf32, #tpu.memory_space<vmem>>, vector<1x1x96xf32>
    %35 = vector.shape_cast %34 : vector<1x1x96xf32> to vector<1x96xf32>
    %36 = vector.broadcast %35 : vector<1x96xf32> to vector<5x96xf32>
    %37 = arith.addf %33, %36 : vector<5x96xf32>
    %38 = vector.extract_strided_slice %37 {offsets = [0, 0], sizes = [5, 8], strides = [1, 1]} : vector<5x96xf32> to vector<5x8xf32>
    %39 = arith.truncf %38 : vector<5x8xf32> to vector<5x8xbf16>
    %40 = vector.extract_strided_slice %37 {offsets = [0, 32], sizes = [5, 8], strides = [1, 1]} : vector<5x96xf32> to vector<5x8xf32>
    %41 = arith.truncf %40 : vector<5x8xf32> to vector<5x8xbf16>
    %42 = vector.extract_strided_slice %37 {offsets = [0, 64], sizes = [5, 8], strides = [1, 1]} : vector<5x96xf32> to vector<5x8xf32>
    %43 = arith.truncf %42 : vector<5x8xf32> to vector<5x8xbf16>
    %cst_19 = arith.constant dense<0.000000e+00> : vector<5x5xf32>
    %44 = tpu.matmul %39, %41, %cst_19 {dimension_numbers = #tpu.dot_dimension_numbers<[1], [1], [0], [0], [0, 0, 1, 0], [], []>} : vector<5x8xbf16>, vector<5x8xbf16>, vector<5x5xf32> -> vector<5x5xf32>
    %cst_20 = arith.constant dense<0xFF800000> : vector<5xf32>
    %45 = vector.multi_reduction <maximumf>, %44, %cst_20 [1] : vector<5x5xf32> to vector<5xf32>
    %46 = vector.shape_cast %45 : vector<5xf32> to vector<5x1xf32>
    %47 = vector.broadcast %46 : vector<5x1xf32> to vector<5x5xf32>
    %48 = arith.subf %44, %47 : vector<5x5xf32>
    %49 = math.exp %48 : vector<5x5xf32>
    %cst_21 = arith.constant dense<0.000000e+00> : vector<5xf32>
    %50 = vector.multi_reduction <add>, %49, %cst_21 [1] : vector<5x5xf32> to vector<5xf32>
    %51 = vector.shape_cast %50 : vector<5xf32> to vector<5x1xf32>
    %52 = tpu.reciprocal %51 {approx = true} : vector<5x1xf32> -> vector<5x1xf32>
    %53 = vector.broadcast %52 : vector<5x1xf32> to vector<5x5xf32>
    %54 = arith.mulf %49, %53 : vector<5x5xf32>
    %55 = arith.truncf %54 : vector<5x5xf32> to vector<5x5xbf16>
    %cst_22 = arith.constant dense<0.000000e+00> : vector<5x8xf32>
    %56 = tpu.matmul %55, %43, %cst_22 {dimension_numbers = #tpu.dot_dimension_numbers<[1], [0], [0], [1], [0, 0, 1, 1], [], []>} : vector<5x5xbf16>, vector<5x8xbf16>, vector<5x8xf32> -> vector<5x8xf32>
    %57 = arith.truncf %56 : vector<5x8xf32> to vector<5x8xbf16>
    %c0_23 = arith.constant 0 : index
    %c0_24 = arith.constant 0 : index
    %58 = vector.load %arg17[%c0_23, %c0_24] : memref<5x32xbf16, #tpu.memory_space<vmem>>, vector<5x8xbf16>
    tpu.vector_store %arg17[%c0_23, %c0_24], %57 {strides = array<i32>} : memref<5x32xbf16, #tpu.memory_space<vmem>>, vector<5x8xbf16>,
    %59 = vector.extract_strided_slice %37 {offsets = [0, 8], sizes = [5, 8], strides = [1, 1]} : vector<5x96xf32> to vector<5x8xf32>
    %60 = arith.truncf %59 : vector<5x8xf32> to vector<5x8xbf16>
    %61 = vector.extract_strided_slice %37 {offsets = [0, 40], sizes = [5, 8], strides = [1, 1]} : vector<5x96xf32> to vector<5x8xf32>
    %62 = arith.truncf %61 : vector<5x8xf32> to vector<5x8xbf16>
    %63 = vector.extract_strided_slice %37 {offsets = [0, 72], sizes = [5, 8], strides = [1, 1]} : vector<5x96xf32> to vector<5x8xf32>
    %64 = arith.truncf %63 : vector<5x8xf32> to vector<5x8xbf16>
    %cst_25 = arith.constant dense<0.000000e+00> : vector<5x5xf32>
    %65 = tpu.matmul %60, %62, %cst_25 {dimension_numbers = #tpu.dot_dimension_numbers<[1], [1], [0], [0], [0, 0, 1, 0], [], []>} : vector<5x8xbf16>, vector<5x8xbf16>, vector<5x5xf32> -> vector<5x5xf32>
    %cst_26 = arith.constant dense<0xFF800000> : vector<5xf32>
    %66 = vector.multi_reduction <maximumf>, %65, %cst_26 [1] : vector<5x5xf32> to vector<5xf32>
    %67 = vector.shape_cast %66 : vector<5xf32> to vector<5x1xf32>
    %68 = vector.broadcast %67 : vector<5x1xf32> to vector<5x5xf32>
    %69 = arith.subf %65, %68 : vector<5x5xf32>
    %70 = math.exp %69 : vector<5x5xf32>
    %cst_27 = arith.constant dense<0.000000e+00> : vector<5xf32>
    %71 = vector.multi_reduction <add>, %70, %cst_27 [1] : vector<5x5xf32> to vector<5xf32>
    %72 = vector.shape_cast %71 : vector<5xf32> to vector<5x1xf32>
    %73 = tpu.reciprocal %72 {approx = true} : vector<5x1xf32> -> vector<5x1xf32>
    %74 = vector.broadcast %73 : vector<5x1xf32> to vector<5x5xf32>
    %75 = arith.mulf %70, %74 : vector<5x5xf32>
    %76 = arith.truncf %75 : vector<5x5xf32> to vector<5x5xbf16>
    %cst_28 = arith.constant dense<0.000000e+00> : vector<5x8xf32>
    %77 = tpu.matmul %76, %64, %cst_28 {dimension_numbers = #tpu.dot_dimension_numbers<[1], [0], [0], [1], [0, 0, 1, 1], [], []>} : vector<5x5xbf16>, vector<5x8xbf16>, vector<5x8xf32> -> vector<5x8xf32>
    %78 = arith.truncf %77 : vector<5x8xf32> to vector<5x8xbf16>
    %c0_29 = arith.constant 0 : index
    %c8 = arith.constant 8 : index
    %79 = vector.load %arg17[%c0_29, %c8] : memref<5x32xbf16, #tpu.memory_space<vmem>>, vector<5x8xbf16>
    tpu.vector_store %arg17[%c0_29, %c8], %78 {strides = array<i32>} : memref<5x32xbf16, #tpu.memory_space<vmem>>, vector<5x8xbf16>,
    %80 = vector.extract_strided_slice %37 {offsets = [0, 16], sizes = [5, 8], strides = [1, 1]} : vector<5x96xf32> to vector<5x8xf32>
    %81 = arith.truncf %80 : vector<5x8xf32> to vector<5x8xbf16>
    %82 = vector.extract_strided_slice %37 {offsets = [0, 48], sizes = [5, 8], strides = [1, 1]} : vector<5x96xf32> to vector<5x8xf32>
    %83 = arith.truncf %82 : vector<5x8xf32> to vector<5x8xbf16>
    %84 = vector.extract_strided_slice %37 {offsets = [0, 80], sizes = [5, 8], strides = [1, 1]} : vector<5x96xf32> to vector<5x8xf32>
    %85 = arith.truncf %84 : vector<5x8xf32> to vector<5x8xbf16>
    %cst_30 = arith.constant dense<0.000000e+00> : vector<5x5xf32>
    %86 = tpu.matmul %81, %83, %cst_30 {dimension_numbers = #tpu.dot_dimension_numbers<[1], [1], [0], [0], [0, 0, 1, 0], [], []>} : vector<5x8xbf16>, vector<5x8xbf16>, vector<5x5xf32> -> vector<5x5xf32>
    %cst_31 = arith.constant dense<0xFF800000> : vector<5xf32>
    %87 = vector.multi_reduction <maximumf>, %86, %cst_31 [1] : vector<5x5xf32> to vector<5xf32>
    %88 = vector.shape_cast %87 : vector<5xf32> to vector<5x1xf32>
    %89 = vector.broadcast %88 : vector<5x1xf32> to vector<5x5xf32>
    %90 = arith.subf %86, %89 : vector<5x5xf32>
    %91 = math.exp %90 : vector<5x5xf32>
    %cst_32 = arith.constant dense<0.000000e+00> : vector<5xf32>
    %92 = vector.multi_reduction <add>, %91, %cst_32 [1] : vector<5x5xf32> to vector<5xf32>
    %93 = vector.shape_cast %92 : vector<5xf32> to vector<5x1xf32>
    %94 = tpu.reciprocal %93 {approx = true} : vector<5x1xf32> -> vector<5x1xf32>
    %95 = vector.broadcast %94 : vector<5x1xf32> to vector<5x5xf32>
    %96 = arith.mulf %91, %95 : vector<5x5xf32>
    %97 = arith.truncf %96 : vector<5x5xf32> to vector<5x5xbf16>
    %cst_33 = arith.constant dense<0.000000e+00> : vector<5x8xf32>
    %98 = tpu.matmul %97, %85, %cst_33 {dimension_numbers = #tpu.dot_dimension_numbers<[1], [0], [0], [1], [0, 0, 1, 1], [], []>} : vector<5x5xbf16>, vector<5x8xbf16>, vector<5x8xf32> -> vector<5x8xf32>
    %99 = arith.truncf %98 : vector<5x8xf32> to vector<5x8xbf16>
    %c0_34 = arith.constant 0 : index
    %c16 = arith.constant 16 : index
    %100 = vector.load %arg17[%c0_34, %c16] : memref<5x32xbf16, #tpu.memory_space<vmem>>, vector<5x8xbf16>
    tpu.vector_store %arg17[%c0_34, %c16], %99 {strides = array<i32>} : memref<5x32xbf16, #tpu.memory_space<vmem>>, vector<5x8xbf16>,
    %101 = vector.extract_strided_slice %37 {offsets = [0, 24], sizes = [5, 8], strides = [1, 1]} : vector<5x96xf32> to vector<5x8xf32>
    %102 = arith.truncf %101 : vector<5x8xf32> to vector<5x8xbf16>
    %103 = vector.extract_strided_slice %37 {offsets = [0, 56], sizes = [5, 8], strides = [1, 1]} : vector<5x96xf32> to vector<5x8xf32>
    %104 = arith.truncf %103 : vector<5x8xf32> to vector<5x8xbf16>
    %105 = vector.extract_strided_slice %37 {offsets = [0, 88], sizes = [5, 8], strides = [1, 1]} : vector<5x96xf32> to vector<5x8xf32>
    %106 = arith.truncf %105 : vector<5x8xf32> to vector<5x8xbf16>
    %cst_35 = arith.constant dense<0.000000e+00> : vector<5x5xf32>
    %107 = tpu.matmul %102, %104, %cst_35 {dimension_numbers = #tpu.dot_dimension_numbers<[1], [1], [0], [0], [0, 0, 1, 0], [], []>} : vector<5x8xbf16>, vector<5x8xbf16>, vector<5x5xf32> -> vector<5x5xf32>
    %cst_36 = arith.constant dense<0xFF800000> : vector<5xf32>
    %108 = vector.multi_reduction <maximumf>, %107, %cst_36 [1] : vector<5x5xf32> to vector<5xf32>
    %109 = vector.shape_cast %108 : vector<5xf32> to vector<5x1xf32>
    %110 = vector.broadcast %109 : vector<5x1xf32> to vector<5x5xf32>
    %111 = arith.subf %107, %110 : vector<5x5xf32>
    %112 = math.exp %111 : vector<5x5xf32>
    %cst_37 = arith.constant dense<0.000000e+00> : vector<5xf32>
    %113 = vector.multi_reduction <add>, %112, %cst_37 [1] : vector<5x5xf32> to vector<5xf32>
    %114 = vector.shape_cast %113 : vector<5xf32> to vector<5x1xf32>
    %115 = tpu.reciprocal %114 {approx = true} : vector<5x1xf32> -> vector<5x1xf32>
    %116 = vector.broadcast %115 : vector<5x1xf32> to vector<5x5xf32>
    %117 = arith.mulf %112, %116 : vector<5x5xf32>
    %118 = arith.truncf %117 : vector<5x5xf32> to vector<5x5xbf16>
    %cst_38 = arith.constant dense<0.000000e+00> : vector<5x8xf32>
    %119 = tpu.matmul %118, %106, %cst_38 {dimension_numbers = #tpu.dot_dimension_numbers<[1], [0], [0], [1], [0, 0, 1, 1], [], []>} : vector<5x5xbf16>, vector<5x8xbf16>, vector<5x8xf32> -> vector<5x8xf32>
    %120 = arith.truncf %119 : vector<5x8xf32> to vector<5x8xbf16>
    %c0_39 = arith.constant 0 : index
    %c24 = arith.constant 24 : index
    %121 = vector.load %arg17[%c0_39, %c24] : memref<5x32xbf16, #tpu.memory_space<vmem>>, vector<5x8xbf16>
    tpu.vector_store %arg17[%c0_39, %c24], %120 {strides = array<i32>} : memref<5x32xbf16, #tpu.memory_space<vmem>>, vector<5x8xbf16>,
    %c0_40 = arith.constant 0 : index
    %c0_41 = arith.constant 0 : index
    %c0_42 = arith.constant 0 : index
    %122 = vector.load %arg8[%c0_40, %c0_41, %c0_42] : memref<1x1x32xf32, #tpu.memory_space<vmem>>, vector<1x1x32xf32>
    %123 = vector.shape_cast %122 : vector<1x1x32xf32> to vector<1x32xf32>
    %124 = vector.broadcast %123 : vector<1x32xf32> to vector<5x32xf32>
    %125 = arith.addf %3, %124 : vector<5x32xf32>
    %c0_43 = arith.constant 0 : index
    %c0_44 = arith.constant 0 : index
    %126 = vector.load %arg17[%c0_43, %c0_44] : memref<5x32xbf16, #tpu.memory_space<vmem>>, vector<5x32xbf16>
    %c0_45 = arith.constant 0 : index
    %c0_46 = arith.constant 0 : index
    %c0_47 = arith.constant 0 : index
    %127 = vector.load %arg7[%c0_45, %c0_46, %c0_47] : memref<1x32x32xbf16, #tpu.memory_space<vmem>>, vector<1x32x32xbf16>
    %128 = vector.shape_cast %127 : vector<1x32x32xbf16> to vector<32x32xbf16>
    %cst_48 = arith.constant dense<0.000000e+00> : vector<5x32xf32>
    %129 = tpu.matmul %126, %128, %cst_48 {dimension_numbers = #tpu.dot_dimension_numbers<[1], [0], [0], [1], [0, 0, 1, 1], [], []>} : vector<5x32xbf16>, vector<32x32xbf16>, vector<5x32xf32> -> vector<5x32xf32>
    %130 = arith.addf %125, %129 : vector<5x32xf32>
    %c0_49 = arith.constant 0 : index
    %c0_50 = arith.constant 0 : index
    %131 = vector.load %arg16[%c0_49, %c0_50] : memref<5x32xf32, #tpu.memory_space<vmem>>, vector<5x32xf32>
    tpu.vector_store %arg16[%c0_49, %c0_50], %130 {strides = array<i32>} : memref<5x32xf32, #tpu.memory_space<vmem>>, vector<5x32xf32>,
    %c0_51 = arith.constant 0 : index
    %c0_52 = arith.constant 0 : index
    %132 = vector.load %arg16[%c0_51, %c0_52] : memref<5x32xf32, #tpu.memory_space<vmem>>, vector<5x32xf32>
    %c0_53 = arith.constant 0 : index
    %c0_54 = arith.constant 0 : index
    %c0_55 = arith.constant 0 : index
    %133 = vector.load %arg9[%c0_53, %c0_54, %c0_55] : memref<1x1x32xf32, #tpu.memory_space<vmem>>, vector<1x1x32xf32>
    %134 = vector.shape_cast %133 : vector<1x1x32xf32> to vector<1x32xf32>
    %c0_56 = arith.constant 0 : index
    %c0_57 = arith.constant 0 : index
    %c0_58 = arith.constant 0 : index
    %135 = vector.load %arg10[%c0_56, %c0_57, %c0_58] : memref<1x1x32xf32, #tpu.memory_space<vmem>>, vector<1x1x32xf32>
    %136 = vector.shape_cast %135 : vector<1x1x32xf32> to vector<1x32xf32>
    %cst_59 = arith.constant dense<0.000000e+00> : vector<5xf32>
    %137 = vector.multi_reduction <add>, %132, %cst_59 [1] : vector<5x32xf32> to vector<5xf32>
    %138 = vector.shape_cast %137 : vector<5xf32> to vector<5x1xf32>
    %cst_60 = arith.constant 3.200000e+01 : f32
    %139 = vector.broadcast %cst_60 : f32 to vector<5x1xf32>
    %140 = arith.divf %138, %139 : vector<5x1xf32>
    %141 = vector.broadcast %140 : vector<5x1xf32> to vector<5x32xf32>
    %142 = arith.subf %132, %141 : vector<5x32xf32>
    %143 = arith.mulf %142, %142 : vector<5x32xf32>
    %cst_61 = arith.constant dense<0.000000e+00> : vector<5xf32>
    %144 = vector.multi_reduction <add>, %143, %cst_61 [1] : vector<5x32xf32> to vector<5xf32>
    %145 = vector.shape_cast %144 : vector<5xf32> to vector<5x1xf32>
    %cst_62 = arith.constant 3.200000e+01 : f32
    %146 = vector.broadcast %cst_62 : f32 to vector<5x1xf32>
    %147 = arith.divf %145, %146 : vector<5x1xf32>
    %148 = vector.broadcast %140 : vector<5x1xf32> to vector<5x32xf32>
    %149 = arith.subf %132, %148 : vector<5x32xf32>
    %cst_63 = arith.constant 9.99999974E-6 : f32
    %150 = vector.broadcast %cst_63 : f32 to vector<5x1xf32>
    %151 = arith.addf %147, %150 : vector<5x1xf32>
    %152 = math.rsqrt %151 : vector<5x1xf32>
    %153 = vector.broadcast %152 : vector<5x1xf32> to vector<5x32xf32>
    %154 = arith.mulf %149, %153 : vector<5x32xf32>
    %155 = vector.broadcast %134 : vector<1x32xf32> to vector<5x32xf32>
    %156 = arith.mulf %154, %155 : vector<5x32xf32>
    %157 = vector.broadcast %136 : vector<1x32xf32> to vector<5x32xf32>
    %158 = arith.addf %156, %157 : vector<5x32xf32>
    %159 = arith.truncf %158 : vector<5x32xf32> to vector<5x32xbf16>
    %c0_64 = arith.constant 0 : index
    %c0_65 = arith.constant 0 : index
    %c0_66 = arith.constant 0 : index
    %160 = vector.load %arg11[%c0_64, %c0_65, %c0_66] : memref<1x32x64xbf16, #tpu.memory_space<vmem>>, vector<1x32x64xbf16>
    %161 = vector.shape_cast %160 : vector<1x32x64xbf16> to vector<32x64xbf16>
    %cst_67 = arith.constant dense<0.000000e+00> : vector<5x64xf32>
    %162 = tpu.matmul %159, %161, %cst_67 {dimension_numbers = #tpu.dot_dimension_numbers<[1], [0], [0], [1], [0, 0, 1, 1], [], []>} : vector<5x32xbf16>, vector<32x64xbf16>, vector<5x64xf32> -> vector<5x64xf32>
    %c0_68 = arith.constant 0 : index
    %c0_69 = arith.constant 0 : index
    %c0_70 = arith.constant 0 : index
    %163 = vector.load %arg12[%c0_68, %c0_69, %c0_70] : memref<1x1x64xf32, #tpu.memory_space<vmem>>, vector<1x1x64xf32>
    %164 = vector.shape_cast %163 : vector<1x1x64xf32> to vector<1x64xf32>
    %165 = vector.broadcast %164 : vector<1x64xf32> to vector<5x64xf32>
    %166 = arith.addf %162, %165 : vector<5x64xf32>
    %cst_71 = arith.constant 1.702000e+00 : f32
    %167 = vector.broadcast %cst_71 : f32 to vector<5x64xf32>
    %168 = arith.mulf %167, %166 : vector<5x64xf32>
    %169 = arith.negf %168 : vector<5x64xf32>
    %170 = math.exp %169 : vector<5x64xf32>
    %cst_72 = arith.constant 1.000000e+00 : f32
    %171 = vector.broadcast %cst_72 : f32 to vector<5x64xf32>
    %172 = arith.addf %171, %170 : vector<5x64xf32>
    %173 = arith.divf %171, %172 : vector<5x64xf32>
    %174 = arith.mulf %166, %173 : vector<5x64xf32>
    %175 = arith.truncf %174 : vector<5x64xf32> to vector<5x64xbf16>
    %c0_73 = arith.constant 0 : index
    %c0_74 = arith.constant 0 : index
    %c0_75 = arith.constant 0 : index
    %176 = vector.load %arg13[%c0_73, %c0_74, %c0_75] : memref<1x64x32xbf16, #tpu.memory_space<vmem>>, vector<1x64x32xbf16>
    %177 = vector.shape_cast %176 : vector<1x64x32xbf16> to vector<64x32xbf16>
    %cst_76 = arith.constant dense<0.000000e+00> : vector<5x32xf32>
    %178 = tpu.matmul %175, %177, %cst_76 {dimension_numbers = #tpu.dot_dimension_numbers<[1], [0], [0], [1], [0, 0, 1, 1], [], []>} : vector<5x64xbf16>, vector<64x32xbf16>, vector<5x32xf32> -> vector<5x32xf32>
    %179 = arith.addf %132, %178 : vector<5x32xf32>
    %c0_77 = arith.constant 0 : index
    %c0_78 = arith.constant 0 : index
    %c0_79 = arith.constant 0 : index
    %180 = vector.load %arg14[%c0_77, %c0_78, %c0_79] : memref<1x1x32xf32, #tpu.memory_space<vmem>>, vector<1x1x32xf32>
    %181 = vector.shape_cast %180 : vector<1x1x32xf32> to vector<1x32xf32>
    %182 = vector.broadcast %181 : vector<1x32xf32> to vector<5x32xf32>
    %183 = arith.addf %179, %182 : vector<5x32xf32>
    %c0_80 = arith.constant 0 : index
    %c0_81 = arith.constant 0 : index
    %184 = vector.load %arg16[%c0_80, %c0_81] : memref<5x32xf32, #tpu.memory_space<vmem>>, vector<5x32xf32>
    tpu.vector_store %arg16[%c0_80, %c0_81], %183 {strides = array<i32>} : memref<5x32xf32, #tpu.memory_space<vmem>>, vector<5x32xf32>,
    %c0_i32_82 = arith.constant 0 : i32
    %185 = arith.cmpi eq, %arg1, %c0_i32_82 : i32
    %186 = arith.extui %185 : i1 to i32
    %c0_i32_83 = arith.constant 0 : i32
    %187 = arith.cmpi ne, %186, %c0_i32_83 : i32
    scf.if %187 {
      %c0_84 = arith.constant 0 : index
      %c0_85 = arith.constant 0 : index
      %188 = vector.load %arg16[%c0_84, %c0_85] : memref<5x32xf32, #tpu.memory_space<vmem>>, vector<5x32xf32>
      %c0_86 = arith.constant 0 : index
      %c0_87 = arith.constant 0 : index
      %c0_88 = arith.constant 0 : index
      %189 = vector.load %arg15[%c0_86, %c0_87, %c0_88] : memref<1x5x32xf32, #tpu.memory_space<vmem>>, vector<1x5x32xf32>
      %190 = vector.shape_cast %189 : vector<1x5x32xf32> to vector<5x32xf32>
      %191 = vector.shape_cast %188 : vector<5x32xf32> to vector<1x5x32xf32>
      tpu.vector_store %arg15[%c0_86, %c0_87, %c0_88], %191 {strides = array<i32>} : memref<1x5x32xf32, #tpu.memory_space<vmem>>, vector<1x5x32xf32>,
    } else {
    }
    return
  }
  func.func @transform_0(%arg0: i32, %arg1: i32) -> (i32, i32, i32) {
    %c0_i32 = arith.constant 0 : i32
    %c0_i32_0 = arith.constant 0 : i32
    %c0_i32_1 = arith.constant 0 : i32
    return %arg0, %c0_i32, %c0_i32_0 : i32, i32, i32
  }
  func.func @transform_1(%arg0: i32, %arg1: i32) -> (i32, i32, i32) {
    %c0_i32 = arith.constant 0 : i32
    %c0_i32_0 = arith.constant 0 : i32
    %c0_i32_1 = arith.constant 0 : i32
    return %arg1, %c0_i32, %c0_i32_0 : i32, i32, i32
  }
  func.func @transform_2(%arg0: i32, %arg1: i32) -> (i32, i32, i32) {
    %c0_i32 = arith.constant 0 : i32
    %c0_i32_0 = arith.constant 0 : i32
    %c0_i32_1 = arith.constant 0 : i32
    return %arg1, %c0_i32, %c0_i32_0 : i32, i32, i32
  }
  func.func @transform_3(%arg0: i32, %arg1: i32) -> (i32, i32, i32) {
    %c0_i32 = arith.constant 0 : i32
    %c0_i32_0 = arith.constant 0 : i32
    %c0_i32_1 = arith.constant 0 : i32
    return %arg1, %c0_i32, %c0_i32_0 : i32, i32, i32
  }
  func.func @transform_4(%arg0: i32, %arg1: i32) -> (i32, i32, i32) {
    %c0_i32 = arith.constant 0 : i32
    %c0_i32_0 = arith.constant 0 : i32
    %c0_i32_1 = arith.constant 0 : i32
    return %arg1, %c0_i32, %c0_i32_0 : i32, i32, i32
  }
  func.func @transform_5(%arg0: i32, %arg1: i32) -> (i32, i32, i32) {
    %c0_i32 = arith.constant 0 : i32
    %c0_i32_0 = arith.constant 0 : i32
    %c0_i32_1 = arith.constant 0 : i32
    return %arg1, %c0_i32, %c0_i32_0 : i32, i32, i32
  }
  func.func @transform_6(%arg0: i32, %arg1: i32) -> (i32, i32, i32) {
    %c0_i32 = arith.constant 0 : i32
    %c0_i32_0 = arith.constant 0 : i32
    %c0_i32_1 = arith.constant 0 : i32
    return %arg1, %c0_i32, %c0_i32_0 : i32, i32, i32
  }
  func.func @transform_7(%arg0: i32, %arg1: i32) -> (i32, i32, i32) {
    %c0_i32 = arith.constant 0 : i32
    %c0_i32_0 = arith.constant 0 : i32
    %c0_i32_1 = arith.constant 0 : i32
    return %arg1, %c0_i32, %c0_i32_0 : i32, i32, i32
  }
  func.func @transform_8(%arg0: i32, %arg1: i32) -> (i32, i32, i32) {
    %c0_i32 = arith.constant 0 : i32
    %c0_i32_0 = arith.constant 0 : i32
    %c0_i32_1 = arith.constant 0 : i32
    return %arg1, %c0_i32, %c0_i32_0 : i32, i32, i32
  }
  func.func @transform_9(%arg0: i32, %arg1: i32) -> (i32, i32, i32) {
    %c0_i32 = arith.constant 0 : i32
    %c0_i32_0 = arith.constant 0 : i32
    %c0_i32_1 = arith.constant 0 : i32
    return %arg1, %c0_i32, %c0_i32_0 : i32, i32, i32
  }
  func.func @transform_10(%arg0: i32, %arg1: i32) -> (i32, i32, i32) {
    %c0_i32 = arith.constant 0 : i32
    %c0_i32_0 = arith.constant 0 : i32
    %c0_i32_1 = arith.constant 0 : i32
    return %arg1, %c0_i32, %c0_i32_0 : i32, i32, i32
  }
  func.func @transform_11(%arg0: i32, %arg1: i32) -> (i32, i32, i32) {
    %c0_i32 = arith.constant 0 : i32
    %c0_i32_0 = arith.constant 0 : i32
    %c0_i32_1 = arith.constant 0 : i32
    return %arg1, %c0_i32, %c0_i32_0 : i32, i32, i32
  }
  func.func @transform_12(%arg0: i32, %arg1: i32) -> (i32, i32, i32) {
    %c0_i32 = arith.constant 0 : i32
    %c0_i32_0 = arith.constant 0 : i32
    %c0_i32_1 = arith.constant 0 : i32
    return %arg1, %c0_i32, %c0_i32_0 : i32, i32, i32
  }
  func.func @transform_13(%arg0: i32, %arg1: i32) -> (i32, i32, i32) {
    %c0_i32 = arith.constant 0 : i32
    %c0_i32_0 = arith.constant 0 : i32
    %c0_i32_1 = arith.constant 0 : i32
    return %arg0, %c0_i32, %c0_i32_0 : i32, i32, i32
  }
}

</mosaic_0001>

<llo_original>
// kernel: fwd.5
$region0: #{fwd.5}
  #allocation0 [shape = 'u32[]', space=smem, size = 0x4, offset = 0x4, fixed_abs, tag = 'smem constant byte address 0x4 - core index']
  #allocation1 [shape = 'u32[144,128]{1,0:T(1,128)}', space=vmem, size = 0x12000, scoped, tag = 'internal scratch']
  %s0 = inlined_call_operand.vmem [shape: bf16[2,4,32], index: 0, kind: input, shape index: {}]
  %s1 = inlined_call_operand.vmem [shape: bf16[32,32], index: 1, kind: input, shape index: {}]
  %s2 = inlined_call_operand.vmem [shape: f32[1,32], index: 2, kind: input, shape index: {}]
  %s3 = inlined_call_operand.vmem [shape: bf16[32,32], index: 3, kind: input, shape index: {}]
  %s4 = inlined_call_operand.vmem [shape: f32[1,32], index: 4, kind: input, shape index: {}]
  %s5 = inlined_call_operand.vmem [shape: f32[2,4,32], index: 5, kind: output, shape index: {}]
  %s6 = sld [smem:[#allocation0]]
  $region53: #{fwd.5} parent=0
    _
  %s8 = ssub.s32 1, %s6
  %s9 = scalar_select 0, %s8, %s6
  loop: start=0, step=1, limit=4
  $region2: #{fwd.5} parent=0 // loop_pre_header
    _
  $region3: #{fwd.5} parent=0 // loop_header
    %s11 = sphi 0, %s15
    %p12 = scmp.ge.s32.totalorder %s11, 4
    %s21 = sphi 0, %s23
    %s24 = sphi 0, %s21
    %s25 = sphi 0, %s24
    %s41 = sphi 0, %s25
    %s45 = sphi 0, %s45
    %s47 = sphi 0, %s45
    %s48 = sphi 0, %s47
    %s62 = sphi 0, %s48
    %s66 = sphi 0, %s66
    %s68 = sphi 0, %s66
    %s69 = sphi 0, %s68
    %s83 = sphi 0, %s69
    %s87 = sphi 0, %s87
    %s89 = sphi 0, %s87
    %s90 = sphi 0, %s89
    %s104 = sphi 0, %s90
    %s108 = sphi 0, %s108
    %s110 = sphi 0, %s108
    %s111 = sphi 0, %s110
    %s125 = sphi 0, %s111
    %s131 = sphi 0, %s133
    %s134 = sphi 0, %s131
    %s135 = sphi 0, %s134
    %s151 = sphi 0, %s135
  $region4: #{fwd.5} parent=0 // loop_header_branch
    %14 = sbr.rel (%p12) target = $region8
  $region5: #{fwd.5} parent=0 // loop_body
    %s16 = ssub.s32 %s11, 1
    %s17 = ssub.s32 %s11, 2
    %s18 = sadd.s32 %s11, 1
    %s19 = ssub.s32 %s11, %s18
    %p20 = scmp.eq.s32.totalorder %s19, 0
    %s22 = sadd.s32 %s21, 1
    %s23 = scalar_select %p20, %s21, %s22
    %p26 = pneg %p20
    %p27 = scmp.eq.s32.totalorder %s11, 1
    %p28 = por %p26, %p27
    %p29 = scmp.ne.s32.totalorder %s21, %s24
    %p30 = scmp.eq.s32.totalorder %s11, 0
    %p31 = por %p29, %p30
    %p32 = scmp.ne.s32.totalorder %s21, %s24
    %p33 = scmp.eq.s32.totalorder %s16, 1
    %p34 = por %p32, %p33
    %p35 = scmp.ne.s32.totalorder %s24, %s25
    %p36 = scmp.eq.s32.totalorder %s16, 0
    %p37 = por %p35, %p36
    %p38 = scmp.ne.s32.totalorder %s24, %s25
    %p39 = scmp.eq.s32.totalorder %s17, 1
    %p40 = por %p38, %p39
    %p42 = scmp.ne.s32.totalorder %s25, %s41
    %p43 = scmp.eq.s32.totalorder %s17, 0
    %p44 = por %p42, %p43
    %s46 = sadd.s32 %s45, 1
    %p49 = scmp.eq.s32.totalorder %s11, 1
    %p50 = scmp.ne.s32.totalorder %s45, %s47
    %p51 = scmp.eq.s32.totalorder %s11, 0
    %p52 = por %p50, %p51
    %p53 = scmp.ne.s32.totalorder %s45, %s47
    %p54 = scmp.eq.s32.totalorder %s16, 1
    %p55 = por %p53, %p54
    %p56 = scmp.ne.s32.totalorder %s47, %s48
    %p57 = scmp.eq.s32.totalorder %s16, 0
    %p58 = por %p56, %p57
    %p59 = scmp.ne.s32.totalorder %s47, %s48
    %p60 = scmp.eq.s32.totalorder %s17, 1
    %p61 = por %p59, %p60
    %p63 = scmp.ne.s32.totalorder %s48, %s62
    %p64 = scmp.eq.s32.totalorder %s17, 0
    %p65 = por %p63, %p64
    %s67 = sadd.s32 %s66, 1
    %p70 = scmp.eq.s32.totalorder %s11, 1
    %p71 = scmp.ne.s32.totalorder %s66, %s68
    %p72 = scmp.eq.s32.totalorder %s11, 0
    %p73 = por %p71, %p72
    %p74 = scmp.ne.s32.totalorder %s66, %s68
    %p75 = scmp.eq.s32.totalorder %s16, 1
    %p76 = por %p74, %p75
    %p77 = scmp.ne.s32.totalorder %s68, %s69
    %p78 = scmp.eq.s32.totalorder %s16, 0
    %p79 = por %p77, %p78
    %p80 = scmp.ne.s32.totalorder %s68, %s69
    %p81 = scmp.eq.s32.totalorder %s17, 1
    %p82 = por %p80, %p81
    %p84 = scmp.ne.s32.totalorder %s69, %s83
    %p85 = scmp.eq.s32.totalorder %s17, 0
    %p86 = por %p84, %p85
    %s88 = sadd.s32 %s87, 1
    %p91 = scmp.eq.s32.totalorder %s11, 1
    %p92 = scmp.ne.s32.totalorder %s87, %s89
    %p93 = scmp.eq.s32.totalorder %s11, 0
    %p94 = por %p92, %p93
    %p95 = scmp.ne.s32.totalorder %s87, %s89
    %p96 = scmp.eq.s32.totalorder %s16, 1
    %p97 = por %p95, %p96
    %p98 = scmp.ne.s32.totalorder %s89, %s90
    %p99 = scmp.eq.s32.totalorder %s16, 0
    %p100 = por %p98, %p99
    %p101 = scmp.ne.s32.totalorder %s89, %s90
    %p102 = scmp.eq.s32.totalorder %s17, 1
    %p103 = por %p101, %p102
    %p105 = scmp.ne.s32.totalorder %s90, %s104
    %p106 = scmp.eq.s32.totalorder %s17, 0
    %p107 = por %p105, %p106
    %s109 = sadd.s32 %s108, 1
    %p112 = scmp.eq.s32.totalorder %s11, 1
    %p113 = scmp.ne.s32.totalorder %s108, %s110
    %p114 = scmp.eq.s32.totalorder %s11, 0
    %p115 = por %p113, %p114
    %p116 = scmp.ne.s32.totalorder %s108, %s110
    %p117 = scmp.eq.s32.totalorder %s16, 1
    %p118 = por %p116, %p117
    %p119 = scmp.ne.s32.totalorder %s110, %s111
    %p120 = scmp.eq.s32.totalorder %s16, 0
    %p121 = por %p119, %p120
    %p122 = scmp.ne.s32.totalorder %s110, %s111
    %p123 = scmp.eq.s32.totalorder %s17, 1
    %p124 = por %p122, %p123
    %p126 = scmp.ne.s32.totalorder %s111, %s125
    %p127 = scmp.eq.s32.totalorder %s17, 0
    %p128 = por %p126, %p127
    %s129 = ssub.s32 %s11, %s18
    %p130 = scmp.eq.s32.totalorder %s129, 0
    %s132 = sadd.s32 %s131, 1
    %s133 = scalar_select %p130, %s131, %s132
    %p136 = pneg %p130
    %p137 = scmp.eq.s32.totalorder %s11, 1
    %p138 = por %p136, %p137
    %p139 = scmp.ne.s32.totalorder %s131, %s134
    %p140 = scmp.eq.s32.totalorder %s11, 0
    %p141 = por %p139, %p140
    %p142 = scmp.ne.s32.totalorder %s131, %s134
    %p143 = scmp.eq.s32.totalorder %s16, 1
    %p144 = por %p142, %p143
    %p145 = scmp.ne.s32.totalorder %s134, %s135
    %p146 = scmp.eq.s32.totalorder %s16, 0
    %p147 = por %p145, %p146
    %p148 = scmp.ne.s32.totalorder %s134, %s135
    %p149 = scmp.eq.s32.totalorder %s17, 1
    %p150 = por %p148, %p149
    %p152 = scmp.ne.s32.totalorder %s135, %s151
    %p153 = scmp.eq.s32.totalorder %s17, 0
    %p154 = por %p152, %p153
    %p155 = scmp.le.s32.totalorder 1, %s11
    %p156 = scmp.lt.s32.totalorder %s11, 3
    %p157 = pnand %p155, %p156
    %p158 = pneg %p157
    // Predicated region
    $region9: #{fwd.5} parent=5 // pred_check
      _
    $region10: #{fwd.5} parent=5 // pred_check_branch
      %160 = sbr.rel (%p157) target = $region12
    $region11: #{fwd.5} parent=5 // pred_region
      %s161 = ssub.s32 %s11, 1
      // Predicated region
      $region13: #{fwd.5} parent=11 // pred_check
        %p162 = pneg %p58
      $region14: #{fwd.5} parent=11 // pred_check_branch
        %164 = sbr.rel (%p162) target = $region16
      $region15: #{fwd.5} parent=11 // pred_region
        _
      $region16: #{fwd.5} parent=11 // pred_fallthru
        _
      // Predicated region
      $region17: #{fwd.5} parent=11 // pred_check
        %p165 = pneg %p79
      $region18: #{fwd.5} parent=11 // pred_check_branch
        %167 = sbr.rel (%p165) target = $region20
      $region19: #{fwd.5} parent=11 // pred_region
        _
      $region20: #{fwd.5} parent=11 // pred_fallthru
        _
      // Predicated region
      $region21: #{fwd.5} parent=11 // pred_check
        %p168 = pneg %p100
      $region22: #{fwd.5} parent=11 // pred_check_branch
        %170 = sbr.rel (%p168) target = $region24
      $region23: #{fwd.5} parent=11 // pred_region
        _
      $region24: #{fwd.5} parent=11 // pred_fallthru
        _
      // Predicated region
      $region25: #{fwd.5} parent=11 // pred_check
        %p171 = pneg %p121
      $region26: #{fwd.5} parent=11 // pred_check_branch
        %173 = sbr.rel (%p171) target = $region28
      $region27: #{fwd.5} parent=11 // pred_region
        _
      $region28: #{fwd.5} parent=11 // pred_fallthru
        _
    $region12: #{fwd.5} parent=5 // pred_fallthru
      _
    %p174 = scmp.lt.s32.totalorder %s11, 2
    // Predicated region
    $region29: #{fwd.5} parent=5 // pred_check
      %p175 = pneg %p174
    $region30: #{fwd.5} parent=5 // pred_check_branch
      %177 = sbr.rel (%p175) target = $region32
    $region31: #{fwd.5} parent=5 // pred_region
      // Predicated region
      $region33: #{fwd.5} parent=31 // pred_check
        %p178 = pneg %p31
      $region34: #{fwd.5} parent=31 // pred_check_branch
        %180 = sbr.rel (%p178) target = $region36
      $region35: #{fwd.5} parent=31 // pred_region
        %p181 = scmp.lt.s32.totalorder %s11, 1
        %s182 = scalar_select %p181, %s11, 1
        %s183 = smul.addr %s182, 2
        %s184 = scalar_lea.vmem %s0, %s183
      $region36: #{fwd.5} parent=31 // pred_fallthru
        _
    $region32: #{fwd.5} parent=5 // pred_fallthru
      _
    %p185 = scmp.le.s32.totalorder 1, %s11
    %p186 = scmp.lt.s32.totalorder %s11, 3
    %p187 = pnand %p185, %p186
    %p188 = pneg %p187
    // Predicated region
    $region37: #{fwd.5} parent=5 // pred_check
      _
    $region38: #{fwd.5} parent=5 // pred_check_branch
      %190 = sbr.rel (%p187) target = $region40
    $region39: #{fwd.5} parent=5 // pred_region
      %s191 = ssub.s32 %s11, 1
      %p192 = scmp.lt.s32.totalorder %s16, 1
      %s193 = scalar_select %p192, %s16, 1
      %s194 = smul.addr %s193, 2
      %s195 = scalar_lea.vmem %s0, %s194
      %p196 = pneg %p37
      %p197 = pneg %p34
      %p198 = pneg %p58
      %p199 = pneg %p55
      %p200 = pneg %p79
      %p201 = pneg %p76
      %p202 = pneg %p100
      %p203 = pneg %p97
      %p204 = pneg %p121
      %p205 = pneg %p118
      %p206 = pneg %p147
      %p207 = pneg %p144
      %p208 = scmp.lt.s32.totalorder %s16, 1
      %s209 = scalar_select %p208, %s16, 1
      %s210 = smul.addr %s209, 4
      %s211 = scalar_lea.vmem %s5, %s210
      %p212 = scmp.lt.s32.totalorder %s16, 1
      %s213 = scalar_select %p212, %s16, 1
      %s214 = smul.addr %s213, 2
      %s215 = scalar_lea.vmem %s0, %s214
      %p216 = scmp.lt.s32.totalorder %s16, 1
      %s217 = scalar_select %p216, %s16, 1
      %s218 = smul.addr %s217, 4
      %s219 = scalar_lea.vmem %s5, %s218
      %v221 = vld [vmem:[%s215] sm:$0x3]
      %v222 = vld [vmem:[%s1] sm:$0xf]
      %v223 = vld [vmem:[%s1 + $0x4] sm:$0xf]
      %v224 = vld [vmem:[%s1 + $0x8] sm:$0xf]
      %v225 = vld [vmem:[%s1 + $0xc] sm:$0xf]
      %v226 = vld [vmem:[%s2] sm:$0x1]
      %v228 = vlaneseq
      %v229 = vshrl.u32 %v228, 7
      %v230 = vsub.s32 0, %v229
      %v231 = vrot.slane %v226, %v230
      %v237 = vunpack.c.l.b16 %v222
      %v238 = vunpack.c.l.b16 %v223
      %v239 = vunpack.c.l.b16 %v224
      %v240 = vunpack.c.l.b16 %v225
      %v241 = vpack.c.b16 %v238, %v237
      %v242 = vpack.c.b16 %v240, %v239
      %vm245 = vcmask 261120
      %v247 = vsel %vm245, %v221, 0
      %249 = vmatprep.subr.bf16.mxu0 0
      %250 = vmatpush1.bf16.msra.mxu0 0
      %251 = vmatprep.subr.bf16.mxu0 0
      %252 = vmatpush1.bf16.msra.mxu0 0
      %253 = vmatprep.subr.bf16.mxu0 0
      %254 = vmatpush1.bf16.msra.mxu0 0
      %255 = vmatprep.subr.bf16.mxu0 0
      %256 = vmatpush1.bf16.msra.mxu0 0
      %257 = vmatprep.subr.bf16.mxu0 0
      %258 = vmatpush1.bf16.msra.mxu0 0
      %259 = vmatprep.subr.bf16.mxu0 0
      %260 = vmatpush1.bf16.msra.mxu0 0
      %261 = vmatprep.subr.bf16.mxu0 0
      %262 = vmatpush1.bf16.msra.mxu0 %v242
      %263 = vmatprep.subr.bf16.mxu0 0
      %264 = vmatpush1.bf16.msra.mxu0 %v241
      %265 = vmatprep.subr.bf16.mxu0 0
      %266 = vmatpush2.bf16.msra.mxu0 0
      %267 = vmatprep.subr.bf16.mxu0 0
      %268 = vmatpush2.bf16.msra.mxu0 0
      %269 = vmatprep.subr.bf16.mxu0 0
      %270 = vmatpush2.bf16.msra.mxu0 0
      %271 = vmatprep.subr.bf16.mxu0 0
      %272 = vmatpush2.bf16.msra.mxu0 0
      %273 = vmatprep.subr.bf16.mxu0 0
      %274 = vmatpush2.bf16.msra.mxu0 0
      %275 = vmatprep.subr.bf16.mxu0 0
      %276 = vmatpush2.bf16.msra.mxu0 0
      %277 = vmatprep.subr.bf16.mxu0 0
      %278 = vmatpush2.bf16.msra.mxu0 0
      %279 = vmatprep.subr.bf16.mxu0 0
      %280 = vmatpush2.bf16.msra.mxu0 0
      %281 = vmatprep.mubr.bf16.mxu0 0
      %282 = vmatmul.mubr.bf16.gmra.mxu0 %v247
      %v283 = vpop.f32.mrf.mxu0
      %v284 = vadd.f32 %v231, %v283
      %v285 = vpop.f32.mrf.mxu0
      %v286 = vpop.f32.mrf.mxu0
      %v287 = vpop.f32.mrf.mxu0
      %288 = vdwg.mxu0
      %v289 = vmul.f32 %v284, 0.5
      %v290 = vmul.f32 %v284, 0.70710677
      %v291 = verf.f32.pop %v290
      %v292 = vadd.f32 %v291, 1.0
      %v293 = vmul.f32 %v289, %v292
      %v294 = vpack.c.bf16 %v293, %v293
      %v295 = vld [vmem:[%s3] sm:$0xf]
      %v296 = vld [vmem:[%s3 + $0x4] sm:$0xf]
      %v297 = vld [vmem:[%s3 + $0x8] sm:$0xf]
      %v298 = vld [vmem:[%s3 + $0xc] sm:$0xf]
      %v299 = vld [vmem:[%s4] sm:$0x1]
      %v301 = vlaneseq
      %v302 = vshrl.u32 %v301, 7
      %v303 = vsub.s32 0, %v302
      %v304 = vrot.slane %v299, %v303
      %v310 = vunpack.c.l.b16 %v295
      %v311 = vunpack.c.l.b16 %v296
      %v312 = vunpack.c.l.b16 %v297
      %v313 = vunpack.c.l.b16 %v298
      %v314 = vpack.c.b16 %v311, %v310
      %v315 = vpack.c.b16 %v313, %v312
      %v319 = vsel %vm245, %v294, 0
      %321 = vmatprep.subr.bf16.mxu0 0
      %322 = vmatpush1.bf16.msra.mxu0 0
      %323 = vmatprep.subr.bf16.mxu0 0
      %324 = vmatpush1.bf16.msra.mxu0 0
      %325 = vmatprep.subr.bf16.mxu0 0
      %326 = vmatpush1.bf16.msra.mxu0 0
      %327 = vmatprep.subr.bf16.mxu0 0
      %328 = vmatpush1.bf16.msra.mxu0 0
      %329 = vmatprep.subr.bf16.mxu0 0
      %330 = vmatpush1.bf16.msra.mxu0 0
      %331 = vmatprep.subr.bf16.mxu0 0
      %332 = vmatpush1.bf16.msra.mxu0 0
      %333 = vmatprep.subr.bf16.mxu0 0
      %334 = vmatpush1.bf16.msra.mxu0 %v315
      %335 = vmatprep.subr.bf16.mxu0 0
      %336 = vmatpush1.bf16.msra.mxu0 %v314
      %337 = vmatprep.subr.bf16.mxu0 0
      %338 = vmatpush2.bf16.msra.mxu0 0
      %339 = vmatprep.subr.bf16.mxu0 0
      %340 = vmatpush2.bf16.msra.mxu0 0
      %341 = vmatprep.subr.bf16.mxu0 0
      %342 = vmatpush2.bf16.msra.mxu0 0
      %343 = vmatprep.subr.bf16.mxu0 0
      %344 = vmatpush2.bf16.msra.mxu0 0
      %345 = vmatprep.subr.bf16.mxu0 0
      %346 = vmatpush2.bf16.msra.mxu0 0
      %347 = vmatprep.subr.bf16.mxu0 0
      %348 = vmatpush2.bf16.msra.mxu0 0
      %349 = vmatprep.subr.bf16.mxu0 0
      %350 = vmatpush2.bf16.msra.mxu0 0
      %351 = vmatprep.subr.bf16.mxu0 0
      %352 = vmatpush2.bf16.msra.mxu0 0
      %353 = vmatprep.mubr.bf16.mxu0 0
      %354 = vmatmul.mubr.bf16.gmra.mxu0 %v319
      %v355 = vpop.f32.mrf.mxu0
      %v356 = vadd.f32 %v304, %v355
      %v357 = vpop.f32.mrf.mxu0
      %v358 = vpop.f32.mrf.mxu0
      %v359 = vpop.f32.mrf.mxu0
      %360 = vdwg.mxu0
      %vm361 = vcmask 257024
      %362 = vst.msk [vmem:[%s219] sm:$0xf] %vm361, %v356
      %p363 = scmp.lt.s32.totalorder %s16, 1
      %s364 = scalar_select %p363, %s16, 1
      %s365 = smul.addr %s364, 4
      %s366 = scalar_lea.vmem %s5, %s365
      // Predicated region
      $region41: #{fwd.5} parent=39 // pred_check
        %p367 = pneg %p144
      $region42: #{fwd.5} parent=39 // pred_check_branch
        %369 = sbr.rel (%p367) target = $region44
      $region43: #{fwd.5} parent=39 // pred_region
        _
      $region44: #{fwd.5} parent=39 // pred_fallthru
        _
    $region40: #{fwd.5} parent=5 // pred_fallthru
      _
    %p370 = scmp.le.s32.totalorder 2, %s11
    // Predicated region
    $region45: #{fwd.5} parent=5 // pred_check
      %p371 = pneg %p370
    $region46: #{fwd.5} parent=5 // pred_check_branch
      %373 = sbr.rel (%p371) target = $region48
    $region47: #{fwd.5} parent=5 // pred_region
      %s374 = ssub.s32 %s11, 2
      // Predicated region
      $region49: #{fwd.5} parent=47 // pred_check
        %p375 = pneg %p150
      $region50: #{fwd.5} parent=47 // pred_check_branch
        %377 = sbr.rel (%p375) target = $region52
      $region51: #{fwd.5} parent=47 // pred_region
        %p378 = scmp.lt.s32.totalorder %s17, 1
        %s379 = scalar_select %p378, %s17, 1
        %s380 = smul.addr %s379, 4
        %s381 = scalar_lea.vmem %s5, %s380
      $region52: #{fwd.5} parent=47 // pred_fallthru
        _
    $region48: #{fwd.5} parent=5 // pred_fallthru
      _
  $region6: #{fwd.5} parent=0 // loop_footer
    %s15 = sadd.s32 1, %s11
  $region7: #{fwd.5} parent=0 // loop_footer_branch
    %10 = sbr.rel target = $region3
  $region8: #{fwd.5} parent=0 // loop_exit
    _

// kernel: fwd.3
$region0: #{fwd.3}
  #allocation0 [shape = 'u32[]', space=smem, size = 0x4, offset = 0x4, fixed_abs, tag = 'smem constant byte address 0x4 - core index']
  #allocation1 [shape = 'u32[144,128]{1,0:T(1,128)}', space=vmem, size = 0x12000, scoped, tag = 'internal scratch']
  %s0 = inlined_call_operand.vmem [shape: bf16[2,4,192], index: 0, kind: input, shape index: {}]
  %s1 = inlined_call_operand.vmem [shape: bf16[192,32], index: 1, kind: input, shape index: {}]
  %s2 = inlined_call_operand.vmem [shape: f32[1,32], index: 2, kind: input, shape index: {}]
  %s3 = inlined_call_operand.vmem [shape: f32[5,32], index: 3, kind: input, shape index: {}]
  %s4 = inlined_call_operand.vmem [shape: f32[1,32], index: 4, kind: input, shape index: {}]
  %s5 = inlined_call_operand.vmem [shape: f32[1,32], index: 5, kind: input, shape index: {}]
  %s6 = inlined_call_operand.vmem [shape: f32[2,5,32], index: 6, kind: output, shape index: {}]
  %s7 = sld [smem:[#allocation0]]
  $region57: #{fwd.3} parent=0
    _
  %s9 = ssub.s32 1, %s7
  %s10 = scalar_select 0, %s9, %s7
  loop: start=0, step=1, limit=4
  $region2: #{fwd.3} parent=0 // loop_pre_header
    _
  $region3: #{fwd.3} parent=0 // loop_header
    %s12 = sphi 0, %s16
    %p13 = scmp.ge.s32.totalorder %s12, 4
    %s22 = sphi 0, %s24
    %s25 = sphi 0, %s22
    %s26 = sphi 0, %s25
    %s42 = sphi 0, %s26
    %s46 = sphi 0, %s46
    %s48 = sphi 0, %s46
    %s49 = sphi 0, %s48
    %s63 = sphi 0, %s49
    %s67 = sphi 0, %s67
    %s69 = sphi 0, %s67
    %s70 = sphi 0, %s69
    %s84 = sphi 0, %s70
    %s88 = sphi 0, %s88
    %s90 = sphi 0, %s88
    %s91 = sphi 0, %s90
    %s105 = sphi 0, %s91
    %s109 = sphi 0, %s109
    %s111 = sphi 0, %s109
    %s112 = sphi 0, %s111
    %s126 = sphi 0, %s112
    %s130 = sphi 0, %s130
    %s132 = sphi 0, %s130
    %s133 = sphi 0, %s132
    %s147 = sphi 0, %s133
    %s153 = sphi 0, %s155
    %s156 = sphi 0, %s153
    %s157 = sphi 0, %s156
    %s173 = sphi 0, %s157
  $region4: #{fwd.3} parent=0 // loop_header_branch
    %15 = sbr.rel (%p13) target = $region8
  $region5: #{fwd.3} parent=0 // loop_body
    %s17 = ssub.s32 %s12, 1
    %s18 = ssub.s32 %s12, 2
    %s19 = sadd.s32 %s12, 1
    %s20 = ssub.s32 %s12, %s19
    %p21 = scmp.eq.s32.totalorder %s20, 0
    %s23 = sadd.s32 %s22, 1
    %s24 = scalar_select %p21, %s22, %s23
    %p27 = pneg %p21
    %p28 = scmp.eq.s32.totalorder %s12, 1
    %p29 = por %p27, %p28
    %p30 = scmp.ne.s32.totalorder %s22, %s25
    %p31 = scmp.eq.s32.totalorder %s12, 0
    %p32 = por %p30, %p31
    %p33 = scmp.ne.s32.totalorder %s22, %s25
    %p34 = scmp.eq.s32.totalorder %s17, 1
    %p35 = por %p33, %p34
    %p36 = scmp.ne.s32.totalorder %s25, %s26
    %p37 = scmp.eq.s32.totalorder %s17, 0
    %p38 = por %p36, %p37
    %p39 = scmp.ne.s32.totalorder %s25, %s26
    %p40 = scmp.eq.s32.totalorder %s18, 1
    %p41 = por %p39, %p40
    %p43 = scmp.ne.s32.totalorder %s26, %s42
    %p44 = scmp.eq.s32.totalorder %s18, 0
    %p45 = por %p43, %p44
    %s47 = sadd.s32 %s46, 1
    %p50 = scmp.eq.s32.totalorder %s12, 1
    %p51 = scmp.ne.s32.totalorder %s46, %s48
    %p52 = scmp.eq.s32.totalorder %s12, 0
    %p53 = por %p51, %p52
    %p54 = scmp.ne.s32.totalorder %s46, %s48
    %p55 = scmp.eq.s32.totalorder %s17, 1
    %p56 = por %p54, %p55
    %p57 = scmp.ne.s32.totalorder %s48, %s49
    %p58 = scmp.eq.s32.totalorder %s17, 0
    %p59 = por %p57, %p58
    %p60 = scmp.ne.s32.totalorder %s48, %s49
    %p61 = scmp.eq.s32.totalorder %s18, 1
    %p62 = por %p60, %p61
    %p64 = scmp.ne.s32.totalorder %s49, %s63
    %p65 = scmp.eq.s32.totalorder %s18, 0
    %p66 = por %p64, %p65
    %s68 = sadd.s32 %s67, 1
    %p71 = scmp.eq.s32.totalorder %s12, 1
    %p72 = scmp.ne.s32.totalorder %s67, %s69
    %p73 = scmp.eq.s32.totalorder %s12, 0
    %p74 = por %p72, %p73
    %p75 = scmp.ne.s32.totalorder %s67, %s69
    %p76 = scmp.eq.s32.totalorder %s17, 1
    %p77 = por %p75, %p76
    %p78 = scmp.ne.s32.totalorder %s69, %s70
    %p79 = scmp.eq.s32.totalorder %s17, 0
    %p80 = por %p78, %p79
    %p81 = scmp.ne.s32.totalorder %s69, %s70
    %p82 = scmp.eq.s32.totalorder %s18, 1
    %p83 = por %p81, %p82
    %p85 = scmp.ne.s32.totalorder %s70, %s84
    %p86 = scmp.eq.s32.totalorder %s18, 0
    %p87 = por %p85, %p86
    %s89 = sadd.s32 %s88, 1
    %p92 = scmp.eq.s32.totalorder %s12, 1
    %p93 = scmp.ne.s32.totalorder %s88, %s90
    %p94 = scmp.eq.s32.totalorder %s12, 0
    %p95 = por %p93, %p94
    %p96 = scmp.ne.s32.totalorder %s88, %s90
    %p97 = scmp.eq.s32.totalorder %s17, 1
    %p98 = por %p96, %p97
    %p99 = scmp.ne.s32.totalorder %s90, %s91
    %p100 = scmp.eq.s32.totalorder %s17, 0
    %p101 = por %p99, %p100
    %p102 = scmp.ne.s32.totalorder %s90, %s91
    %p103 = scmp.eq.s32.totalorder %s18, 1
    %p104 = por %p102, %p103
    %p106 = scmp.ne.s32.totalorder %s91, %s105
    %p107 = scmp.eq.s32.totalorder %s18, 0
    %p108 = por %p106, %p107
    %s110 = sadd.s32 %s109, 1
    %p113 = scmp.eq.s32.totalorder %s12, 1
    %p114 = scmp.ne.s32.totalorder %s109, %s111
    %p115 = scmp.eq.s32.totalorder %s12, 0
    %p116 = por %p114, %p115
    %p117 = scmp.ne.s32.totalorder %s109, %s111
    %p118 = scmp.eq.s32.totalorder %s17, 1
    %p119 = por %p117, %p118
    %p120 = scmp.ne.s32.totalorder %s111, %s112
    %p121 = scmp.eq.s32.totalorder %s17, 0
    %p122 = por %p120, %p121
    %p123 = scmp.ne.s32.totalorder %s111, %s112
    %p124 = scmp.eq.s32.totalorder %s18, 1
    %p125 = por %p123, %p124
    %p127 = scmp.ne.s32.totalorder %s112, %s126
    %p128 = scmp.eq.s32.totalorder %s18, 0
    %p129 = por %p127, %p128
    %s131 = sadd.s32 %s130, 1
    %p134 = scmp.eq.s32.totalorder %s12, 1
    %p135 = scmp.ne.s32.totalorder %s130, %s132
    %p136 = scmp.eq.s32.totalorder %s12, 0
    %p137 = por %p135, %p136
    %p138 = scmp.ne.s32.totalorder %s130, %s132
    %p139 = scmp.eq.s32.totalorder %s17, 1
    %p140 = por %p138, %p139
    %p141 = scmp.ne.s32.totalorder %s132, %s133
    %p142 = scmp.eq.s32.totalorder %s17, 0
    %p143 = por %p141, %p142
    %p144 = scmp.ne.s32.totalorder %s132, %s133
    %p145 = scmp.eq.s32.totalorder %s18, 1
    %p146 = por %p144, %p145
    %p148 = scmp.ne.s32.totalorder %s133, %s147
    %p149 = scmp.eq.s32.totalorder %s18, 0
    %p150 = por %p148, %p149
    %s151 = ssub.s32 %s12, %s19
    %p152 = scmp.eq.s32.totalorder %s151, 0
    %s154 = sadd.s32 %s153, 1
    %s155 = scalar_select %p152, %s153, %s154
    %p158 = pneg %p152
    %p159 = scmp.eq.s32.totalorder %s12, 1
    %p160 = por %p158, %p159
    %p161 = scmp.ne.s32.totalorder %s153, %s156
    %p162 = scmp.eq.s32.totalorder %s12, 0
    %p163 = por %p161, %p162
    %p164 = scmp.ne.s32.totalorder %s153, %s156
    %p165 = scmp.eq.s32.totalorder %s17, 1
    %p166 = por %p164, %p165
    %p167 = scmp.ne.s32.totalorder %s156, %s157
    %p168 = scmp.eq.s32.totalorder %s17, 0
    %p169 = por %p167, %p168
    %p170 = scmp.ne.s32.totalorder %s156, %s157
    %p171 = scmp.eq.s32.totalorder %s18, 1
    %p172 = por %p170, %p171
    %p174 = scmp.ne.s32.totalorder %s157, %s173
    %p175 = scmp.eq.s32.totalorder %s18, 0
    %p176 = por %p174, %p175
    %p177 = scmp.le.s32.totalorder 1, %s12
    %p178 = scmp.lt.s32.totalorder %s12, 3
    %p179 = pnand %p177, %p178
    %p180 = pneg %p179
    // Predicated region
    $region9: #{fwd.3} parent=5 // pred_check
      _
    $region10: #{fwd.3} parent=5 // pred_check_branch
      %182 = sbr.rel (%p179) target = $region12
    $region11: #{fwd.3} parent=5 // pred_region
      %s183 = ssub.s32 %s12, 1
      // Predicated region
      $region13: #{fwd.3} parent=11 // pred_check
        %p184 = pneg %p59
      $region14: #{fwd.3} parent=11 // pred_check_branch
        %186 = sbr.rel (%p184) target = $region16
      $region15: #{fwd.3} parent=11 // pred_region
        _
      $region16: #{fwd.3} parent=11 // pred_fallthru
        _
      // Predicated region
      $region17: #{fwd.3} parent=11 // pred_check
        %p187 = pneg %p80
      $region18: #{fwd.3} parent=11 // pred_check_branch
        %189 = sbr.rel (%p187) target = $region20
      $region19: #{fwd.3} parent=11 // pred_region
        _
      $region20: #{fwd.3} parent=11 // pred_fallthru
        _
      // Predicated region
      $region21: #{fwd.3} parent=11 // pred_check
        %p190 = pneg %p101
      $region22: #{fwd.3} parent=11 // pred_check_branch
        %192 = sbr.rel (%p190) target = $region24
      $region23: #{fwd.3} parent=11 // pred_region
        _
      $region24: #{fwd.3} parent=11 // pred_fallthru
        _
      // Predicated region
      $region25: #{fwd.3} parent=11 // pred_check
        %p193 = pneg %p122
      $region26: #{fwd.3} parent=11 // pred_check_branch
        %195 = sbr.rel (%p193) target = $region28
      $region27: #{fwd.3} parent=11 // pred_region
        _
      $region28: #{fwd.3} parent=11 // pred_fallthru
        _
      // Predicated region
      $region29: #{fwd.3} parent=11 // pred_check
        %p196 = pneg %p143
      $region30: #{fwd.3} parent=11 // pred_check_branch
        %198 = sbr.rel (%p196) target = $region32
      $region31: #{fwd.3} parent=11 // pred_region
        _
      $region32: #{fwd.3} parent=11 // pred_fallthru
        _
    $region12: #{fwd.3} parent=5 // pred_fallthru
      _
    %p199 = scmp.lt.s32.totalorder %s12, 2
    // Predicated region
    $region33: #{fwd.3} parent=5 // pred_check
      %p200 = pneg %p199
    $region34: #{fwd.3} parent=5 // pred_check_branch
      %202 = sbr.rel (%p200) target = $region36
    $region35: #{fwd.3} parent=5 // pred_region
      // Predicated region
      $region37: #{fwd.3} parent=35 // pred_check
        %p203 = pneg %p32
      $region38: #{fwd.3} parent=35 // pred_check_branch
        %205 = sbr.rel (%p203) target = $region40
      $region39: #{fwd.3} parent=35 // pred_region
        %p206 = scmp.lt.s32.totalorder %s12, 1
        %s207 = scalar_select %p206, %s12, 1
        %s208 = smul.addr %s207, 2
        %s209 = smul.addr %s208, 2
        %s210 = scalar_lea.vmem %s0, %s209
      $region40: #{fwd.3} parent=35 // pred_fallthru
        _
    $region36: #{fwd.3} parent=5 // pred_fallthru
      _
    %p211 = scmp.le.s32.totalorder 1, %s12
    %p212 = scmp.lt.s32.totalorder %s12, 3
    %p213 = pnand %p211, %p212
    %p214 = pneg %p213
    // Predicated region
    $region41: #{fwd.3} parent=5 // pred_check
      _
    $region42: #{fwd.3} parent=5 // pred_check_branch
      %216 = sbr.rel (%p213) target = $region44
    $region43: #{fwd.3} parent=5 // pred_region
      %s217 = ssub.s32 %s12, 1
      %p218 = scmp.lt.s32.totalorder %s17, 1
      %s219 = scalar_select %p218, %s17, 1
      %s220 = smul.addr %s219, 2
      %s221 = smul.addr %s220, 2
      %s222 = scalar_lea.vmem %s0, %s221
      %p223 = pneg %p38
      %p224 = pneg %p35
      %p225 = pneg %p59
      %p226 = pneg %p56
      %p227 = pneg %p80
      %p228 = pneg %p77
      %p229 = pneg %p101
      %p230 = pneg %p98
      %p231 = pneg %p122
      %p232 = pneg %p119
      %p233 = pneg %p143
      %p234 = pneg %p140
      %p235 = pneg %p169
      %p236 = pneg %p166
      %p237 = scmp.lt.s32.totalorder %s17, 1
      %s238 = scalar_select %p237, %s17, 1
      %s239 = smul.addr %s238, 8
      %s240 = scalar_lea.vmem %s6, %s239
      %p241 = scmp.lt.s32.totalorder %s17, 1
      %s242 = scalar_select %p241, %s17, 1
      %s243 = smul.addr %s242, 2
      %s244 = smul.addr %s243, 2
      %s245 = scalar_lea.vmem %s0, %s244
      %p246 = scmp.lt.s32.totalorder %s17, 1
      %s247 = scalar_select %p246, %s17, 1
      %s248 = smul.addr %s247, 8
      %s249 = scalar_lea.vmem %s6, %s248
      %v251 = vld [vmem:[%s245] sm:$0xf]
      %v252 = vld [vmem:[%s1] sm:$0xf]
      %v253 = vld [vmem:[%s1 + $0x4] sm:$0xf]
      %v254 = vld [vmem:[%s1 + $0x8] sm:$0xf]
      %v255 = vld [vmem:[%s1 + $0xc] sm:$0xf]
      %v256 = vld [vmem:[%s1 + $0x10] sm:$0xf]
      %v257 = vld [vmem:[%s1 + $0x14] sm:$0xf]
      %v258 = vld [vmem:[%s1 + $0x18] sm:$0xf]
      %v259 = vld [vmem:[%s1 + $0x1c] sm:$0xf]
      %v260 = vld [vmem:[%s1 + $0x20] sm:$0xf]
      %v261 = vld [vmem:[%s1 + $0x24] sm:$0xf]
      %v262 = vld [vmem:[%s1 + $0x28] sm:$0xf]
      %v263 = vld [vmem:[%s1 + $0x2c] sm:$0xf]
      %v264 = vld [vmem:[%s1 + $0x30] sm:$0xf]
      %v265 = vld [vmem:[%s1 + $0x34] sm:$0xf]
      %v266 = vld [vmem:[%s1 + $0x38] sm:$0xf]
      %v267 = vld [vmem:[%s1 + $0x3c] sm:$0xf]
      %v268 = vld [vmem:[%s1 + $0x40] sm:$0xf]
      %v269 = vld [vmem:[%s1 + $0x44] sm:$0xf]
      %v270 = vld [vmem:[%s1 + $0x48] sm:$0xf]
      %v271 = vld [vmem:[%s1 + $0x4c] sm:$0xf]
      %v272 = vld [vmem:[%s1 + $0x50] sm:$0xf]
      %v273 = vld [vmem:[%s1 + $0x54] sm:$0xf]
      %v274 = vld [vmem:[%s1 + $0x58] sm:$0xf]
      %v275 = vld [vmem:[%s1 + $0x5c] sm:$0xf]
      %v278 = vunpack.c.l.s4 1983009808
      %v279 = vunpack.c.0.s8 %v278
      %v280 = vlaneseq
      %v281 = vshrl.u32 %v280, 7
      %v282 = vsub.s32 %v279, %v281
      %v283 = vrot.slane %v251, %v282
      %v284 = vcombine.high %v283, %v283
      %v310 = vunpack.c.l.b16 %v252
      %v311 = vunpack.c.l.b16 %v253
      %v312 = vunpack.c.l.b16 %v254
      %v313 = vunpack.c.l.b16 %v255
      %v314 = vunpack.c.l.b16 %v256
      %v315 = vunpack.c.l.b16 %v257
      %v316 = vunpack.c.l.b16 %v258
      %v317 = vunpack.c.l.b16 %v259
      %v318 = vunpack.c.l.b16 %v260
      %v319 = vunpack.c.l.b16 %v261
      %v320 = vunpack.c.l.b16 %v262
      %v321 = vunpack.c.l.b16 %v263
      %v322 = vunpack.c.l.b16 %v264
      %v323 = vunpack.c.l.b16 %v265
      %v324 = vunpack.c.l.b16 %v266
      %v325 = vunpack.c.l.b16 %v267
      %v326 = vunpack.c.l.b16 %v268
      %v327 = vunpack.c.l.b16 %v269
      %v328 = vunpack.c.l.b16 %v270
      %v329 = vunpack.c.l.b16 %v271
      %v330 = vunpack.c.l.b16 %v272
      %v331 = vunpack.c.l.b16 %v273
      %v332 = vunpack.c.l.b16 %v274
      %v333 = vunpack.c.l.b16 %v275
      %v334 = vpack.c.b16 %v311, %v310
      %v335 = vpack.c.b16 %v313, %v312
      %v336 = vpack.c.b16 %v315, %v314
      %v337 = vpack.c.b16 %v317, %v316
      %v338 = vpack.c.b16 %v319, %v318
      %v339 = vpack.c.b16 %v321, %v320
      %v340 = vpack.c.b16 %v323, %v322
      %v341 = vpack.c.b16 %v325, %v324
      %v342 = vpack.c.b16 %v327, %v326
      %v343 = vpack.c.b16 %v329, %v328
      %v344 = vpack.c.b16 %v331, %v330
      %v345 = vpack.c.b16 %v333, %v332
      %vm358 = vcmask 523264
      %v360 = vsel %vm358, %v284, 0
      %362 = vmatprep.subr.bf16.mxu0 0
      %363 = vmatpush1.bf16.msra.mxu0 %v341
      %364 = vmatprep.subr.bf16.mxu0 0
      %365 = vmatpush1.bf16.msra.mxu0 %v340
      %366 = vmatprep.subr.bf16.mxu0 0
      %367 = vmatpush1.bf16.msra.mxu0 %v339
      %368 = vmatprep.subr.bf16.mxu0 0
      %369 = vmatpush1.bf16.msra.mxu0 %v338
      %370 = vmatprep.subr.bf16.mxu0 0
      %371 = vmatpush1.bf16.msra.mxu0 %v337
      %372 = vmatprep.subr.bf16.mxu0 0
      %373 = vmatpush1.bf16.msra.mxu0 %v336
      %374 = vmatprep.subr.bf16.mxu0 0
      %375 = vmatpush1.bf16.msra.mxu0 %v335
      %376 = vmatprep.subr.bf16.mxu0 0
      %377 = vmatpush1.bf16.msra.mxu0 %v334
      %378 = vmatprep.subr.bf16.mxu0 0
      %379 = vmatpush2.bf16.msra.mxu0 0
      %380 = vmatprep.subr.bf16.mxu0 0
      %381 = vmatpush2.bf16.msra.mxu0 0
      %382 = vmatprep.subr.bf16.mxu0 0
      %383 = vmatpush2.bf16.msra.mxu0 0
      %384 = vmatprep.subr.bf16.mxu0 0
      %385 = vmatpush2.bf16.msra.mxu0 0
      %386 = vmatprep.subr.bf16.mxu0 0
      %387 = vmatpush2.bf16.msra.mxu0 %v345
      %388 = vmatprep.subr.bf16.mxu0 0
      %389 = vmatpush2.bf16.msra.mxu0 %v344
      %390 = vmatprep.subr.bf16.mxu0 0
      %391 = vmatpush2.bf16.msra.mxu0 %v343
      %392 = vmatprep.subr.bf16.mxu0 0
      %393 = vmatpush2.bf16.msra.mxu0 %v342
      %394 = vmatprep.mubr.bf16.mxu0 %v360
      %395 = vmatmul.mubr.bf16.gmra.mxu0 %v283
      %v396 = vpop.f32.mrf.mxu0
      %v397 = vadd.f32 0.0, %v396
      %v398 = vpop.f32.mrf.mxu0
      %v399 = vpop.f32.mrf.mxu0
      %v400 = vpop.f32.mrf.mxu0
      %401 = vdwg.mxu0
      %v402 = vld [vmem:[%s2] sm:$0x1]
      %v404 = vrot.slane %v397, 7
      %vm406 = vcmask 1040384
      %v407 = vsel %vm406, %v402, %v404
      %v408 = vld [vmem:[%s3] sm:$0x1f]
      %v409 = vadd.f32 %v407, %v408
      %v410 = vld [vmem:[%s4] sm:$0x1]
      %v411 = vld [vmem:[%s5] sm:$0x1]
      %vm412 = vcmask 258048
      %v413 = vsel %vm412, %v409, 0.0
      %414 = vadd.xlane.f32.xlu0 %v413
      %v415 = vpop.xlane.xlu0 %414
      %v416 = vrcp.pop 32.0
      %v417 = vmul.f32 %v415, %v416
      %v418 = vsub.f32 %v409, %v417
      %v419 = vmul.f32 %v418, %v418
      %v420 = vsel %vm412, %v419, 0.0
      %421 = vadd.xlane.f32.xlu0 %v420
      %v422 = vpop.xlane.xlu0 %421
      %v423 = vmul.f32 %v422, %v416
      %v424 = vadd.f32 %v423, 1e-05
      %v425 = vrsqrt.pop %v424
      %v426 = vmul.f32 %v418, %v425
      %v428 = vlaneseq
      %v429 = vshrl.u32 %v428, 7
      %v430 = vsub.s32 0, %v429
      %v431 = vrot.slane %v410, %v430
      %v433 = vmul.f32 %v426, %v431
      %v435 = vlaneseq
      %v436 = vshrl.u32 %v435, 7
      %v437 = vsub.s32 0, %v436
      %v438 = vrot.slane %v411, %v437
      %v440 = vadd.f32 %v433, %v438
      %441 = vst.msk [vmem:[%s249] sm:$0x1f] %vm412, %v440
      %p442 = scmp.lt.s32.totalorder %s17, 1
      %s443 = scalar_select %p442, %s17, 1
      %s444 = smul.addr %s443, 8
      %s445 = scalar_lea.vmem %s6, %s444
      // Predicated region
      $region45: #{fwd.3} parent=43 // pred_check
        %p446 = pneg %p166
      $region46: #{fwd.3} parent=43 // pred_check_branch
        %448 = sbr.rel (%p446) target = $region48
      $region47: #{fwd.3} parent=43 // pred_region
        _
      $region48: #{fwd.3} parent=43 // pred_fallthru
        _
    $region44: #{fwd.3} parent=5 // pred_fallthru
      _
    %p449 = scmp.le.s32.totalorder 2, %s12
    // Predicated region
    $region49: #{fwd.3} parent=5 // pred_check
      %p450 = pneg %p449
    $region50: #{fwd.3} parent=5 // pred_check_branch
      %452 = sbr.rel (%p450) target = $region52
    $region51: #{fwd.3} parent=5 // pred_region
      %s453 = ssub.s32 %s12, 2
      // Predicated region
      $region53: #{fwd.3} parent=51 // pred_check
        %p454 = pneg %p172
      $region54: #{fwd.3} parent=51 // pred_check_branch
        %456 = sbr.rel (%p454) target = $region56
      $region55: #{fwd.3} parent=51 // pred_region
        %p457 = scmp.lt.s32.totalorder %s18, 1
        %s458 = scalar_select %p457, %s18, 1
        %s459 = smul.addr %s458, 8
        %s460 = scalar_lea.vmem %s6, %s459
      $region56: #{fwd.3} parent=51 // pred_fallthru
        _
    $region52: #{fwd.3} parent=5 // pred_fallthru
      _
  $region6: #{fwd.3} parent=0 // loop_footer
    %s16 = sadd.s32 1, %s12
  $region7: #{fwd.3} parent=0 // loop_footer_branch
    %11 = sbr.rel target = $region3
  $region8: #{fwd.3} parent=0 // loop_exit
    _

// kernel: fwd.4
$region0: #{fwd.4}
  #allocation0 [shape = 'u32[]', space=smem, size = 0x4, offset = 0x4, fixed_abs, tag = 'smem constant byte address 0x4 - core index']
  #allocation1 [shape = 'u32[144,128]{1,0:T(1,128)}', space=vmem, size = 0x12000, scoped, tag = 'internal scratch']
  #allocation2 [shape = 'f32[5,32]{1,0:T(8,128)}', space=vmem, size = 0x1000, scoped, tag = 'scratch operand']
  #allocation3 [shape = 'bf16[5,32]{1,0:T(8,128)(2,1)}', space=vmem, size = 0x800, scoped, tag = 'scratch operand']
  %s0 = inlined_call_operand.vmem [shape: f32[2,5,32], index: 0, kind: input, shape index: {}]
  %s1 = inlined_call_operand.vmem [shape: f32[1,1,32], index: 1, kind: input, shape index: {}]
  %s2 = inlined_call_operand.vmem [shape: f32[1,1,32], index: 2, kind: input, shape index: {}]
  %s3 = inlined_call_operand.vmem [shape: bf16[1,32,96], index: 3, kind: input, shape index: {}]
  %s4 = inlined_call_operand.vmem [shape: f32[1,1,96], index: 4, kind: input, shape index: {}]
  %s5 = inlined_call_operand.vmem [shape: bf16[1,32,32], index: 5, kind: input, shape index: {}]
  %s6 = inlined_call_operand.vmem [shape: f32[1,1,32], index: 6, kind: input, shape index: {}]
  %s7 = inlined_call_operand.vmem [shape: f32[1,1,32], index: 7, kind: input, shape index: {}]
  %s8 = inlined_call_operand.vmem [shape: f32[1,1,32], index: 8, kind: input, shape index: {}]
  %s9 = inlined_call_operand.vmem [shape: bf16[1,32,64], index: 9, kind: input, shape index: {}]
  %s10 = inlined_call_operand.vmem [shape: f32[1,1,64], index: 10, kind: input, shape index: {}]
  %s11 = inlined_call_operand.vmem [shape: bf16[1,64,32], index: 11, kind: input, shape index: {}]
  %s12 = inlined_call_operand.vmem [shape: f32[1,1,32], index: 12, kind: input, shape index: {}]
  %s13 = inlined_call_operand.vmem [shape: f32[2,5,32], index: 13, kind: output, shape index: {}]
  %s14 = sld [smem:[#allocation0]]
  $region93: #{fwd.4} parent=0
    _
  %s16 = ssub.s32 1, %s14
  %s17 = scalar_select 0, %s16, %s14
  loop: start=0, step=1, limit=4
  $region2: #{fwd.4} parent=0 // loop_pre_header
    _
  $region3: #{fwd.4} parent=0 // loop_header
    %s19 = sphi 0, %s23
    %p20 = scmp.ge.s32.totalorder %s19, 4
    %s26 = sphi 0, %s38
    %s27 = sphi 0, %s34
    %s28 = sphi 0, %s26
    %s29 = sphi 0, %s27
    %s30 = sphi 0, %s28
    %s31 = sphi 0, %s29
    %s41 = sphi 0, %s43
    %s44 = sphi 0, %s41
    %s45 = sphi 0, %s44
    %s61 = sphi 0, %s45
    %s67 = sphi 0, %s69
    %s70 = sphi 0, %s67
    %s71 = sphi 0, %s70
    %s87 = sphi 0, %s71
    %s93 = sphi 0, %s95
    %s96 = sphi 0, %s93
    %s97 = sphi 0, %s96
    %s113 = sphi 0, %s97
    %s119 = sphi 0, %s121
    %s122 = sphi 0, %s119
    %s123 = sphi 0, %s122
    %s139 = sphi 0, %s123
    %s145 = sphi 0, %s147
    %s148 = sphi 0, %s145
    %s149 = sphi 0, %s148
    %s165 = sphi 0, %s149
    %s171 = sphi 0, %s173
    %s174 = sphi 0, %s171
    %s175 = sphi 0, %s174
    %s191 = sphi 0, %s175
    %s197 = sphi 0, %s199
    %s200 = sphi 0, %s197
    %s201 = sphi 0, %s200
    %s217 = sphi 0, %s201
    %s223 = sphi 0, %s225
    %s226 = sphi 0, %s223
    %s227 = sphi 0, %s226
    %s243 = sphi 0, %s227
    %s249 = sphi 0, %s251
    %s252 = sphi 0, %s249
    %s253 = sphi 0, %s252
    %s269 = sphi 0, %s253
    %s275 = sphi 0, %s277
    %s278 = sphi 0, %s275
    %s279 = sphi 0, %s278
    %s295 = sphi 0, %s279
    %s301 = sphi 0, %s303
    %s304 = sphi 0, %s301
    %s305 = sphi 0, %s304
    %s321 = sphi 0, %s305
    %s327 = sphi 0, %s329
    %s330 = sphi 0, %s327
    %s331 = sphi 0, %s330
    %s347 = sphi 0, %s331
    %s353 = sphi 0, %s355
    %s356 = sphi 0, %s353
    %s357 = sphi 0, %s356
    %s373 = sphi 0, %s357
    %s379 = sphi 0, %s381
    %s382 = sphi 0, %s379
    %s383 = sphi 0, %s382
    %s399 = sphi 0, %s383
  $region4: #{fwd.4} parent=0 // loop_header_branch
    %22 = sbr.rel (%p20) target = $region8
  $region5: #{fwd.4} parent=0 // loop_body
    %s24 = ssub.s32 %s19, 1
    %s25 = ssub.s32 %s19, 2
    %s32 = sadd.s32 1, %s27
    %p33 = scmp.ge.s32.totalorder %s32, 1
    %s34 = scalar_select %p33, 0, %s32
    %s35 = sadd.s32 1, %s26
    %s36 = scalar_select %p33, %s35, %s26
    %p37 = scmp.ge.s32.totalorder %s36, 2
    %s38 = scalar_select %p37, 0, %s36
    %s39 = ssub.s32 %s26, %s38
    %p40 = scmp.eq.s32.totalorder %s39, 0
    %s42 = sadd.s32 %s41, 1
    %s43 = scalar_select %p40, %s41, %s42
    %p46 = pneg %p40
    %p47 = scmp.eq.s32.totalorder %s19, 1
    %p48 = por %p46, %p47
    %p49 = scmp.ne.s32.totalorder %s41, %s44
    %p50 = scmp.eq.s32.totalorder %s19, 0
    %p51 = por %p49, %p50
    %p52 = scmp.ne.s32.totalorder %s41, %s44
    %p53 = scmp.eq.s32.totalorder %s24, 1
    %p54 = por %p52, %p53
    %p55 = scmp.ne.s32.totalorder %s44, %s45
    %p56 = scmp.eq.s32.totalorder %s24, 0
    %p57 = por %p55, %p56
    %p58 = scmp.ne.s32.totalorder %s44, %s45
    %p59 = scmp.eq.s32.totalorder %s25, 1
    %p60 = por %p58, %p59
    %p62 = scmp.ne.s32.totalorder %s45, %s61
    %p63 = scmp.eq.s32.totalorder %s25, 0
    %p64 = por %p62, %p63
    %s65 = ssub.s32 %s27, %s34
    %p66 = scmp.eq.s32.totalorder %s65, 0
    %s68 = sadd.s32 %s67, 1
    %s69 = scalar_select %p66, %s67, %s68
    %p72 = pneg %p66
    %p73 = scmp.eq.s32.totalorder %s19, 1
    %p74 = por %p72, %p73
    %p75 = scmp.ne.s32.totalorder %s67, %s70
    %p76 = scmp.eq.s32.totalorder %s19, 0
    %p77 = por %p75, %p76
    %p78 = scmp.ne.s32.totalorder %s67, %s70
    %p79 = scmp.eq.s32.totalorder %s24, 1
    %p80 = por %p78, %p79
    %p81 = scmp.ne.s32.totalorder %s70, %s71
    %p82 = scmp.eq.s32.totalorder %s24, 0
    %p83 = por %p81, %p82
    %p84 = scmp.ne.s32.totalorder %s70, %s71
    %p85 = scmp.eq.s32.totalorder %s25, 1
    %p86 = por %p84, %p85
    %p88 = scmp.ne.s32.totalorder %s71, %s87
    %p89 = scmp.eq.s32.totalorder %s25, 0
    %p90 = por %p88, %p89
    %s91 = ssub.s32 %s27, %s34
    %p92 = scmp.eq.s32.totalorder %s91, 0
    %s94 = sadd.s32 %s93, 1
    %s95 = scalar_select %p92, %s93, %s94
    %p98 = pneg %p92
    %p99 = scmp.eq.s32.totalorder %s19, 1
    %p100 = por %p98, %p99
    %p101 = scmp.ne.s32.totalorder %s93, %s96
    %p102 = scmp.eq.s32.totalorder %s19, 0
    %p103 = por %p101, %p102
    %p104 = scmp.ne.s32.totalorder %s93, %s96
    %p105 = scmp.eq.s32.totalorder %s24, 1
    %p106 = por %p104, %p105
    %p107 = scmp.ne.s32.totalorder %s96, %s97
    %p108 = scmp.eq.s32.totalorder %s24, 0
    %p109 = por %p107, %p108
    %p110 = scmp.ne.s32.totalorder %s96, %s97
    %p111 = scmp.eq.s32.totalorder %s25, 1
    %p112 = por %p110, %p111
    %p114 = scmp.ne.s32.totalorder %s97, %s113
    %p115 = scmp.eq.s32.totalorder %s25, 0
    %p116 = por %p114, %p115
    %s117 = ssub.s32 %s27, %s34
    %p118 = scmp.eq.s32.totalorder %s117, 0
    %s120 = sadd.s32 %s119, 1
    %s121 = scalar_select %p118, %s119, %s120
    %p124 = pneg %p118
    %p125 = scmp.eq.s32.totalorder %s19, 1
    %p126 = por %p124, %p125
    %p127 = scmp.ne.s32.totalorder %s119, %s122
    %p128 = scmp.eq.s32.totalorder %s19, 0
    %p129 = por %p127, %p128
    %p130 = scmp.ne.s32.totalorder %s119, %s122
    %p131 = scmp.eq.s32.totalorder %s24, 1
    %p132 = por %p130, %p131
    %p133 = scmp.ne.s32.totalorder %s122, %s123
    %p134 = scmp.eq.s32.totalorder %s24, 0
    %p135 = por %p133, %p134
    %p136 = scmp.ne.s32.totalorder %s122, %s123
    %p137 = scmp.eq.s32.totalorder %s25, 1
    %p138 = por %p136, %p137
    %p140 = scmp.ne.s32.totalorder %s123, %s139
    %p141 = scmp.eq.s32.totalorder %s25, 0
    %p142 = por %p140, %p141
    %s143 = ssub.s32 %s27, %s34
    %p144 = scmp.eq.s32.totalorder %s143, 0
    %s146 = sadd.s32 %s145, 1
    %s147 = scalar_select %p144, %s145, %s146
    %p150 = pneg %p144
    %p151 = scmp.eq.s32.totalorder %s19, 1
    %p152 = por %p150, %p151
    %p153 = scmp.ne.s32.totalorder %s145, %s148
    %p154 = scmp.eq.s32.totalorder %s19, 0
    %p155 = por %p153, %p154
    %p156 = scmp.ne.s32.totalorder %s145, %s148
    %p157 = scmp.eq.s32.totalorder %s24, 1
    %p158 = por %p156, %p157
    %p159 = scmp.ne.s32.totalorder %s148, %s149
    %p160 = scmp.eq.s32.totalorder %s24, 0
    %p161 = por %p159, %p160
    %p162 = scmp.ne.s32.totalorder %s148, %s149
    %p163 = scmp.eq.s32.totalorder %s25, 1
    %p164 = por %p162, %p163
    %p166 = scmp.ne.s32.totalorder %s149, %s165
    %p167 = scmp.eq.s32.totalorder %s25, 0
    %p168 = por %p166, %p167
    %s169 = ssub.s32 %s27, %s34
    %p170 = scmp.eq.s32.totalorder %s169, 0
    %s172 = sadd.s32 %s171, 1
    %s173 = scalar_select %p170, %s171, %s172
    %p176 = pneg %p170
    %p177 = scmp.eq.s32.totalorder %s19, 1
    %p178 = por %p176, %p177
    %p179 = scmp.ne.s32.totalorder %s171, %s174
    %p180 = scmp.eq.s32.totalorder %s19, 0
    %p181 = por %p179, %p180
    %p182 = scmp.ne.s32.totalorder %s171, %s174
    %p183 = scmp.eq.s32.totalorder %s24, 1
    %p184 = por %p182, %p183
    %p185 = scmp.ne.s32.totalorder %s174, %s175
    %p186 = scmp.eq.s32.totalorder %s24, 0
    %p187 = por %p185, %p186
    %p188 = scmp.ne.s32.totalorder %s174, %s175
    %p189 = scmp.eq.s32.totalorder %s25, 1
    %p190 = por %p188, %p189
    %p192 = scmp.ne.s32.totalorder %s175, %s191
    %p193 = scmp.eq.s32.totalorder %s25, 0
    %p194 = por %p192, %p193
    %s195 = ssub.s32 %s27, %s34
    %p196 = scmp.eq.s32.totalorder %s195, 0
    %s198 = sadd.s32 %s197, 1
    %s199 = scalar_select %p196, %s197, %s198
    %p202 = pneg %p196
    %p203 = scmp.eq.s32.totalorder %s19, 1
    %p204 = por %p202, %p203
    %p205 = scmp.ne.s32.totalorder %s197, %s200
    %p206 = scmp.eq.s32.totalorder %s19, 0
    %p207 = por %p205, %p206
    %p208 = scmp.ne.s32.totalorder %s197, %s200
    %p209 = scmp.eq.s32.totalorder %s24, 1
    %p210 = por %p208, %p209
    %p211 = scmp.ne.s32.totalorder %s200, %s201
    %p212 = scmp.eq.s32.totalorder %s24, 0
    %p213 = por %p211, %p212
    %p214 = scmp.ne.s32.totalorder %s200, %s201
    %p215 = scmp.eq.s32.totalorder %s25, 1
    %p216 = por %p214, %p215
    %p218 = scmp.ne.s32.totalorder %s201, %s217
    %p219 = scmp.eq.s32.totalorder %s25, 0
    %p220 = por %p218, %p219
    %s221 = ssub.s32 %s27, %s34
    %p222 = scmp.eq.s32.totalorder %s221, 0
    %s224 = sadd.s32 %s223, 1
    %s225 = scalar_select %p222, %s223, %s224
    %p228 = pneg %p222
    %p229 = scmp.eq.s32.totalorder %s19, 1
    %p230 = por %p228, %p229
    %p231 = scmp.ne.s32.totalorder %s223, %s226
    %p232 = scmp.eq.s32.totalorder %s19, 0
    %p233 = por %p231, %p232
    %p234 = scmp.ne.s32.totalorder %s223, %s226
    %p235 = scmp.eq.s32.totalorder %s24, 1
    %p236 = por %p234, %p235
    %p237 = scmp.ne.s32.totalorder %s226, %s227
    %p238 = scmp.eq.s32.totalorder %s24, 0
    %p239 = por %p237, %p238
    %p240 = scmp.ne.s32.totalorder %s226, %s227
    %p241 = scmp.eq.s32.totalorder %s25, 1
    %p242 = por %p240, %p241
    %p244 = scmp.ne.s32.totalorder %s227, %s243
    %p245 = scmp.eq.s32.totalorder %s25, 0
    %p246 = por %p244, %p245
    %s247 = ssub.s32 %s27, %s34
    %p248 = scmp.eq.s32.totalorder %s247, 0
    %s250 = sadd.s32 %s249, 1
    %s251 = scalar_select %p248, %s249, %s250
    %p254 = pneg %p248
    %p255 = scmp.eq.s32.totalorder %s19, 1
    %p256 = por %p254, %p255
    %p257 = scmp.ne.s32.totalorder %s249, %s252
    %p258 = scmp.eq.s32.totalorder %s19, 0
    %p259 = por %p257, %p258
    %p260 = scmp.ne.s32.totalorder %s249, %s252
    %p261 = scmp.eq.s32.totalorder %s24, 1
    %p262 = por %p260, %p261
    %p263 = scmp.ne.s32.totalorder %s252, %s253
    %p264 = scmp.eq.s32.totalorder %s24, 0
    %p265 = por %p263, %p264
    %p266 = scmp.ne.s32.totalorder %s252, %s253
    %p267 = scmp.eq.s32.totalorder %s25, 1
    %p268 = por %p266, %p267
    %p270 = scmp.ne.s32.totalorder %s253, %s269
    %p271 = scmp.eq.s32.totalorder %s25, 0
    %p272 = por %p270, %p271
    %s273 = ssub.s32 %s27, %s34
    %p274 = scmp.eq.s32.totalorder %s273, 0
    %s276 = sadd.s32 %s275, 1
    %s277 = scalar_select %p274, %s275, %s276
    %p280 = pneg %p274
    %p281 = scmp.eq.s32.totalorder %s19, 1
    %p282 = por %p280, %p281
    %p283 = scmp.ne.s32.totalorder %s275, %s278
    %p284 = scmp.eq.s32.totalorder %s19, 0
    %p285 = por %p283, %p284
    %p286 = scmp.ne.s32.totalorder %s275, %s278
    %p287 = scmp.eq.s32.totalorder %s24, 1
    %p288 = por %p286, %p287
    %p289 = scmp.ne.s32.totalorder %s278, %s279
    %p290 = scmp.eq.s32.totalorder %s24, 0
    %p291 = por %p289, %p290
    %p292 = scmp.ne.s32.totalorder %s278, %s279
    %p293 = scmp.eq.s32.totalorder %s25, 1
    %p294 = por %p292, %p293
    %p296 = scmp.ne.s32.totalorder %s279, %s295
    %p297 = scmp.eq.s32.totalorder %s25, 0
    %p298 = por %p296, %p297
    %s299 = ssub.s32 %s27, %s34
    %p300 = scmp.eq.s32.totalorder %s299, 0
    %s302 = sadd.s32 %s301, 1
    %s303 = scalar_select %p300, %s301, %s302
    %p306 = pneg %p300
    %p307 = scmp.eq.s32.totalorder %s19, 1
    %p308 = por %p306, %p307
    %p309 = scmp.ne.s32.totalorder %s301, %s304
    %p310 = scmp.eq.s32.totalorder %s19, 0
    %p311 = por %p309, %p310
    %p312 = scmp.ne.s32.totalorder %s301, %s304
    %p313 = scmp.eq.s32.totalorder %s24, 1
    %p314 = por %p312, %p313
    %p315 = scmp.ne.s32.totalorder %s304, %s305
    %p316 = scmp.eq.s32.totalorder %s24, 0
    %p317 = por %p315, %p316
    %p318 = scmp.ne.s32.totalorder %s304, %s305
    %p319 = scmp.eq.s32.totalorder %s25, 1
    %p320 = por %p318, %p319
    %p322 = scmp.ne.s32.totalorder %s305, %s321
    %p323 = scmp.eq.s32.totalorder %s25, 0
    %p324 = por %p322, %p323
    %s325 = ssub.s32 %s27, %s34
    %p326 = scmp.eq.s32.totalorder %s325, 0
    %s328 = sadd.s32 %s327, 1
    %s329 = scalar_select %p326, %s327, %s328
    %p332 = pneg %p326
    %p333 = scmp.eq.s32.totalorder %s19, 1
    %p334 = por %p332, %p333
    %p335 = scmp.ne.s32.totalorder %s327, %s330
    %p336 = scmp.eq.s32.totalorder %s19, 0
    %p337 = por %p335, %p336
    %p338 = scmp.ne.s32.totalorder %s327, %s330
    %p339 = scmp.eq.s32.totalorder %s24, 1
    %p340 = por %p338, %p339
    %p341 = scmp.ne.s32.totalorder %s330, %s331
    %p342 = scmp.eq.s32.totalorder %s24, 0
    %p343 = por %p341, %p342
    %p344 = scmp.ne.s32.totalorder %s330, %s331
    %p345 = scmp.eq.s32.totalorder %s25, 1
    %p346 = por %p344, %p345
    %p348 = scmp.ne.s32.totalorder %s331, %s347
    %p349 = scmp.eq.s32.totalorder %s25, 0
    %p350 = por %p348, %p349
    %s351 = ssub.s32 %s27, %s34
    %p352 = scmp.eq.s32.totalorder %s351, 0
    %s354 = sadd.s32 %s353, 1
    %s355 = scalar_select %p352, %s353, %s354
    %p358 = pneg %p352
    %p359 = scmp.eq.s32.totalorder %s19, 1
    %p360 = por %p358, %p359
    %p361 = scmp.ne.s32.totalorder %s353, %s356
    %p362 = scmp.eq.s32.totalorder %s19, 0
    %p363 = por %p361, %p362
    %p364 = scmp.ne.s32.totalorder %s353, %s356
    %p365 = scmp.eq.s32.totalorder %s24, 1
    %p366 = por %p364, %p365
    %p367 = scmp.ne.s32.totalorder %s356, %s357
    %p368 = scmp.eq.s32.totalorder %s24, 0
    %p369 = por %p367, %p368
    %p370 = scmp.ne.s32.totalorder %s356, %s357
    %p371 = scmp.eq.s32.totalorder %s25, 1
    %p372 = por %p370, %p371
    %p374 = scmp.ne.s32.totalorder %s357, %s373
    %p375 = scmp.eq.s32.totalorder %s25, 0
    %p376 = por %p374, %p375
    %s377 = ssub.s32 %s26, %s38
    %p378 = scmp.eq.s32.totalorder %s377, 0
    %s380 = sadd.s32 %s379, 1
    %s381 = scalar_select %p378, %s379, %s380
    %p384 = pneg %p378
    %p385 = scmp.eq.s32.totalorder %s19, 1
    %p386 = por %p384, %p385
    %p387 = scmp.ne.s32.totalorder %s379, %s382
    %p388 = scmp.eq.s32.totalorder %s19, 0
    %p389 = por %p387, %p388
    %p390 = scmp.ne.s32.totalorder %s379, %s382
    %p391 = scmp.eq.s32.totalorder %s24, 1
    %p392 = por %p390, %p391
    %p393 = scmp.ne.s32.totalorder %s382, %s383
    %p394 = scmp.eq.s32.totalorder %s24, 0
    %p395 = por %p393, %p394
    %p396 = scmp.ne.s32.totalorder %s382, %s383
    %p397 = scmp.eq.s32.totalorder %s25, 1
    %p398 = por %p396, %p397
    %p400 = scmp.ne.s32.totalorder %s383, %s399
    %p401 = scmp.eq.s32.totalorder %s25, 0
    %p402 = por %p400, %p401
    %p403 = scmp.le.s32.totalorder 1, %s19
    %p404 = scmp.lt.s32.totalorder %s19, 3
    %p405 = pnand %p403, %p404
    %p406 = pneg %p405
    // Predicated region
    $region9: #{fwd.4} parent=5 // pred_check
      _
    $region10: #{fwd.4} parent=5 // pred_check_branch
      %408 = sbr.rel (%p405) target = $region12
    $region11: #{fwd.4} parent=5 // pred_region
      %s409 = ssub.s32 %s19, 1
      // Predicated region
      $region13: #{fwd.4} parent=11 // pred_check
        %p410 = pneg %p83
      $region14: #{fwd.4} parent=11 // pred_check_branch
        %412 = sbr.rel (%p410) target = $region16
      $region15: #{fwd.4} parent=11 // pred_region
        %p413 = scmp.lt.s32.totalorder %s29, 0
        %s414 = scalar_select %p413, %s29, 0
        %s415 = scalar_lea.vmem %s1, %s414
      $region16: #{fwd.4} parent=11 // pred_fallthru
        _
      // Predicated region
      $region17: #{fwd.4} parent=11 // pred_check
        %p416 = pneg %p109
      $region18: #{fwd.4} parent=11 // pred_check_branch
        %418 = sbr.rel (%p416) target = $region20
      $region19: #{fwd.4} parent=11 // pred_region
        %p419 = scmp.lt.s32.totalorder %s29, 0
        %s420 = scalar_select %p419, %s29, 0
        %s421 = scalar_lea.vmem %s2, %s420
      $region20: #{fwd.4} parent=11 // pred_fallthru
        _
      // Predicated region
      $region21: #{fwd.4} parent=11 // pred_check
        %p422 = pneg %p135
      $region22: #{fwd.4} parent=11 // pred_check_branch
        %424 = sbr.rel (%p422) target = $region24
      $region23: #{fwd.4} parent=11 // pred_region
        %p425 = scmp.lt.s32.totalorder %s29, 0
        %s426 = scalar_select %p425, %s29, 0
        %s427 = smul.addr %s426, 4
        %s428 = smul.addr %s427, 4
        %s429 = scalar_lea.vmem %s3, %s428
      $region24: #{fwd.4} parent=11 // pred_fallthru
        _
      // Predicated region
      $region25: #{fwd.4} parent=11 // pred_check
        %p430 = pneg %p161
      $region26: #{fwd.4} parent=11 // pred_check_branch
        %432 = sbr.rel (%p430) target = $region28
      $region27: #{fwd.4} parent=11 // pred_region
        %p433 = scmp.lt.s32.totalorder %s29, 0
        %s434 = scalar_select %p433, %s29, 0
        %s435 = scalar_lea.vmem %s4, %s434
      $region28: #{fwd.4} parent=11 // pred_fallthru
        _
      // Predicated region
      $region29: #{fwd.4} parent=11 // pred_check
        %p436 = pneg %p187
      $region30: #{fwd.4} parent=11 // pred_check_branch
        %438 = sbr.rel (%p436) target = $region32
      $region31: #{fwd.4} parent=11 // pred_region
        %p439 = scmp.lt.s32.totalorder %s29, 0
        %s440 = scalar_select %p439, %s29, 0
        %s441 = smul.addr %s440, 4
        %s442 = smul.addr %s441, 4
        %s443 = scalar_lea.vmem %s5, %s442
      $region32: #{fwd.4} parent=11 // pred_fallthru
        _
      // Predicated region
      $region33: #{fwd.4} parent=11 // pred_check
        %p444 = pneg %p213
      $region34: #{fwd.4} parent=11 // pred_check_branch
        %446 = sbr.rel (%p444) target = $region36
      $region35: #{fwd.4} parent=11 // pred_region
        %p447 = scmp.lt.s32.totalorder %s29, 0
        %s448 = scalar_select %p447, %s29, 0
        %s449 = scalar_lea.vmem %s6, %s448
      $region36: #{fwd.4} parent=11 // pred_fallthru
        _
      // Predicated region
      $region37: #{fwd.4} parent=11 // pred_check
        %p450 = pneg %p239
      $region38: #{fwd.4} parent=11 // pred_check_branch
        %452 = sbr.rel (%p450) target = $region40
      $region39: #{fwd.4} parent=11 // pred_region
        %p453 = scmp.lt.s32.totalorder %s29, 0
        %s454 = scalar_select %p453, %s29, 0
        %s455 = scalar_lea.vmem %s7, %s454
      $region40: #{fwd.4} parent=11 // pred_fallthru
        _
      // Predicated region
      $region41: #{fwd.4} parent=11 // pred_check
        %p456 = pneg %p265
      $region42: #{fwd.4} parent=11 // pred_check_branch
        %458 = sbr.rel (%p456) target = $region44
      $region43: #{fwd.4} parent=11 // pred_region
        %p459 = scmp.lt.s32.totalorder %s29, 0
        %s460 = scalar_select %p459, %s29, 0
        %s461 = scalar_lea.vmem %s8, %s460
      $region44: #{fwd.4} parent=11 // pred_fallthru
        _
      // Predicated region
      $region45: #{fwd.4} parent=11 // pred_check
        %p462 = pneg %p291
      $region46: #{fwd.4} parent=11 // pred_check_branch
        %464 = sbr.rel (%p462) target = $region48
      $region47: #{fwd.4} parent=11 // pred_region
        %p465 = scmp.lt.s32.totalorder %s29, 0
        %s466 = scalar_select %p465, %s29, 0
        %s467 = smul.addr %s466, 4
        %s468 = smul.addr %s467, 4
        %s469 = scalar_lea.vmem %s9, %s468
      $region48: #{fwd.4} parent=11 // pred_fallthru
        _
      // Predicated region
      $region49: #{fwd.4} parent=11 // pred_check
        %p470 = pneg %p317
      $region50: #{fwd.4} parent=11 // pred_check_branch
        %472 = sbr.rel (%p470) target = $region52
      $region51: #{fwd.4} parent=11 // pred_region
        %p473 = scmp.lt.s32.totalorder %s29, 0
        %s474 = scalar_select %p473, %s29, 0
        %s475 = scalar_lea.vmem %s10, %s474
      $region52: #{fwd.4} parent=11 // pred_fallthru
        _
      // Predicated region
      $region53: #{fwd.4} parent=11 // pred_check
        %p476 = pneg %p343
      $region54: #{fwd.4} parent=11 // pred_check_branch
        %478 = sbr.rel (%p476) target = $region56
      $region55: #{fwd.4} parent=11 // pred_region
        %p479 = scmp.lt.s32.totalorder %s29, 0
        %s480 = scalar_select %p479, %s29, 0
        %s481 = smul.addr %s480, 8
        %s482 = smul.addr %s481, 4
        %s483 = scalar_lea.vmem %s11, %s482
      $region56: #{fwd.4} parent=11 // pred_fallthru
        _
      // Predicated region
      $region57: #{fwd.4} parent=11 // pred_check
        %p484 = pneg %p369
      $region58: #{fwd.4} parent=11 // pred_check_branch
        %486 = sbr.rel (%p484) target = $region60
      $region59: #{fwd.4} parent=11 // pred_region
        %p487 = scmp.lt.s32.totalorder %s29, 0
        %s488 = scalar_select %p487, %s29, 0
        %s489 = scalar_lea.vmem %s12, %s488
      $region60: #{fwd.4} parent=11 // pred_fallthru
        _
    $region12: #{fwd.4} parent=5 // pred_fallthru
      _
    %p490 = scmp.lt.s32.totalorder %s19, 2
    // Predicated region
    $region61: #{fwd.4} parent=5 // pred_check
      %p491 = pneg %p490
    $region62: #{fwd.4} parent=5 // pred_check_branch
      %493 = sbr.rel (%p491) target = $region64
    $region63: #{fwd.4} parent=5 // pred_region
      // Predicated region
      $region65: #{fwd.4} parent=63 // pred_check
        %p494 = pneg %p51
      $region66: #{fwd.4} parent=63 // pred_check_branch
        %496 = sbr.rel (%p494) target = $region68
      $region67: #{fwd.4} parent=63 // pred_region
        %p497 = scmp.lt.s32.totalorder %s26, 1
        %s498 = scalar_select %p497, %s26, 1
        %s499 = smul.addr %s498, 8
        %s500 = scalar_lea.vmem %s0, %s499
      $region68: #{fwd.4} parent=63 // pred_fallthru
        _
    $region64: #{fwd.4} parent=5 // pred_fallthru
      _
    %p501 = scmp.le.s32.totalorder 1, %s19
    %p502 = scmp.lt.s32.totalorder %s19, 3
    %p503 = pnand %p501, %p502
    %p504 = pneg %p503
    // Predicated region
    $region69: #{fwd.4} parent=5 // pred_check
      _
    $region70: #{fwd.4} parent=5 // pred_check_branch
      %506 = sbr.rel (%p503) target = $region72
    $region71: #{fwd.4} parent=5 // pred_region
      %s507 = ssub.s32 %s19, 1
      %p508 = scmp.lt.s32.totalorder %s28, 1
      %s509 = scalar_select %p508, %s28, 1
      %s510 = smul.addr %s509, 8
      %s511 = scalar_lea.vmem %s0, %s510
      %p512 = pneg %p57
      %p513 = pneg %p54
      %p514 = scmp.lt.s32.totalorder %s29, 0
      %s515 = scalar_select %p514, %s29, 0
      %s516 = scalar_lea.vmem %s1, %s515
      %p517 = pneg %p83
      %p518 = pneg %p80
      %p519 = scmp.lt.s32.totalorder %s29, 0
      %s520 = scalar_select %p519, %s29, 0
      %s521 = scalar_lea.vmem %s2, %s520
      %p522 = pneg %p109
      %p523 = pneg %p106
      %p524 = scmp.lt.s32.totalorder %s29, 0
      %s525 = scalar_select %p524, %s29, 0
      %s526 = smul.addr %s525, 4
      %s527 = smul.addr %s526, 4
      %s528 = scalar_lea.vmem %s3, %s527
      %p529 = pneg %p135
      %p530 = pneg %p132
      %p531 = scmp.lt.s32.totalorder %s29, 0
      %s532 = scalar_select %p531, %s29, 0
      %s533 = scalar_lea.vmem %s4, %s532
      %p534 = pneg %p161
      %p535 = pneg %p158
      %p536 = scmp.lt.s32.totalorder %s29, 0
      %s537 = scalar_select %p536, %s29, 0
      %s538 = smul.addr %s537, 4
      %s539 = smul.addr %s538, 4
      %s540 = scalar_lea.vmem %s5, %s539
      %p541 = pneg %p187
      %p542 = pneg %p184
      %p543 = scmp.lt.s32.totalorder %s29, 0
      %s544 = scalar_select %p543, %s29, 0
      %s545 = scalar_lea.vmem %s6, %s544
      %p546 = pneg %p213
      %p547 = pneg %p210
      %p548 = scmp.lt.s32.totalorder %s29, 0
      %s549 = scalar_select %p548, %s29, 0
      %s550 = scalar_lea.vmem %s7, %s549
      %p551 = pneg %p239
      %p552 = pneg %p236
      %p553 = scmp.lt.s32.totalorder %s29, 0
      %s554 = scalar_select %p553, %s29, 0
      %s555 = scalar_lea.vmem %s8, %s554
      %p556 = pneg %p265
      %p557 = pneg %p262
      %p558 = scmp.lt.s32.totalorder %s29, 0
      %s559 = scalar_select %p558, %s29, 0
      %s560 = smul.addr %s559, 4
      %s561 = smul.addr %s560, 4
      %s562 = scalar_lea.vmem %s9, %s561
      %p563 = pneg %p291
      %p564 = pneg %p288
      %p565 = scmp.lt.s32.totalorder %s29, 0
      %s566 = scalar_select %p565, %s29, 0
      %s567 = scalar_lea.vmem %s10, %s566
      %p568 = pneg %p317
      %p569 = pneg %p314
      %p570 = scmp.lt.s32.totalorder %s29, 0
      %s571 = scalar_select %p570, %s29, 0
      %s572 = smul.addr %s571, 8
      %s573 = smul.addr %s572, 4
      %s574 = scalar_lea.vmem %s11, %s573
      %p575 = pneg %p343
      %p576 = pneg %p340
      %p577 = scmp.lt.s32.totalorder %s29, 0
      %s578 = scalar_select %p577, %s29, 0
      %s579 = scalar_lea.vmem %s12, %s578
      %p580 = pneg %p369
      %p581 = pneg %p366
      %p582 = pneg %p395
      %p583 = pneg %p392
      %p584 = scmp.lt.s32.totalorder %s28, 1
      %s585 = scalar_select %p584, %s28, 1
      %s586 = smul.addr %s585, 8
      %s587 = scalar_lea.vmem %s13, %s586
      %p588 = scmp.lt.s32.totalorder %s28, 1
      %s589 = scalar_select %p588, %s28, 1
      %s590 = smul.addr %s589, 8
      %s591 = scalar_lea.vmem %s0, %s590
      %p592 = scmp.lt.s32.totalorder %s29, 0
      %s593 = scalar_select %p592, %s29, 0
      %s594 = scalar_lea.vmem %s1, %s593
      %p595 = scmp.lt.s32.totalorder %s29, 0
      %s596 = scalar_select %p595, %s29, 0
      %s597 = scalar_lea.vmem %s2, %s596
      %p598 = scmp.lt.s32.totalorder %s29, 0
      %s599 = scalar_select %p598, %s29, 0
      %s600 = smul.addr %s599, 4
      %s601 = smul.addr %s600, 4
      %s602 = scalar_lea.vmem %s3, %s601
      %p603 = scmp.lt.s32.totalorder %s29, 0
      %s604 = scalar_select %p603, %s29, 0
      %s605 = scalar_lea.vmem %s4, %s604
      %p606 = scmp.lt.s32.totalorder %s29, 0
      %s607 = scalar_select %p606, %s29, 0
      %s608 = smul.addr %s607, 4
      %s609 = smul.addr %s608, 4
      %s610 = scalar_lea.vmem %s5, %s609
      %p611 = scmp.lt.s32.totalorder %s29, 0
      %s612 = scalar_select %p611, %s29, 0
      %s613 = scalar_lea.vmem %s6, %s612
      %p614 = scmp.lt.s32.totalorder %s29, 0
      %s615 = scalar_select %p614, %s29, 0
      %s616 = scalar_lea.vmem %s7, %s615
      %p617 = scmp.lt.s32.totalorder %s29, 0
      %s618 = scalar_select %p617, %s29, 0
      %s619 = scalar_lea.vmem %s8, %s618
      %p620 = scmp.lt.s32.totalorder %s29, 0
      %s621 = scalar_select %p620, %s29, 0
      %s622 = smul.addr %s621, 4
      %s623 = smul.addr %s622, 4
      %s624 = scalar_lea.vmem %s9, %s623
      %p625 = scmp.lt.s32.totalorder %s29, 0
      %s626 = scalar_select %p625, %s29, 0
      %s627 = scalar_lea.vmem %s10, %s626
      %p628 = scmp.lt.s32.totalorder %s29, 0
      %s629 = scalar_select %p628, %s29, 0
      %s630 = smul.addr %s629, 8
      %s631 = smul.addr %s630, 4
      %s632 = scalar_lea.vmem %s11, %s631
      %p633 = scmp.lt.s32.totalorder %s29, 0
      %s634 = scalar_select %p633, %s29, 0
      %s635 = scalar_lea.vmem %s12, %s634
      %p636 = scmp.lt.s32.totalorder %s28, 1
      %s637 = scalar_select %p636, %s28, 1
      %s638 = smul.addr %s637, 8
      %s639 = scalar_lea.vmem %s13, %s638
      %p641 = scmp.eq.s32.totalorder %s29, 0
      // Predicated region
      $region73: #{fwd.4} parent=71 // pred_check
        %p642 = pneg %p641
      $region74: #{fwd.4} parent=71 // pred_check_branch
        %644 = sbr.rel (%p642) target = $region76
      $region75: #{fwd.4} parent=71 // pred_region
        %v645 = vld [vmem:[%s591] sm:$0x1f]
        %vm646 = vcmask 258048
        %647 = vst.msk [vmem:[#allocation2] sm:$0x1f] %vm646, %v645
      $region76: #{fwd.4} parent=71 // pred_fallthru
        _
      %v648 = vld [vmem:[#allocation2] sm:$0x1f]
      %v649 = vld [vmem:[%s594] sm:$0x1]
      %v650 = vld [vmem:[%s597] sm:$0x1]
      %vm651 = vcmask 258048
      %v652 = vsel %vm651, %v648, 0.0
      %653 = vadd.xlane.f32.xlu0 %v652
      %v654 = vpop.xlane.xlu0 %653
      %v655 = vrcp.pop 32.0
      %v656 = vmul.f32 %v654, %v655
      %v657 = vsub.f32 %v648, %v656
      %v658 = vmul.f32 %v657, %v657
      %v659 = vsel %vm651, %v658, 0.0
      %660 = vadd.xlane.f32.xlu0 %v659
      %v661 = vpop.xlane.xlu0 %660
      %v662 = vmul.f32 %v661, %v655
      %v663 = vadd.f32 %v662, 1e-05
      %v664 = vrsqrt.pop %v663
      %v665 = vmul.f32 %v657, %v664
      %v667 = vlaneseq
      %v668 = vshrl.u32 %v667, 7
      %v669 = vsub.s32 0, %v668
      %v670 = vrot.slane %v649, %v669
      %v672 = vmul.f32 %v665, %v670
      %v674 = vlaneseq
      %v675 = vshrl.u32 %v674, 7
      %v676 = vsub.s32 0, %v675
      %v677 = vrot.slane %v650, %v676
      %v679 = vadd.f32 %v672, %v677
      %v680 = vpack.c.bf16 %v679, %v679
      %v681 = vld [vmem:[%s602] sm:$0xf]
      %v682 = vld [vmem:[%s602 + $0x4] sm:$0xf]
      %v683 = vld [vmem:[%s602 + $0x8] sm:$0xf]
      %v684 = vld [vmem:[%s602 + $0xc] sm:$0xf]
      %v685 = vld [vmem:[%s605] sm:$0x1]
      %v687 = vlaneseq
      %v688 = vshrl.u32 %v687, 7
      %v689 = vsub.s32 0, %v688
      %v690 = vrot.slane %v685, %v689
      %v696 = vunpack.c.l.b16 %v681
      %v697 = vunpack.c.l.b16 %v682
      %v698 = vunpack.c.l.b16 %v683
      %v699 = vunpack.c.l.b16 %v684
      %v700 = vpack.c.b16 %v697, %v696
      %v701 = vpack.c.b16 %v699, %v698
      %vm704 = vcmask 261120
      %v706 = vsel %vm704, %v680, 0
      %708 = vmatprep.subr.bf16.mxu0 0
      %709 = vmatpush1.bf16.msra.mxu0 0
      %710 = vmatprep.subr.bf16.mxu0 0
      %711 = vmatpush1.bf16.msra.mxu0 0
      %712 = vmatprep.subr.bf16.mxu0 0
      %713 = vmatpush1.bf16.msra.mxu0 0
      %714 = vmatprep.subr.bf16.mxu0 0
      %715 = vmatpush1.bf16.msra.mxu0 0
      %716 = vmatprep.subr.bf16.mxu0 0
      %717 = vmatpush1.bf16.msra.mxu0 0
      %718 = vmatprep.subr.bf16.mxu0 0
      %719 = vmatpush1.bf16.msra.mxu0 0
      %720 = vmatprep.subr.bf16.mxu0 0
      %721 = vmatpush1.bf16.msra.mxu0 %v701
      %722 = vmatprep.subr.bf16.mxu0 0
      %723 = vmatpush1.bf16.msra.mxu0 %v700
      %724 = vmatprep.subr.bf16.mxu0 0
      %725 = vmatpush2.bf16.msra.mxu0 0
      %726 = vmatprep.subr.bf16.mxu0 0
      %727 = vmatpush2.bf16.msra.mxu0 0
      %728 = vmatprep.subr.bf16.mxu0 0
      %729 = vmatpush2.bf16.msra.mxu0 0
      %730 = vmatprep.subr.bf16.mxu0 0
      %731 = vmatpush2.bf16.msra.mxu0 0
      %732 = vmatprep.subr.bf16.mxu0 0
      %733 = vmatpush2.bf16.msra.mxu0 0
      %734 = vmatprep.subr.bf16.mxu0 0
      %735 = vmatpush2.bf16.msra.mxu0 0
      %736 = vmatprep.subr.bf16.mxu0 0
      %737 = vmatpush2.bf16.msra.mxu0 0
      %738 = vmatprep.subr.bf16.mxu0 0
      %739 = vmatpush2.bf16.msra.mxu0 0
      %740 = vmatprep.mubr.bf16.mxu0 0
      %741 = vmatmul.mubr.bf16.gmra.mxu0 %v706
      %v742 = vpop.f32.mrf.mxu0
      %v743 = vadd.f32 %v690, %v742
      %v744 = vpop.f32.mrf.mxu0
      %v745 = vpop.f32.mrf.mxu0
      %v746 = vpop.f32.mrf.mxu0
      %747 = vdwg.mxu0
      %v748 = vpack.c.bf16 %v743, %v743
      %750 = vrot.lane.b32.xlu0 %v748, 96
      %v751 = vpop.permute.xlu0 %750
      %vm752 = vcmask 64512
      %v754 = vsel %vm752, %v748, 0
      %v757 = vsel %vm752, %v751, 0
      %759 = vmatprep.subr.bf16.mxu0 0
      %760 = vmatpush1.bf16.xpose.msra.mxu0 0
      %761 = vmatprep.subr.bf16.mxu0 0
      %762 = vmatpush1.bf16.xpose.msra.mxu0 0
      %763 = vmatprep.subr.bf16.mxu0 0
      %764 = vmatpush1.bf16.xpose.msra.mxu0 0
      %765 = vmatprep.subr.bf16.mxu0 0
      %766 = vmatpush1.bf16.xpose.msra.mxu0 0
      %767 = vmatprep.subr.bf16.mxu0 0
      %768 = vmatpush1.bf16.xpose.msra.mxu0 0
      %769 = vmatprep.subr.bf16.mxu0 0
      %770 = vmatpush1.bf16.xpose.msra.mxu0 0
      %771 = vmatprep.subr.bf16.mxu0 0
      %772 = vmatpush1.bf16.xpose.msra.mxu0 0
      %773 = vmatprep.subr.bf16.mxu0 0
      %774 = vmatpush1.bf16.xpose.msra.mxu0 %v757
      %775 = vmatprep.subr.bf16.mxu0 0
      %776 = vmatpush2.bf16.xpose.msra.mxu0 0
      %777 = vmatprep.subr.bf16.mxu0 0
      %778 = vmatpush2.bf16.xpose.msra.mxu0 0
      %779 = vmatprep.subr.bf16.mxu0 0
      %780 = vmatpush2.bf16.xpose.msra.mxu0 0
      %781 = vmatprep.subr.bf16.mxu0 0
      %782 = vmatpush2.bf16.xpose.msra.mxu0 0
      %783 = vmatprep.subr.bf16.mxu0 0
      %784 = vmatpush2.bf16.xpose.msra.mxu0 0
      %785 = vmatprep.subr.bf16.mxu0 0
      %786 = vmatpush2.bf16.xpose.msra.mxu0 0
      %787 = vmatprep.subr.bf16.mxu0 0
      %788 = vmatpush2.bf16.xpose.msra.mxu0 0
      %789 = vmatprep.subr.bf16.mxu0 0
      %790 = vmatpush2.bf16.xpose.msra.mxu0 0
      %791 = vmatprep.mubr.bf16.mxu0 0
      %792 = vmatmul.mubr.bf16.gmra.mxu0 %v754
      %v793 = vpop.f32.mrf.mxu0
      %v794 = vadd.f32 0.0, %v793
      %v795 = vpop.f32.mrf.mxu0
      %v796 = vpop.f32.mrf.mxu0
      %v797 = vpop.f32.mrf.mxu0
      %798 = vdwg.mxu0
      %vm799 = vcmask 36864
      %v800 = vsel %vm799, %v794, -inf
      %801 = vmax.xlane.f32.xlu0 %v800
      %v802 = vpop.xlane.xlu0 %801
      %v803 = vsub.f32 %v794, %v802
      %v804 = vmul.f32 %v803, 1.442695
      %v805 = vpow.pop %v804
      %v806 = vsel %vm799, %v805, 0.0
      %807 = vadd.xlane.f32.xlu0 %v806
      %v808 = vpop.xlane.xlu0 %807
      %v809 = vrcp.pop %v808
      %v810 = vmul.f32 %v805, %v809
      %v811 = vpack.c.bf16 %v810, %v810
      %812 = vrot.lane.b32.xlu0 %v748, 64
      %v813 = vpop.permute.xlu0 %812
      %vm814 = vcmask 39936
      %v816 = vsel %vm814, %v811, 0
      %vm818 = vcmask 1041408
      %vm819 = vcmask 1042432
      %v820 = vsel %vm818, 4294967295, 65535
      %v821 = vsel %vm819, %v820, 0
      %v823 = vand.u32 %v813, %v821
      %825 = vmatprep.subr.bf16.mxu0 0
      %826 = vmatpush1.bf16.msra.mxu0 0
      %827 = vmatprep.subr.bf16.mxu0 0
      %828 = vmatpush1.bf16.msra.mxu0 0
      %829 = vmatprep.subr.bf16.mxu0 0
      %830 = vmatpush1.bf16.msra.mxu0 0
      %831 = vmatprep.subr.bf16.mxu0 0
      %832 = vmatpush1.bf16.msra.mxu0 0
      %833 = vmatprep.subr.bf16.mxu0 0
      %834 = vmatpush1.bf16.msra.mxu0 0
      %835 = vmatprep.subr.bf16.mxu0 0
      %836 = vmatpush1.bf16.msra.mxu0 0
      %837 = vmatprep.subr.bf16.mxu0 0
      %838 = vmatpush1.bf16.msra.mxu0 0
      %839 = vmatprep.subr.bf16.mxu0 0
      %840 = vmatpush1.bf16.msra.mxu0 %v823
      %841 = vmatprep.subr.bf16.mxu0 0
      %842 = vmatpush2.bf16.msra.mxu0 0
      %843 = vmatprep.subr.bf16.mxu0 0
      %844 = vmatpush2.bf16.msra.mxu0 0
      %845 = vmatprep.subr.bf16.mxu0 0
      %846 = vmatpush2.bf16.msra.mxu0 0
      %847 = vmatprep.subr.bf16.mxu0 0
      %848 = vmatpush2.bf16.msra.mxu0 0
      %849 = vmatprep.subr.bf16.mxu0 0
      %850 = vmatpush2.bf16.msra.mxu0 0
      %851 = vmatprep.subr.bf16.mxu0 0
      %852 = vmatpush2.bf16.msra.mxu0 0
      %853 = vmatprep.subr.bf16.mxu0 0
      %854 = vmatpush2.bf16.msra.mxu0 0
      %855 = vmatprep.subr.bf16.mxu0 0
      %856 = vmatpush2.bf16.msra.mxu0 0
      %857 = vmatprep.mubr.bf16.mxu0 0
      %858 = vmatmul.mubr.bf16.gmra.mxu0 %v816
      %v859 = vpop.f32.mrf.mxu0
      %v860 = vadd.f32 0.0, %v859
      %v861 = vpop.f32.mrf.mxu0
      %v862 = vpop.f32.mrf.mxu0
      %v863 = vpop.f32.mrf.mxu0
      %864 = vdwg.mxu0
      %v865 = vpack.c.bf16 %v860, %v860
      %vm866 = vcmask 59392
      %vm867 = vsmask.f32 2304
      %vm868 = vmand %vm866, %vm867
      %v869 = vld [vmem:[#allocation3] sm:$0x7]
      %v870 = vsel %vm868, %v865, %v869
      %871 = vst [vmem:[#allocation3] sm:$0x7] %v870
      %872 = vrot.lane.b32.xlu0 %v748, 120
      %v873 = vpop.permute.xlu0 %872
      %874 = vrot.lane.b32.xlu0 %v748, 88
      %v875 = vpop.permute.xlu0 %874
      %v877 = vsel %vm752, %v873, 0
      %v880 = vsel %vm752, %v875, 0
      %882 = vmatprep.subr.bf16.mxu0 0
      %883 = vmatpush1.bf16.xpose.msra.mxu0 0
      %884 = vmatprep.subr.bf16.mxu0 0
      %885 = vmatpush1.bf16.xpose.msra.mxu0 0
      %886 = vmatprep.subr.bf16.mxu0 0
      %887 = vmatpush1.bf16.xpose.msra.mxu0 0
      %888 = vmatprep.subr.bf16.mxu0 0
      %889 = vmatpush1.bf16.xpose.msra.mxu0 0
      %890 = vmatprep.subr.bf16.mxu0 0
      %891 = vmatpush1.bf16.xpose.msra.mxu0 0
      %892 = vmatprep.subr.bf16.mxu0 0
      %893 = vmatpush1.bf16.xpose.msra.mxu0 0
      %894 = vmatprep.subr.bf16.mxu0 0
      %895 = vmatpush1.bf16.xpose.msra.mxu0 0
      %896 = vmatprep.subr.bf16.mxu0 0
      %897 = vmatpush1.bf16.xpose.msra.mxu0 %v880
      %898 = vmatprep.subr.bf16.mxu0 0
      %899 = vmatpush2.bf16.xpose.msra.mxu0 0
      %900 = vmatprep.subr.bf16.mxu0 0
      %901 = vmatpush2.bf16.xpose.msra.mxu0 0
      %902 = vmatprep.subr.bf16.mxu0 0
      %903 = vmatpush2.bf16.xpose.msra.mxu0 0
      %904 = vmatprep.subr.bf16.mxu0 0
      %905 = vmatpush2.bf16.xpose.msra.mxu0 0
      %906 = vmatprep.subr.bf16.mxu0 0
      %907 = vmatpush2.bf16.xpose.msra.mxu0 0
      %908 = vmatprep.subr.bf16.mxu0 0
      %909 = vmatpush2.bf16.xpose.msra.mxu0 0
      %910 = vmatprep.subr.bf16.mxu0 0
      %911 = vmatpush2.bf16.xpose.msra.mxu0 0
      %912 = vmatprep.subr.bf16.mxu0 0
      %913 = vmatpush2.bf16.xpose.msra.mxu0 0
      %914 = vmatprep.mubr.bf16.mxu0 0
      %915 = vmatmul.mubr.bf16.gmra.mxu0 %v877
      %v916 = vpop.f32.mrf.mxu0
      %v917 = vadd.f32 0.0, %v916
      %v918 = vpop.f32.mrf.mxu0
      %v919 = vpop.f32.mrf.mxu0
      %v920 = vpop.f32.mrf.mxu0
      %921 = vdwg.mxu0
      %v922 = vsel %vm799, %v917, -inf
      %923 = vmax.xlane.f32.xlu0 %v922
      %v924 = vpop.xlane.xlu0 %923
      %v925 = vsub.f32 %v917, %v924
      %v926 = vmul.f32 %v925, 1.442695
      %v927 = vpow.pop %v926
      %v928 = vsel %vm799, %v927, 0.0
      %929 = vadd.xlane.f32.xlu0 %v928
      %v930 = vpop.xlane.xlu0 %929
      %v931 = vrcp.pop %v930
      %v932 = vmul.f32 %v927, %v931
      %v933 = vpack.c.bf16 %v932, %v932
      %934 = vrot.lane.b32.xlu0 %v748, 56
      %v935 = vpop.permute.xlu0 %934
      %v937 = vsel %vm814, %v933, 0
      %v940 = vand.u32 %v935, %v821
      %942 = vmatprep.subr.bf16.mxu0 0
      %943 = vmatpush1.bf16.msra.mxu0 0
      %944 = vmatprep.subr.bf16.mxu0 0
      %945 = vmatpush1.bf16.msra.mxu0 0
      %946 = vmatprep.subr.bf16.mxu0 0
      %947 = vmatpush1.bf16.msra.mxu0 0
      %948 = vmatprep.subr.bf16.mxu0 0
      %949 = vmatpush1.bf16.msra.mxu0 0
      %950 = vmatprep.subr.bf16.mxu0 0
      %951 = vmatpush1.bf16.msra.mxu0 0
      %952 = vmatprep.subr.bf16.mxu0 0
      %953 = vmatpush1.bf16.msra.mxu0 0
      %954 = vmatprep.subr.bf16.mxu0 0
      %955 = vmatpush1.bf16.msra.mxu0 0
      %956 = vmatprep.subr.bf16.mxu0 0
      %957 = vmatpush1.bf16.msra.mxu0 %v940
      %958 = vmatprep.subr.bf16.mxu0 0
      %959 = vmatpush2.bf16.msra.mxu0 0
      %960 = vmatprep.subr.bf16.mxu0 0
      %961 = vmatpush2.bf16.msra.mxu0 0
      %962 = vmatprep.subr.bf16.mxu0 0
      %963 = vmatpush2.bf16.msra.mxu0 0
      %964 = vmatprep.subr.bf16.mxu0 0
      %965 = vmatpush2.bf16.msra.mxu0 0
      %966 = vmatprep.subr.bf16.mxu0 0
      %967 = vmatpush2.bf16.msra.mxu0 0
      %968 = vmatprep.subr.bf16.mxu0 0
      %969 = vmatpush2.bf16.msra.mxu0 0
      %970 = vmatprep.subr.bf16.mxu0 0
      %971 = vmatpush2.bf16.msra.mxu0 0
      %972 = vmatprep.subr.bf16.mxu0 0
      %973 = vmatpush2.bf16.msra.mxu0 0
      %974 = vmatprep.mubr.bf16.mxu0 0
      %975 = vmatmul.mubr.bf16.gmra.mxu0 %v937
      %v976 = vpop.f32.mrf.mxu0
      %v977 = vadd.f32 0.0, %v976
      %v978 = vpop.f32.mrf.mxu0
      %v979 = vpop.f32.mrf.mxu0
      %v980 = vpop.f32.mrf.mxu0
      %981 = vdwg.mxu0
      %v982 = vpack.c.bf16 %v977, %v977
      %v984 = vunpack.c.l.b16 %v982
      %v985 = vpack.c.b16 %v984, %v984
      %986 = vrot.lane.b32.xlu0 %v985, 8
      %v987 = vpop.permute.xlu0 %986
      %vm989 = vcmask 124992
      %vm990 = vmand %vm989, %vm867
      %v991 = vld [vmem:[#allocation3] sm:$0x7]
      %v992 = vsel %vm990, %v987, %v991
      %993 = vst [vmem:[#allocation3] sm:$0x7] %v992
      %994 = vrot.lane.b32.xlu0 %v748, 112
      %v995 = vpop.permute.xlu0 %994
      %996 = vrot.lane.b32.xlu0 %v748, 80
      %v997 = vpop.permute.xlu0 %996
      %v999 = vsel %vm752, %v995, 0
      %v1002 = vsel %vm752, %v997, 0
      %1004 = vmatprep.subr.bf16.mxu0 0
      %1005 = vmatpush1.bf16.xpose.msra.mxu0 0
      %1006 = vmatprep.subr.bf16.mxu0 0
      %1007 = vmatpush1.bf16.xpose.msra.mxu0 0
      %1008 = vmatprep.subr.bf16.mxu0 0
      %1009 = vmatpush1.bf16.xpose.msra.mxu0 0
      %1010 = vmatprep.subr.bf16.mxu0 0
      %1011 = vmatpush1.bf16.xpose.msra.mxu0 0
      %1012 = vmatprep.subr.bf16.mxu0 0
      %1013 = vmatpush1.bf16.xpose.msra.mxu0 0
      %1014 = vmatprep.subr.bf16.mxu0 0
      %1015 = vmatpush1.bf16.xpose.msra.mxu0 0
      %1016 = vmatprep.subr.bf16.mxu0 0
      %1017 = vmatpush1.bf16.xpose.msra.mxu0 0
      %1018 = vmatprep.subr.bf16.mxu0 0
      %1019 = vmatpush1.bf16.xpose.msra.mxu0 %v1002
      %1020 = vmatprep.subr.bf16.mxu0 0
      %1021 = vmatpush2.bf16.xpose.msra.mxu0 0
      %1022 = vmatprep.subr.bf16.mxu0 0
      %1023 = vmatpush2.bf16.xpose.msra.mxu0 0
      %1024 = vmatprep.subr.bf16.mxu0 0
      %1025 = vmatpush2.bf16.xpose.msra.mxu0 0
      %1026 = vmatprep.subr.bf16.mxu0 0
      %1027 = vmatpush2.bf16.xpose.msra.mxu0 0
      %1028 = vmatprep.subr.bf16.mxu0 0
      %1029 = vmatpush2.bf16.xpose.msra.mxu0 0
      %1030 = vmatprep.subr.bf16.mxu0 0
      %1031 = vmatpush2.bf16.xpose.msra.mxu0 0
      %1032 = vmatprep.subr.bf16.mxu0 0
      %1033 = vmatpush2.bf16.xpose.msra.mxu0 0
      %1034 = vmatprep.subr.bf16.mxu0 0
      %1035 = vmatpush2.bf16.xpose.msra.mxu0 0
      %1036 = vmatprep.mubr.bf16.mxu0 0
      %1037 = vmatmul.mubr.bf16.gmra.mxu0 %v999
      %v1038 = vpop.f32.mrf.mxu0
      %v1039 = vadd.f32 0.0, %v1038
      %v1040 = vpop.f32.mrf.mxu0
      %v1041 = vpop.f32.mrf.mxu0
      %v1042 = vpop.f32.mrf.mxu0
      %1043 = vdwg.mxu0
      %v1044 = vsel %vm799, %v1039, -inf
      %1045 = vmax.xlane.f32.xlu0 %v1044
      %v1046 = vpop.xlane.xlu0 %1045
      %v1047 = vsub.f32 %v1039, %v1046
      %v1048 = vmul.f32 %v1047, 1.442695
      %v1049 = vpow.pop %v1048
      %v1050 = vsel %vm799, %v1049, 0.0
      %1051 = vadd.xlane.f32.xlu0 %v1050
      %v1052 = vpop.xlane.xlu0 %1051
      %v1053 = vrcp.pop %v1052
      %v1054 = vmul.f32 %v1049, %v1053
      %v1055 = vpack.c.bf16 %v1054, %v1054
      %1056 = vrot.lane.b32.xlu0 %v748, 48
      %v1057 = vpop.permute.xlu0 %1056
      %v1059 = vsel %vm814, %v1055, 0
      %v1062 = vand.u32 %v1057, %v821
      %1064 = vmatprep.subr.bf16.mxu0 0
      %1065 = vmatpush1.bf16.msra.mxu0 0
      %1066 = vmatprep.subr.bf16.mxu0 0
      %1067 = vmatpush1.bf16.msra.mxu0 0
      %1068 = vmatprep.subr.bf16.mxu0 0
      %1069 = vmatpush1.bf16.msra.mxu0 0
      %1070 = vmatprep.subr.bf16.mxu0 0
      %1071 = vmatpush1.bf16.msra.mxu0 0
      %1072 = vmatprep.subr.bf16.mxu0 0
      %1073 = vmatpush1.bf16.msra.mxu0 0
      %1074 = vmatprep.subr.bf16.mxu0 0
      %1075 = vmatpush1.bf16.msra.mxu0 0
      %1076 = vmatprep.subr.bf16.mxu0 0
      %1077 = vmatpush1.bf16.msra.mxu0 0
      %1078 = vmatprep.subr.bf16.mxu0 0
      %1079 = vmatpush1.bf16.msra.mxu0 %v1062
      %1080 = vmatprep.subr.bf16.mxu0 0
      %1081 = vmatpush2.bf16.msra.mxu0 0
      %1082 = vmatprep.subr.bf16.mxu0 0
      %1083 = vmatpush2.bf16.msra.mxu0 0
      %1084 = vmatprep.subr.bf16.mxu0 0
      %1085 = vmatpush2.bf16.msra.mxu0 0
      %1086 = vmatprep.subr.bf16.mxu0 0
      %1087 = vmatpush2.bf16.msra.mxu0 0
      %1088 = vmatprep.subr.bf16.mxu0 0
      %1089 = vmatpush2.bf16.msra.mxu0 0
      %1090 = vmatprep.subr.bf16.mxu0 0
      %1091 = vmatpush2.bf16.msra.mxu0 0
      %1092 = vmatprep.subr.bf16.mxu0 0
      %1093 = vmatpush2.bf16.msra.mxu0 0
      %1094 = vmatprep.subr.bf16.mxu0 0
      %1095 = vmatpush2.bf16.msra.mxu0 0
      %1096 = vmatprep.mubr.bf16.mxu0 0
      %1097 = vmatmul.mubr.bf16.gmra.mxu0 %v1059
      %v1098 = vpop.f32.mrf.mxu0
      %v1099 = vadd.f32 0.0, %v1098
      %v1100 = vpop.f32.mrf.mxu0
      %v1101 = vpop.f32.mrf.mxu0
      %v1102 = vpop.f32.mrf.mxu0
      %1103 = vdwg.mxu0
      %v1104 = vpack.c.bf16 %v1099, %v1099
      %v1106 = vunpack.c.l.b16 %v1104
      %v1107 = vpack.c.b16 %v1106, %v1106
      %1108 = vrot.lane.b32.xlu0 %v1107, 16
      %v1109 = vpop.permute.xlu0 %1108
      %vm1111 = vcmask 190592
      %vm1112 = vmand %vm1111, %vm867
      %v1113 = vld [vmem:[#allocation3] sm:$0x7]
      %v1114 = vsel %vm1112, %v1109, %v1113
      %1115 = vst [vmem:[#allocation3] sm:$0x7] %v1114
      %1116 = vrot.lane.b32.xlu0 %v748, 104
      %v1117 = vpop.permute.xlu0 %1116
      %1118 = vrot.lane.b32.xlu0 %v748, 72
      %v1119 = vpop.permute.xlu0 %1118
      %v1121 = vsel %vm752, %v1117, 0
      %v1124 = vsel %vm752, %v1119, 0
      %1126 = vmatprep.subr.bf16.mxu0 0
      %1127 = vmatpush1.bf16.xpose.msra.mxu0 0
      %1128 = vmatprep.subr.bf16.mxu0 0
      %1129 = vmatpush1.bf16.xpose.msra.mxu0 0
      %1130 = vmatprep.subr.bf16.mxu0 0
      %1131 = vmatpush1.bf16.xpose.msra.mxu0 0
      %1132 = vmatprep.subr.bf16.mxu0 0
      %1133 = vmatpush1.bf16.xpose.msra.mxu0 0
      %1134 = vmatprep.subr.bf16.mxu0 0
      %1135 = vmatpush1.bf16.xpose.msra.mxu0 0
      %1136 = vmatprep.subr.bf16.mxu0 0
      %1137 = vmatpush1.bf16.xpose.msra.mxu0 0
      %1138 = vmatprep.subr.bf16.mxu0 0
      %1139 = vmatpush1.bf16.xpose.msra.mxu0 0
      %1140 = vmatprep.subr.bf16.mxu0 0
      %1141 = vmatpush1.bf16.xpose.msra.mxu0 %v1124
      %1142 = vmatprep.subr.bf16.mxu0 0
      %1143 = vmatpush2.bf16.xpose.msra.mxu0 0
      %1144 = vmatprep.subr.bf16.mxu0 0
      %1145 = vmatpush2.bf16.xpose.msra.mxu0 0
      %1146 = vmatprep.subr.bf16.mxu0 0
      %1147 = vmatpush2.bf16.xpose.msra.mxu0 0
      %1148 = vmatprep.subr.bf16.mxu0 0
      %1149 = vmatpush2.bf16.xpose.msra.mxu0 0
      %1150 = vmatprep.subr.bf16.mxu0 0
      %1151 = vmatpush2.bf16.xpose.msra.mxu0 0
      %1152 = vmatprep.subr.bf16.mxu0 0
      %1153 = vmatpush2.bf16.xpose.msra.mxu0 0
      %1154 = vmatprep.subr.bf16.mxu0 0
      %1155 = vmatpush2.bf16.xpose.msra.mxu0 0
      %1156 = vmatprep.subr.bf16.mxu0 0
      %1157 = vmatpush2.bf16.xpose.msra.mxu0 0
      %1158 = vmatprep.mubr.bf16.mxu0 0
      %1159 = vmatmul.mubr.bf16.gmra.mxu0 %v1121
      %v1160 = vpop.f32.mrf.mxu0
      %v1161 = vadd.f32 0.0, %v1160
      %v1162 = vpop.f32.mrf.mxu0
      %v1163 = vpop.f32.mrf.mxu0
      %v1164 = vpop.f32.mrf.mxu0
      %1165 = vdwg.mxu0
      %v1166 = vsel %vm799, %v1161, -inf
      %1167 = vmax.xlane.f32.xlu0 %v1166
      %v1168 = vpop.xlane.xlu0 %1167
      %v1169 = vsub.f32 %v1161, %v1168
      %v1170 = vmul.f32 %v1169, 1.442695
      %v1171 = vpow.pop %v1170
      %v1172 = vsel %vm799, %v1171, 0.0
      %1173 = vadd.xlane.f32.xlu0 %v1172
      %v1174 = vpop.xlane.xlu0 %1173
      %v1175 = vrcp.pop %v1174
      %v1176 = vmul.f32 %v1171, %v1175
      %v1177 = vpack.c.bf16 %v1176, %v1176
      %1178 = vrot.lane.b32.xlu0 %v748, 40
      %v1179 = vpop.permute.xlu0 %1178
      %v1181 = vsel %vm814, %v1177, 0
      %v1184 = vand.u32 %v1179, %v821
      %1186 = vmatprep.subr.bf16.mxu0 0
      %1187 = vmatpush1.bf16.msra.mxu0 0
      %1188 = vmatprep.subr.bf16.mxu0 0
      %1189 = vmatpush1.bf16.msra.mxu0 0
      %1190 = vmatprep.subr.bf16.mxu0 0
      %1191 = vmatpush1.bf16.msra.mxu0 0
      %1192 = vmatprep.subr.bf16.mxu0 0
      %1193 = vmatpush1.bf16.msra.mxu0 0
      %1194 = vmatprep.subr.bf16.mxu0 0
      %1195 = vmatpush1.bf16.msra.mxu0 0
      %1196 = vmatprep.subr.bf16.mxu0 0
      %1197 = vmatpush1.bf16.msra.mxu0 0
      %1198 = vmatprep.subr.bf16.mxu0 0
      %1199 = vmatpush1.bf16.msra.mxu0 0
      %1200 = vmatprep.subr.bf16.mxu0 0
      %1201 = vmatpush1.bf16.msra.mxu0 %v1184
      %1202 = vmatprep.subr.bf16.mxu0 0
      %1203 = vmatpush2.bf16.msra.mxu0 0
      %1204 = vmatprep.subr.bf16.mxu0 0
      %1205 = vmatpush2.bf16.msra.mxu0 0
      %1206 = vmatprep.subr.bf16.mxu0 0
      %1207 = vmatpush2.bf16.msra.mxu0 0
      %1208 = vmatprep.subr.bf16.mxu0 0
      %1209 = vmatpush2.bf16.msra.mxu0 0
      %1210 = vmatprep.subr.bf16.mxu0 0
      %1211 = vmatpush2.bf16.msra.mxu0 0
      %1212 = vmatprep.subr.bf16.mxu0 0
      %1213 = vmatpush2.bf16.msra.mxu0 0
      %1214 = vmatprep.subr.bf16.mxu0 0
      %1215 = vmatpush2.bf16.msra.mxu0 0
      %1216 = vmatprep.subr.bf16.mxu0 0
      %1217 = vmatpush2.bf16.msra.mxu0 0
      %1218 = vmatprep.mubr.bf16.mxu0 0
      %1219 = vmatmul.mubr.bf16.gmra.mxu0 %v1181
      %v1220 = vpop.f32.mrf.mxu0
      %v1221 = vadd.f32 0.0, %v1220
      %v1222 = vpop.f32.mrf.mxu0
      %v1223 = vpop.f32.mrf.mxu0
      %v1224 = vpop.f32.mrf.mxu0
      %1225 = vdwg.mxu0
      %v1226 = vpack.c.bf16 %v1221, %v1221
      %v1228 = vunpack.c.l.b16 %v1226
      %v1229 = vpack.c.b16 %v1228, %v1228
      %1230 = vrot.lane.b32.xlu0 %v1229, 24
      %v1231 = vpop.permute.xlu0 %1230
      %vm1233 = vcmask 256192
      %vm1234 = vmand %vm1233, %vm867
      %v1235 = vld [vmem:[#allocation3] sm:$0x7]
      %v1236 = vsel %vm1234, %v1231, %v1235
      %1237 = vst [vmem:[#allocation3] sm:$0x7] %v1236
      %v1238 = vld [vmem:[%s613] sm:$0x1]
      %v1240 = vlaneseq
      %v1241 = vshrl.u32 %v1240, 7
      %v1242 = vsub.s32 0, %v1241
      %v1243 = vrot.slane %v1238, %v1242
      %v1245 = vadd.f32 %v648, %v1243
      %v1246 = vld [vmem:[#allocation3] sm:$0x7]
      %v1247 = vld [vmem:[%s610] sm:$0xf]
      %v1248 = vld [vmem:[%s610 + $0x4] sm:$0xf]
      %v1249 = vld [vmem:[%s610 + $0x8] sm:$0xf]
      %v1250 = vld [vmem:[%s610 + $0xc] sm:$0xf]
      %v1255 = vunpack.c.l.b16 %v1247
      %v1256 = vunpack.c.l.b16 %v1248
      %v1257 = vunpack.c.l.b16 %v1249
      %v1258 = vunpack.c.l.b16 %v1250
      %v1259 = vpack.c.b16 %v1256, %v1255
      %v1260 = vpack.c.b16 %v1258, %v1257
      %v1264 = vsel %vm704, %v1246, 0
      %1266 = vmatprep.subr.bf16.mxu0 0
      %1267 = vmatpush1.bf16.msra.mxu0 0
      %1268 = vmatprep.subr.bf16.mxu0 0
      %1269 = vmatpush1.bf16.msra.mxu0 0
      %1270 = vmatprep.subr.bf16.mxu0 0
      %1271 = vmatpush1.bf16.msra.mxu0 0
      %1272 = vmatprep.subr.bf16.mxu0 0
      %1273 = vmatpush1.bf16.msra.mxu0 0
      %1274 = vmatprep.subr.bf16.mxu0 0
      %1275 = vmatpush1.bf16.msra.mxu0 0
      %1276 = vmatprep.subr.bf16.mxu0 0
      %1277 = vmatpush1.bf16.msra.mxu0 0
      %1278 = vmatprep.subr.bf16.mxu0 0
      %1279 = vmatpush1.bf16.msra.mxu0 %v1260
      %1280 = vmatprep.subr.bf16.mxu0 0
      %1281 = vmatpush1.bf16.msra.mxu0 %v1259
      %1282 = vmatprep.subr.bf16.mxu0 0
      %1283 = vmatpush2.bf16.msra.mxu0 0
      %1284 = vmatprep.subr.bf16.mxu0 0
      %1285 = vmatpush2.bf16.msra.mxu0 0
      %1286 = vmatprep.subr.bf16.mxu0 0
      %1287 = vmatpush2.bf16.msra.mxu0 0
      %1288 = vmatprep.subr.bf16.mxu0 0
      %1289 = vmatpush2.bf16.msra.mxu0 0
      %1290 = vmatprep.subr.bf16.mxu0 0
      %1291 = vmatpush2.bf16.msra.mxu0 0
      %1292 = vmatprep.subr.bf16.mxu0 0
      %1293 = vmatpush2.bf16.msra.mxu0 0
      %1294 = vmatprep.subr.bf16.mxu0 0
      %1295 = vmatpush2.bf16.msra.mxu0 0
      %1296 = vmatprep.subr.bf16.mxu0 0
      %1297 = vmatpush2.bf16.msra.mxu0 0
      %1298 = vmatprep.mubr.bf16.mxu0 0
      %1299 = vmatmul.mubr.bf16.gmra.mxu0 %v1264
      %v1300 = vpop.f32.mrf.mxu0
      %v1301 = vadd.f32 0.0, %v1300
      %v1302 = vpop.f32.mrf.mxu0
      %v1303 = vpop.f32.mrf.mxu0
      %v1304 = vpop.f32.mrf.mxu0
      %1305 = vdwg.mxu0
      %v1306 = vadd.f32 %v1245, %v1301
      %1307 = vst.msk [vmem:[#allocation2] sm:$0x1f] %vm651, %v1306
      %v1308 = vld [vmem:[#allocation2] sm:$0x1f]
      %v1309 = vld [vmem:[%s616] sm:$0x1]
      %v1310 = vld [vmem:[%s619] sm:$0x1]
      %v1311 = vsel %vm651, %v1308, 0.0
      %1312 = vadd.xlane.f32.xlu0 %v1311
      %v1313 = vpop.xlane.xlu0 %1312
      %v1314 = vmul.f32 %v1313, %v655
      %v1315 = vsub.f32 %v1308, %v1314
      %v1316 = vmul.f32 %v1315, %v1315
      %v1317 = vsel %vm651, %v1316, 0.0
      %1318 = vadd.xlane.f32.xlu0 %v1317
      %v1319 = vpop.xlane.xlu0 %1318
      %v1320 = vmul.f32 %v1319, %v655
      %v1321 = vadd.f32 %v1320, 1e-05
      %v1322 = vrsqrt.pop %v1321
      %v1323 = vmul.f32 %v1315, %v1322
      %v1325 = vlaneseq
      %v1326 = vshrl.u32 %v1325, 7
      %v1327 = vsub.s32 0, %v1326
      %v1328 = vrot.slane %v1309, %v1327
      %v1330 = vmul.f32 %v1323, %v1328
      %v1332 = vlaneseq
      %v1333 = vshrl.u32 %v1332, 7
      %v1334 = vsub.s32 0, %v1333
      %v1335 = vrot.slane %v1310, %v1334
      %v1337 = vadd.f32 %v1330, %v1335
      %v1338 = vpack.c.bf16 %v1337, %v1337
      %v1339 = vld [vmem:[%s624] sm:$0xf]
      %v1340 = vld [vmem:[%s624 + $0x4] sm:$0xf]
      %v1341 = vld [vmem:[%s624 + $0x8] sm:$0xf]
      %v1342 = vld [vmem:[%s624 + $0xc] sm:$0xf]
      %v1343 = vld [vmem:[%s627] sm:$0x1]
      %v1345 = vlaneseq
      %v1346 = vshrl.u32 %v1345, 7
      %v1347 = vsub.s32 0, %v1346
      %v1348 = vrot.slane %v1343, %v1347
      %v1354 = vunpack.c.l.b16 %v1339
      %v1355 = vunpack.c.l.b16 %v1340
      %v1356 = vunpack.c.l.b16 %v1341
      %v1357 = vunpack.c.l.b16 %v1342
      %v1358 = vpack.c.b16 %v1355, %v1354
      %v1359 = vpack.c.b16 %v1357, %v1356
      %v1363 = vsel %vm704, %v1338, 0
      %1365 = vmatprep.subr.bf16.mxu0 0
      %1366 = vmatpush1.bf16.msra.mxu0 0
      %1367 = vmatprep.subr.bf16.mxu0 0
      %1368 = vmatpush1.bf16.msra.mxu0 0
      %1369 = vmatprep.subr.bf16.mxu0 0
      %1370 = vmatpush1.bf16.msra.mxu0 0
      %1371 = vmatprep.subr.bf16.mxu0 0
      %1372 = vmatpush1.bf16.msra.mxu0 0
      %1373 = vmatprep.subr.bf16.mxu0 0
      %1374 = vmatpush1.bf16.msra.mxu0 0
      %1375 = vmatprep.subr.bf16.mxu0 0
      %1376 = vmatpush1.bf16.msra.mxu0 0
      %1377 = vmatprep.subr.bf16.mxu0 0
      %1378 = vmatpush1.bf16.msra.mxu0 %v1359
      %1379 = vmatprep.subr.bf16.mxu0 0
      %1380 = vmatpush1.bf16.msra.mxu0 %v1358
      %1381 = vmatprep.subr.bf16.mxu0 0
      %1382 = vmatpush2.bf16.msra.mxu0 0
      %1383 = vmatprep.subr.bf16.mxu0 0
      %1384 = vmatpush2.bf16.msra.mxu0 0
      %1385 = vmatprep.subr.bf16.mxu0 0
      %1386 = vmatpush2.bf16.msra.mxu0 0
      %1387 = vmatprep.subr.bf16.mxu0 0
      %1388 = vmatpush2.bf16.msra.mxu0 0
      %1389 = vmatprep.subr.bf16.mxu0 0
      %1390 = vmatpush2.bf16.msra.mxu0 0
      %1391 = vmatprep.subr.bf16.mxu0 0
      %1392 = vmatpush2.bf16.msra.mxu0 0
      %1393 = vmatprep.subr.bf16.mxu0 0
      %1394 = vmatpush2.bf16.msra.mxu0 0
      %1395 = vmatprep.subr.bf16.mxu0 0
      %1396 = vmatpush2.bf16.msra.mxu0 0
      %1397 = vmatprep.mubr.bf16.mxu0 0
      %1398 = vmatmul.mubr.bf16.gmra.mxu0 %v1363
      %v1399 = vpop.f32.mrf.mxu0
      %v1400 = vadd.f32 %v1348, %v1399
      %v1401 = vpop.f32.mrf.mxu0
      %v1402 = vpop.f32.mrf.mxu0
      %v1403 = vpop.f32.mrf.mxu0
      %1404 = vdwg.mxu0
      %v1405 = vmul.f32 %v1400, 1.702
      %v1406 = vxor.u32 %v1405, 2147483648
      %v1407 = vmul.f32 %v1406, 1.442695
      %v1408 = vpow.pop %v1407
      %v1409 = vadd.f32 %v1408, 1.0
      %v1410 = vrcp.pop %v1409
      %v1411 = vmul.f32 1.0, %v1410
      %v1412 = vmul.f32 %v1400, %v1411
      %v1413 = vpack.c.bf16 %v1412, %v1412
      %v1414 = vld [vmem:[%s632] sm:$0xf]
      %v1415 = vld [vmem:[%s632 + $0x4] sm:$0xf]
      %v1416 = vld [vmem:[%s632 + $0x8] sm:$0xf]
      %v1417 = vld [vmem:[%s632 + $0xc] sm:$0xf]
      %v1418 = vld [vmem:[%s632 + $0x10] sm:$0xf]
      %v1419 = vld [vmem:[%s632 + $0x14] sm:$0xf]
      %v1420 = vld [vmem:[%s632 + $0x18] sm:$0xf]
      %v1421 = vld [vmem:[%s632 + $0x1c] sm:$0xf]
      %v1430 = vunpack.c.l.b16 %v1414
      %v1431 = vunpack.c.l.b16 %v1415
      %v1432 = vunpack.c.l.b16 %v1416
      %v1433 = vunpack.c.l.b16 %v1417
      %v1434 = vunpack.c.l.b16 %v1418
      %v1435 = vunpack.c.l.b16 %v1419
      %v1436 = vunpack.c.l.b16 %v1420
      %v1437 = vunpack.c.l.b16 %v1421
      %v1438 = vpack.c.b16 %v1431, %v1430
      %v1439 = vpack.c.b16 %v1433, %v1432
      %v1440 = vpack.c.b16 %v1435, %v1434
      %v1441 = vpack.c.b16 %v1437, %v1436
      %vm1446 = vcmask 523264
      %v1448 = vsel %vm1446, %v1413, 0
      %1450 = vmatprep.subr.bf16.mxu0 0
      %1451 = vmatpush1.bf16.msra.mxu0 0
      %1452 = vmatprep.subr.bf16.mxu0 0
      %1453 = vmatpush1.bf16.msra.mxu0 0
      %1454 = vmatprep.subr.bf16.mxu0 0
      %1455 = vmatpush1.bf16.msra.mxu0 0
      %1456 = vmatprep.subr.bf16.mxu0 0
      %1457 = vmatpush1.bf16.msra.mxu0 0
      %1458 = vmatprep.subr.bf16.mxu0 0
      %1459 = vmatpush1.bf16.msra.mxu0 %v1441
      %1460 = vmatprep.subr.bf16.mxu0 0
      %1461 = vmatpush1.bf16.msra.mxu0 %v1440
      %1462 = vmatprep.subr.bf16.mxu0 0
      %1463 = vmatpush1.bf16.msra.mxu0 %v1439
      %1464 = vmatprep.subr.bf16.mxu0 0
      %1465 = vmatpush1.bf16.msra.mxu0 %v1438
      %1466 = vmatprep.subr.bf16.mxu0 0
      %1467 = vmatpush2.bf16.msra.mxu0 0
      %1468 = vmatprep.subr.bf16.mxu0 0
      %1469 = vmatpush2.bf16.msra.mxu0 0
      %1470 = vmatprep.subr.bf16.mxu0 0
      %1471 = vmatpush2.bf16.msra.mxu0 0
      %1472 = vmatprep.subr.bf16.mxu0 0
      %1473 = vmatpush2.bf16.msra.mxu0 0
      %1474 = vmatprep.subr.bf16.mxu0 0
      %1475 = vmatpush2.bf16.msra.mxu0 0
      %1476 = vmatprep.subr.bf16.mxu0 0
      %1477 = vmatpush2.bf16.msra.mxu0 0
      %1478 = vmatprep.subr.bf16.mxu0 0
      %1479 = vmatpush2.bf16.msra.mxu0 0
      %1480 = vmatprep.subr.bf16.mxu0 0
      %1481 = vmatpush2.bf16.msra.mxu0 0
      %1482 = vmatprep.mubr.bf16.mxu0 0
      %1483 = vmatmul.mubr.bf16.gmra.mxu0 %v1448
      %v1484 = vpop.f32.mrf.mxu0
      %v1485 = vadd.f32 0.0, %v1484
      %v1486 = vpop.f32.mrf.mxu0
      %v1487 = vpop.f32.mrf.mxu0
      %v1488 = vpop.f32.mrf.mxu0
      %1489 = vdwg.mxu0
      %v1490 = vadd.f32 %v1308, %v1485
      %v1491 = vld [vmem:[%s635] sm:$0x1]
      %v1493 = vlaneseq
      %v1494 = vshrl.u32 %v1493, 7
      %v1495 = vsub.s32 0, %v1494
      %v1496 = vrot.slane %v1491, %v1495
      %v1498 = vadd.f32 %v1490, %v1496
      %1499 = vst.msk [vmem:[#allocation2] sm:$0x1f] %vm651, %v1498
      // Predicated region
      $region77: #{fwd.4} parent=71 // pred_check
        %p1500 = pneg %p641
      $region78: #{fwd.4} parent=71 // pred_check_branch
        %1502 = sbr.rel (%p1500) target = $region80
      $region79: #{fwd.4} parent=71 // pred_region
        %v1503 = vld [vmem:[#allocation2] sm:$0x1f]
        %1504 = vst.msk [vmem:[%s639] sm:$0x1f] %vm651, %v1503
      $region80: #{fwd.4} parent=71 // pred_fallthru
        _
      %p1505 = scmp.lt.s32.totalorder %s28, 1
      %s1506 = scalar_select %p1505, %s28, 1
      %s1507 = smul.addr %s1506, 8
      %s1508 = scalar_lea.vmem %s13, %s1507
      // Predicated region
      $region81: #{fwd.4} parent=71 // pred_check
        %p1509 = pneg %p392
      $region82: #{fwd.4} parent=71 // pred_check_branch
        %1511 = sbr.rel (%p1509) target = $region84
      $region83: #{fwd.4} parent=71 // pred_region
        _
      $region84: #{fwd.4} parent=71 // pred_fallthru
        _
    $region72: #{fwd.4} parent=5 // pred_fallthru
      _
    %p1512 = scmp.le.s32.totalorder 2, %s19
    // Predicated region
    $region85: #{fwd.4} parent=5 // pred_check
      %p1513 = pneg %p1512
    $region86: #{fwd.4} parent=5 // pred_check_branch
      %1515 = sbr.rel (%p1513) target = $region88
    $region87: #{fwd.4} parent=5 // pred_region
      %s1516 = ssub.s32 %s19, 2
      // Predicated region
      $region89: #{fwd.4} parent=87 // pred_check
        %p1517 = pneg %p398
      $region90: #{fwd.4} parent=87 // pred_check_branch
        %1519 = sbr.rel (%p1517) target = $region92
      $region91: #{fwd.4} parent=87 // pred_region
        %p1520 = scmp.lt.s32.totalorder %s30, 1
        %s1521 = scalar_select %p1520, %s30, 1
        %s1522 = smul.addr %s1521, 8
        %s1523 = scalar_lea.vmem %s13, %s1522
      $region92: #{fwd.4} parent=87 // pred_fallthru
        _
    $region88: #{fwd.4} parent=5 // pred_fallthru
      _
  $region6: #{fwd.4} parent=0 // loop_footer
    %s23 = sadd.s32 1, %s19
  $region7: #{fwd.4} parent=0 // loop_footer_branch
    %18 = sbr.rel target = $region3
  $region8: #{fwd.4} parent=0 // loop_exit
    _

</llo_original>
